<compile_context>
chip_gen: v6e
topology: v6e:2x2x1
jax: 0.10.0
libtpu: 0.0.40
codegen_flags: <defaults>
</compile_context>

<pallas_src>
import functools

import jax
import jax.numpy as jnp
from jax.experimental import pallas as pl
from jax.experimental.pallas import tpu as pltpu

BN_EPS = 1e-5
COMPUTE_DTYPE = jnp.bfloat16      # MXU operand dtype (accumulation is f32)


def _round_up(x, m):
    return (x + m - 1) // m * m


# --------------------------------------------------------------------------
# Single fused Pallas kernel:
#   [3x3 s2 conv + 1x1 s2 skip conv] (one fused-K/fused-N GEMM family, BN
#   folded, ReLU) -> [3x3 s1 conv + BN + ReLU] -> residual add -> SE gate
# --------------------------------------------------------------------------
def _fused_kernel(slab_ref, w1_ref, b1_ref, w2_ref, b2_ref,
                  wse1_ref, bse1_ref, wse2_ref, bse2_ref,
                  xout_ref, skipout_ref, h1pad_ref,
                  *, ho, wo, cin4, cout):
    m = ho * wo

    # ---- stage 1: the 3x3 stride-2 conv is a 2x2 stride-1 conv over the
    #      space-to-depth slab (K = 4*cin per tap); the 1x1 stride-2 skip conv
    #      rides along on the N axis (columns [cout:2*cout]).
    acc = jnp.zeros((m, 2 * cout), jnp.float32)
    for d in range(4):                          # 2x2 taps, unrolled
        dh, dw = d // 2, d % 2
        part = slab_ref[0, dh:dh + ho, dw:dw + wo, :].reshape(m, cin4)
        acc = acc + jnp.dot(part, w1_ref[d], preferred_element_type=jnp.float32)
    act = jnp.maximum(acc + b1_ref[...], 0.0)
    h1 = act[:, :cout]                          # ReLU(BN(conv3x3 s2(x)))
    skip = act[:, cout:]                        # ReLU(BN(conv1x1 s2(x))), f32

    # ---- h1 with a zero halo, staged in VMEM (no HBM round trip).
    #      (Re-zeroed every step: scratch is per-core, so a program_id==0 init
    #       would be unsafe under megacore sharding; this is a few KB anyway.)
    h1pad_ref[...] = jnp.zeros_like(h1pad_ref)
    h1pad_ref[1:ho + 1, 1:wo + 1, :] = (
        h1.reshape(ho, wo, cout).astype(h1pad_ref.dtype))

    # ---- stage 2: 3x3 stride-1 conv (BN folded) + ReLU, taps unrolled.
    #      (For cout >= 128 on v6e/v7x, pair taps along K to fill the MXU.)
    acc2 = jnp.zeros((m, cout), jnp.float32)
    for kh in range(3):
        for kw in range(3):
            patch = h1pad_ref[kh:kh + ho, kw:kw + wo, :].reshape(m, cout)
            acc2 = acc2 + jnp.dot(patch, w2_ref[kh * 3 + kw],
                                  preferred_element_type=jnp.float32)
    h2 = jnp.maximum(acc2 + b2_ref[...], 0.0)

    # ---- fused residual add (skip += conv(x) in the PyTorch module)
    s = skip + h2
    skipout_ref[...] = s.reshape(1, ho, wo, cout).astype(skipout_ref.dtype)

    # ---- Squeeze-and-Excitation: pool -> FC -> ReLU -> FC -> sigmoid -> gate
    pooled = jnp.sum(s, axis=0, keepdims=True) * (1.0 / m)        # (1, cout)
    hfc = jnp.dot(pooled, wse1_ref[...], preferred_element_type=jnp.float32)
    hfc = jnp.maximum(hfc + bse1_ref[...], 0.0)
    g = jnp.dot(hfc, wse2_ref[...], preferred_element_type=jnp.float32)
    g = jax.nn.sigmoid(g + bse2_ref[...])                         # (1, cout)
    xout_ref[...] = (s * g).reshape(1, ho, wo, cout).astype(xout_ref.dtype)


def _encode(slab, w1f, b1f, w2, b2, wse1, bse1, wse2, bse2, *, ho, wo, cout):
    n, _, _, cin4 = slab.shape
    csqp = wse1.shape[-1]
    kernel = functools.partial(_fused_kernel, ho=ho, wo=wo, cin4=cin4, cout=cout)
    out_spec = pl.BlockSpec((1, ho, wo, cout), lambda i: (i, 0, 0, 0))
    return pl.pallas_call(
        kernel,
        out_shape=(jax.ShapeDtypeStruct((n, ho, wo, cout), jnp.float32),   # x_out
                   jax.ShapeDtypeStruct((n, ho, wo, cout), jnp.float32)),  # skip
        grid_spec=pltpu.PrefetchScalarGridSpec(
            num_scalar_prefetch=0,
            grid=(n,),
            in_specs=[
                pl.BlockSpec((1, ho + 1, wo + 1, cin4), lambda i: (i, 0, 0, 0)),
                pl.BlockSpec((4, cin4, 2 * cout), lambda i: (0, 0, 0)),
                pl.BlockSpec((1, 2 * cout), lambda i: (0, 0)),
                pl.BlockSpec((9, cout, cout), lambda i: (0, 0, 0)),
                pl.BlockSpec((1, cout), lambda i: (0, 0)),
                pl.BlockSpec((cout, csqp), lambda i: (0, 0)),
                pl.BlockSpec((1, csqp), lambda i: (0, 0)),
                pl.BlockSpec((csqp, cout), lambda i: (0, 0)),
                pl.BlockSpec((1, cout), lambda i: (0, 0)),
            ],
            out_specs=(out_spec, out_spec),
            scratch_shapes=[pltpu.VMEM((ho + 2, wo + 2, cout), COMPUTE_DTYPE)]),
        compiler_params=pltpu.CompilerParams(
            dimension_semantics=("parallel",)),
    )(slab, w1f, b1f, w2, b2, wse1, bse1, wse2, bse2)


# --------------------------------------------------------------------------
# Plain-JAX glue: BN folding, weight reshuffling, space-to-depth, forward
# --------------------------------------------------------------------------
def _fold_bn(bn):
    gamma, beta, mean, var = bn
    scale = gamma * jax.lax.rsqrt(var + BN_EPS)
    shift = beta - mean * scale
    return scale, shift


def encoding_block_forward(x_nchw, p):
    x = jnp.transpose(x_nchw, (0, 2, 3, 1)).astype(jnp.float32)    # NCHW->NHWC
    n, h, w, cin = x.shape
    assert h % 2 == 0 and w % 2 == 0
    ho, wo = h // 2, w // 2
    cout = p["c1_w"].shape[-1]
    csq = p["se_w1"].shape[-1]
    csqp = _round_up(max(csq, 1), 128)      # tiny weights; pad for MXU layout

    # ---- stage-1 fused weight: 3x3 s2 conv as a 2x2 conv over the
    #      space-to-depth slab, with the 1x1 s2 skip conv appended on N.
    s1, t1 = _fold_bn(p["c1_bn"])
    w1 = p["c1_w"] * s1                                  # (3, 3, cin, cout)
    ssk, tsk = _fold_bn(p["skip_bn"])
    wsk = (p["skip_w"] * ssk)[0, 0]                      # (cin, cout)
    w1f = jnp.zeros((4, 4, cin, 2 * cout), jnp.float32)
    for kh in range(3):
        for kw in range(3):
            d = 2 * (kh // 2) + (kw // 2)                # 2x2 tap bucket
            pr = 2 * (kh % 2) + (kw % 2)                 # parity block
            w1f = w1f.at[d, pr, :, :cout].set(w1[kh, kw])
    w1f = w1f.at[0, 3, :, cout:].set(wsk)                # skip = parity (1,1)
    w1f = w1f.reshape(4, 4 * cin, 2 * cout).astype(COMPUTE_DTYPE)
    b1f = jnp.concatenate([t1, tsk]).reshape(1, 2 * cout).astype(jnp.float32)

    # ---- stage-2 weight (BN folded)
    s2, t2 = _fold_bn(p["c2_bn"])
    w2 = (p["c2_w"] * s2).reshape(9, cout, cout).astype(COMPUTE_DTYPE)
    b2 = t2.reshape(1, cout).astype(jnp.float32)

    # ---- SE weights (pad only the tiny squeeze dim)
    wse1 = jnp.pad(p["se_w1"], ((0, 0), (0, csqp - csq))).astype(jnp.float32)
    bse1 = jnp.pad(p["se_b1"].reshape(1, -1),
                   ((0, 0), (0, csqp - csq))).astype(jnp.float32)
    wse2 = jnp.pad(p["se_w2"], ((0, csqp - csq), (0, 0))).astype(jnp.float32)
    bse2 = p["se_b2"].reshape(1, cout).astype(jnp.float32)

    # ---- spatial pad + space-to-depth merge: one lane-denser slab, one DMA
    xp = jnp.pad(x, ((0, 0), (1, 1), (1, 1), (0, 0)))
    slab = jnp.concatenate(
        [xp[:, 0::2, 0::2, :], xp[:, 0::2, 1::2, :],
         xp[:, 1::2, 0::2, :], xp[:, 1::2, 1::2, :]],
        axis=-1).astype(COMPUTE_DTYPE)                   # (n, ho+1, wo+1, 4cin)

    x_out, skip_out = _encode(slab, w1f, b1f, w2, b2, wse1, bse1, wse2, bse2,
                              ho=ho, wo=wo, cout=cout)

    # back to NCHW to match the PyTorch convention
    return (jnp.transpose(x_out, (0, 3, 1, 2)),
            jnp.transpose(skip_out, (0, 3, 1, 2)))


def init_params(key, cin, cout, reduction=4):
    csq = max(cout // reduction, 1)
    ks = jax.random.split(key, 16)

    def bn_params(k):
        k1, k2, k3, k4 = jax.random.split(k, 4)
        gamma = jax.random.uniform(k1, (cout,), jnp.float32, 0.5, 1.5)
        beta = 0.1 * jax.random.normal(k2, (cout,), jnp.float32)
        mean = 0.1 * jax.random.normal(k3, (cout,), jnp.float32)
        var = jax.random.uniform(k4, (cout,), jnp.float32, 0.5, 1.5)
        return (gamma, beta, mean, var)

    return dict(
        c1_w=0.1 * jax.random.normal(ks[0], (3, 3, cin, cout), jnp.float32),
        c1_bn=bn_params(ks[1]),
        c2_w=0.1 * jax.random.normal(ks[2], (3, 3, cout, cout), jnp.float32),
        c2_bn=bn_params(ks[3]),
        skip_w=0.1 * jax.random.normal(ks[4], (1, 1, cin, cout), jnp.float32),
        skip_bn=bn_params(ks[5]),
        se_w1=0.1 * jax.random.normal(ks[6], (cout, csq), jnp.float32),
        se_b1=0.1 * jax.random.normal(ks[7], (1, csq), jnp.float32),
        se_w2=0.1 * jax.random.normal(ks[8], (csq, cout), jnp.float32),
        se_b2=0.1 * jax.random.normal(ks[9], (1, cout), jnp.float32),
    )


# --------------------------------------------------------------------------
# Pure-JAX reference (f32, for correctness check only)
# --------------------------------------------------------------------------
def _ref_conv_bn_act(x, w, bn, stride, pad):
    y = jax.lax.conv_general_dilated(
        x, w, (stride, stride), [(pad, pad), (pad, pad)],
        dimension_numbers=("NHWC", "HWIO", "NHWC"))
    gamma, beta, mean, var = bn
    y = (y - mean) / jnp.sqrt(var + BN_EPS) * gamma + beta
    return jnp.maximum(y, 0.0)


def _ref_forward(x_nchw, p):
    x = jnp.transpose(x_nchw, (0, 2, 3, 1))
    skip = _ref_conv_bn_act(x, p["skip_w"], p["skip_bn"], 2, 0)
    h = _ref_conv_bn_act(x, p["c1_w"], p["c1_bn"], 2, 1)
    h = _ref_conv_bn_act(h, p["c2_w"], p["c2_bn"], 1, 1)
    s = skip + h
    pooled = jnp.mean(s, axis=(1, 2))
    hfc = jnp.maximum(pooled @ p["se_w1"] + p["se_b1"], 0.0)
    g = jax.nn.sigmoid(hfc @ p["se_w2"] + p["se_b2"])
    xo = s * g[:, None, None, :]
    return (jnp.transpose(xo, (0, 3, 1, 2)),
            jnp.transpose(s, (0, 3, 1, 2)))


# --------------------------------------------------------------------------
if __name__ == "__main__":
    key = jax.random.PRNGKey(0)
    k_x, k_p = jax.random.split(key)

    N, C_IN, H, W = 2, 4, 16, 16
    C_OUT = 16

    x = jax.random.normal(k_x, (N, C_IN, H, W), jnp.float32)
    params = init_params(k_p, C_IN, C_OUT, reduction=4)

    fwd = jax.jit(encoding_block_forward)
    x_out, skip_out = fwd(x, params)
    jax.block_until_ready((x_out, skip_out))

    # sanity check against a pure-JAX f32 reference (kernel uses bf16 MXU
    # operands with f32 accumulation, hence the looser tolerance)
    x_ref, skip_ref = _ref_forward(x, params)
    assert x_out.shape == (N, C_OUT, H // 2, W // 2)
    assert skip_out.shape == (N, C_OUT, H // 2, W // 2)
    assert jnp.allclose(x_out, x_ref, atol=6e-2, rtol=6e-2)
    assert jnp.allclose(skip_out, skip_ref, atol=6e-2, rtol=6e-2)

    print("KERNEL_OK")
</pallas_src>

<mosaic_0001>
module attributes {stable_mosaic.version = 11 : i64} {
  func.func @_fused_kernel(%arg0: i32, %arg1: memref<1x9x9x16xbf16, #tpu.memory_space<vmem>>, %arg2: memref<4x16x32xbf16, #tpu.memory_space<vmem>>, %arg3: memref<1x32xf32, #tpu.memory_space<vmem>>, %arg4: memref<9x16x16xbf16, #tpu.memory_space<vmem>>, %arg5: memref<1x16xf32, #tpu.memory_space<vmem>>, %arg6: memref<16x128xf32, #tpu.memory_space<vmem>>, %arg7: memref<1x128xf32, #tpu.memory_space<vmem>>, %arg8: memref<128x16xf32, #tpu.memory_space<vmem>>, %arg9: memref<1x16xf32, #tpu.memory_space<vmem>>, %arg10: memref<1x8x8x16xf32, #tpu.memory_space<vmem>>, %arg11: memref<1x8x8x16xf32, #tpu.memory_space<vmem>>, %arg12: memref<10x10x16xbf16, #tpu.memory_space<vmem>>) attributes {dimension_semantics = [#tpu.dimension_semantics<parallel>], iteration_bounds = array<i64: 2>, scalar_prefetch = 0 : i64, scratch_operands = 1 : i64, tpu.core_type = #tpu.core_type<tc>, window_params = [{transform_indices = @transform_0, window_bounds = array<i64: 1, 9, 9, 16>}, {pipeline_mode = #tpu.pipeline_mode<synchronous>, transform_indices = @transform_1, window_bounds = array<i64: 4, 16, 32>}, {pipeline_mode = #tpu.pipeline_mode<synchronous>, transform_indices = @transform_2, window_bounds = array<i64: 1, 32>}, {pipeline_mode = #tpu.pipeline_mode<synchronous>, transform_indices = @transform_3, window_bounds = array<i64: 9, 16, 16>}, {pipeline_mode = #tpu.pipeline_mode<synchronous>, transform_indices = @transform_4, window_bounds = array<i64: 1, 16>}, {pipeline_mode = #tpu.pipeline_mode<synchronous>, transform_indices = @transform_5, window_bounds = array<i64: 16, 128>}, {pipeline_mode = #tpu.pipeline_mode<synchronous>, transform_indices = @transform_6, window_bounds = array<i64: 1, 128>}, {pipeline_mode = #tpu.pipeline_mode<synchronous>, transform_indices = @transform_7, window_bounds = array<i64: 128, 16>}, {pipeline_mode = #tpu.pipeline_mode<synchronous>, transform_indices = @transform_8, window_bounds = array<i64: 1, 16>}, {transform_indices = @transform_9, window_bounds = array<i64: 1, 8, 8, 16>}, {transform_indices = @transform_10, window_bounds = array<i64: 1, 8, 8, 16>}]} {
    %cst = arith.constant 0.000000e+00 : f32
    %0 = vector.broadcast %cst : f32 to vector<64x32xf32>
    %c0 = arith.constant 0 : index
    %c0_0 = arith.constant 0 : index
    %c0_1 = arith.constant 0 : index
    %c0_2 = arith.constant 0 : index
    %1 = vector.load %arg1[%c0, %c0_0, %c0_1, %c0_2] : memref<1x9x9x16xbf16, #tpu.memory_space<vmem>>, vector<1x8x8x16xbf16>
    %2 = vector.shape_cast %1 : vector<1x8x8x16xbf16> to vector<8x8x16xbf16>
    %3 = vector.shape_cast %2 : vector<8x8x16xbf16> to vector<64x16xbf16>
    %c0_3 = arith.constant 0 : index
    %c0_4 = arith.constant 0 : index
    %c0_5 = arith.constant 0 : index
    %4 = vector.load %arg2[%c0_3, %c0_4, %c0_5] : memref<4x16x32xbf16, #tpu.memory_space<vmem>>, vector<1x16x32xbf16>
    %5 = vector.shape_cast %4 : vector<1x16x32xbf16> to vector<16x32xbf16>
    %cst_6 = arith.constant dense<0.000000e+00> : vector<64x32xf32>
    %6 = tpu.matmul %3, %5, %cst_6 {dimension_numbers = #tpu.dot_dimension_numbers<[1], [0], [0], [1], [0, 0, 1, 1], [], []>} : vector<64x16xbf16>, vector<16x32xbf16>, vector<64x32xf32> -> vector<64x32xf32>
    %7 = arith.addf %0, %6 : vector<64x32xf32>
    %c0_7 = arith.constant 0 : index
    %c0_8 = arith.constant 0 : index
    %c1 = arith.constant 1 : index
    %c0_9 = arith.constant 0 : index
    %8 = vector.load %arg1[%c0_7, %c0_8, %c1, %c0_9] : memref<1x9x9x16xbf16, #tpu.memory_space<vmem>>, vector<1x8x8x16xbf16>
    %9 = vector.shape_cast %8 : vector<1x8x8x16xbf16> to vector<8x8x16xbf16>
    %10 = vector.shape_cast %9 : vector<8x8x16xbf16> to vector<64x16xbf16>
    %c1_10 = arith.constant 1 : index
    %c0_11 = arith.constant 0 : index
    %c0_12 = arith.constant 0 : index
    %11 = vector.load %arg2[%c1_10, %c0_11, %c0_12] : memref<4x16x32xbf16, #tpu.memory_space<vmem>>, vector<1x16x32xbf16>
    %12 = vector.shape_cast %11 : vector<1x16x32xbf16> to vector<16x32xbf16>
    %cst_13 = arith.constant dense<0.000000e+00> : vector<64x32xf32>
    %13 = tpu.matmul %10, %12, %cst_13 {dimension_numbers = #tpu.dot_dimension_numbers<[1], [0], [0], [1], [0, 0, 1, 1], [], []>} : vector<64x16xbf16>, vector<16x32xbf16>, vector<64x32xf32> -> vector<64x32xf32>
    %14 = arith.addf %7, %13 : vector<64x32xf32>
    %c0_14 = arith.constant 0 : index
    %c1_15 = arith.constant 1 : index
    %c0_16 = arith.constant 0 : index
    %c0_17 = arith.constant 0 : index
    %15 = vector.load %arg1[%c0_14, %c1_15, %c0_16, %c0_17] : memref<1x9x9x16xbf16, #tpu.memory_space<vmem>>, vector<1x8x8x16xbf16>
    %16 = vector.shape_cast %15 : vector<1x8x8x16xbf16> to vector<8x8x16xbf16>
    %17 = vector.shape_cast %16 : vector<8x8x16xbf16> to vector<64x16xbf16>
    %c2 = arith.constant 2 : index
    %c0_18 = arith.constant 0 : index
    %c0_19 = arith.constant 0 : index
    %18 = vector.load %arg2[%c2, %c0_18, %c0_19] : memref<4x16x32xbf16, #tpu.memory_space<vmem>>, vector<1x16x32xbf16>
    %19 = vector.shape_cast %18 : vector<1x16x32xbf16> to vector<16x32xbf16>
    %cst_20 = arith.constant dense<0.000000e+00> : vector<64x32xf32>
    %20 = tpu.matmul %17, %19, %cst_20 {dimension_numbers = #tpu.dot_dimension_numbers<[1], [0], [0], [1], [0, 0, 1, 1], [], []>} : vector<64x16xbf16>, vector<16x32xbf16>, vector<64x32xf32> -> vector<64x32xf32>
    %21 = arith.addf %14, %20 : vector<64x32xf32>
    %c0_21 = arith.constant 0 : index
    %c1_22 = arith.constant 1 : index
    %c1_23 = arith.constant 1 : index
    %c0_24 = arith.constant 0 : index
    %22 = vector.load %arg1[%c0_21, %c1_22, %c1_23, %c0_24] : memref<1x9x9x16xbf16, #tpu.memory_space<vmem>>, vector<1x8x8x16xbf16>
    %23 = vector.shape_cast %22 : vector<1x8x8x16xbf16> to vector<8x8x16xbf16>
    %24 = vector.shape_cast %23 : vector<8x8x16xbf16> to vector<64x16xbf16>
    %c3 = arith.constant 3 : index
    %c0_25 = arith.constant 0 : index
    %c0_26 = arith.constant 0 : index
    %25 = vector.load %arg2[%c3, %c0_25, %c0_26] : memref<4x16x32xbf16, #tpu.memory_space<vmem>>, vector<1x16x32xbf16>
    %26 = vector.shape_cast %25 : vector<1x16x32xbf16> to vector<16x32xbf16>
    %cst_27 = arith.constant dense<0.000000e+00> : vector<64x32xf32>
    %27 = tpu.matmul %24, %26, %cst_27 {dimension_numbers = #tpu.dot_dimension_numbers<[1], [0], [0], [1], [0, 0, 1, 1], [], []>} : vector<64x16xbf16>, vector<16x32xbf16>, vector<64x32xf32> -> vector<64x32xf32>
    %28 = arith.addf %21, %27 : vector<64x32xf32>
    %c0_28 = arith.constant 0 : index
    %c0_29 = arith.constant 0 : index
    %29 = vector.load %arg3[%c0_28, %c0_29] : memref<1x32xf32, #tpu.memory_space<vmem>>, vector<1x32xf32>
    %30 = vector.broadcast %29 : vector<1x32xf32> to vector<64x32xf32>
    %31 = arith.addf %28, %30 : vector<64x32xf32>
    %cst_30 = arith.constant 0.000000e+00 : f32
    %32 = vector.broadcast %cst_30 : f32 to vector<64x32xf32>
    %33 = arith.maximumf %31, %32 : vector<64x32xf32>
    %34 = vector.extract_strided_slice %33 {offsets = [0, 0], sizes = [64, 16], strides = [1, 1]} : vector<64x32xf32> to vector<64x16xf32>
    %35 = vector.extract_strided_slice %33 {offsets = [0, 16], sizes = [64, 16], strides = [1, 1]} : vector<64x32xf32> to vector<64x16xf32>
    %cst_31 = arith.constant 0.000000e+00 : bf16
    %36 = vector.broadcast %cst_31 : bf16 to vector<10x10x16xbf16>
    %c0_32 = arith.constant 0 : index
    %c0_33 = arith.constant 0 : index
    %c0_34 = arith.constant 0 : index
    %37 = vector.load %arg12[%c0_32, %c0_33, %c0_34] : memref<10x10x16xbf16, #tpu.memory_space<vmem>>, vector<10x10x16xbf16>
    tpu.vector_store %arg12[%c0_32, %c0_33, %c0_34], %36 {strides = array<i32>} : memref<10x10x16xbf16, #tpu.memory_space<vmem>>, vector<10x10x16xbf16>,
    %38 = vector.shape_cast %34 : vector<64x16xf32> to vector<8x8x16xf32>
    %39 = arith.truncf %38 : vector<8x8x16xf32> to vector<8x8x16xbf16>
    %c1_35 = arith.constant 1 : index
    %c1_36 = arith.constant 1 : index
    %c0_37 = arith.constant 0 : index
    %40 = vector.load %arg12[%c1_35, %c1_36, %c0_37] : memref<10x10x16xbf16, #tpu.memory_space<vmem>>, vector<8x8x16xbf16>
    tpu.vector_store %arg12[%c1_35, %c1_36, %c0_37], %39 {strides = array<i32>} : memref<10x10x16xbf16, #tpu.memory_space<vmem>>, vector<8x8x16xbf16>,
    %cst_38 = arith.constant 0.000000e+00 : f32
    %41 = vector.broadcast %cst_38 : f32 to vector<64x16xf32>
    %c0_39 = arith.constant 0 : index
    %c0_40 = arith.constant 0 : index
    %c0_41 = arith.constant 0 : index
    %42 = vector.load %arg12[%c0_39, %c0_40, %c0_41] : memref<10x10x16xbf16, #tpu.memory_space<vmem>>, vector<8x8x16xbf16>
    %43 = vector.shape_cast %42 : vector<8x8x16xbf16> to vector<64x16xbf16>
    %c0_42 = arith.constant 0 : index
    %c0_43 = arith.constant 0 : index
    %c0_44 = arith.constant 0 : index
    %44 = vector.load %arg4[%c0_42, %c0_43, %c0_44] : memref<9x16x16xbf16, #tpu.memory_space<vmem>>, vector<1x16x16xbf16>
    %45 = vector.shape_cast %44 : vector<1x16x16xbf16> to vector<16x16xbf16>
    %cst_45 = arith.constant dense<0.000000e+00> : vector<64x16xf32>
    %46 = tpu.matmul %43, %45, %cst_45 {dimension_numbers = #tpu.dot_dimension_numbers<[1], [0], [0], [1], [0, 0, 1, 1], [], []>} : vector<64x16xbf16>, vector<16x16xbf16>, vector<64x16xf32> -> vector<64x16xf32>
    %47 = arith.addf %41, %46 : vector<64x16xf32>
    %c0_46 = arith.constant 0 : index
    %c1_47 = arith.constant 1 : index
    %c0_48 = arith.constant 0 : index
    %48 = vector.load %arg12[%c0_46, %c1_47, %c0_48] : memref<10x10x16xbf16, #tpu.memory_space<vmem>>, vector<8x8x16xbf16>
    %49 = vector.shape_cast %48 : vector<8x8x16xbf16> to vector<64x16xbf16>
    %c1_49 = arith.constant 1 : index
    %c0_50 = arith.constant 0 : index
    %c0_51 = arith.constant 0 : index
    %50 = vector.load %arg4[%c1_49, %c0_50, %c0_51] : memref<9x16x16xbf16, #tpu.memory_space<vmem>>, vector<1x16x16xbf16>
    %51 = vector.shape_cast %50 : vector<1x16x16xbf16> to vector<16x16xbf16>
    %cst_52 = arith.constant dense<0.000000e+00> : vector<64x16xf32>
    %52 = tpu.matmul %49, %51, %cst_52 {dimension_numbers = #tpu.dot_dimension_numbers<[1], [0], [0], [1], [0, 0, 1, 1], [], []>} : vector<64x16xbf16>, vector<16x16xbf16>, vector<64x16xf32> -> vector<64x16xf32>
    %53 = arith.addf %47, %52 : vector<64x16xf32>
    %c0_53 = arith.constant 0 : index
    %c2_54 = arith.constant 2 : index
    %c0_55 = arith.constant 0 : index
    %54 = vector.load %arg12[%c0_53, %c2_54, %c0_55] : memref<10x10x16xbf16, #tpu.memory_space<vmem>>, vector<8x8x16xbf16>
    %55 = vector.shape_cast %54 : vector<8x8x16xbf16> to vector<64x16xbf16>
    %c2_56 = arith.constant 2 : index
    %c0_57 = arith.constant 0 : index
    %c0_58 = arith.constant 0 : index
    %56 = vector.load %arg4[%c2_56, %c0_57, %c0_58] : memref<9x16x16xbf16, #tpu.memory_space<vmem>>, vector<1x16x16xbf16>
    %57 = vector.shape_cast %56 : vector<1x16x16xbf16> to vector<16x16xbf16>
    %cst_59 = arith.constant dense<0.000000e+00> : vector<64x16xf32>
    %58 = tpu.matmul %55, %57, %cst_59 {dimension_numbers = #tpu.dot_dimension_numbers<[1], [0], [0], [1], [0, 0, 1, 1], [], []>} : vector<64x16xbf16>, vector<16x16xbf16>, vector<64x16xf32> -> vector<64x16xf32>
    %59 = arith.addf %53, %58 : vector<64x16xf32>
    %c1_60 = arith.constant 1 : index
    %c0_61 = arith.constant 0 : index
    %c0_62 = arith.constant 0 : index
    %60 = vector.load %arg12[%c1_60, %c0_61, %c0_62] : memref<10x10x16xbf16, #tpu.memory_space<vmem>>, vector<8x8x16xbf16>
    %61 = vector.shape_cast %60 : vector<8x8x16xbf16> to vector<64x16xbf16>
    %c3_63 = arith.constant 3 : index
    %c0_64 = arith.constant 0 : index
    %c0_65 = arith.constant 0 : index
    %62 = vector.load %arg4[%c3_63, %c0_64, %c0_65] : memref<9x16x16xbf16, #tpu.memory_space<vmem>>, vector<1x16x16xbf16>
    %63 = vector.shape_cast %62 : vector<1x16x16xbf16> to vector<16x16xbf16>
    %cst_66 = arith.constant dense<0.000000e+00> : vector<64x16xf32>
    %64 = tpu.matmul %61, %63, %cst_66 {dimension_numbers = #tpu.dot_dimension_numbers<[1], [0], [0], [1], [0, 0, 1, 1], [], []>} : vector<64x16xbf16>, vector<16x16xbf16>, vector<64x16xf32> -> vector<64x16xf32>
    %65 = arith.addf %59, %64 : vector<64x16xf32>
    %c1_67 = arith.constant 1 : index
    %c1_68 = arith.constant 1 : index
    %c0_69 = arith.constant 0 : index
    %66 = vector.load %arg12[%c1_67, %c1_68, %c0_69] : memref<10x10x16xbf16, #tpu.memory_space<vmem>>, vector<8x8x16xbf16>
    %67 = vector.shape_cast %66 : vector<8x8x16xbf16> to vector<64x16xbf16>
    %c4 = arith.constant 4 : index
    %c0_70 = arith.constant 0 : index
    %c0_71 = arith.constant 0 : index
    %68 = vector.load %arg4[%c4, %c0_70, %c0_71] : memref<9x16x16xbf16, #tpu.memory_space<vmem>>, vector<1x16x16xbf16>
    %69 = vector.shape_cast %68 : vector<1x16x16xbf16> to vector<16x16xbf16>
    %cst_72 = arith.constant dense<0.000000e+00> : vector<64x16xf32>
    %70 = tpu.matmul %67, %69, %cst_72 {dimension_numbers = #tpu.dot_dimension_numbers<[1], [0], [0], [1], [0, 0, 1, 1], [], []>} : vector<64x16xbf16>, vector<16x16xbf16>, vector<64x16xf32> -> vector<64x16xf32>
    %71 = arith.addf %65, %70 : vector<64x16xf32>
    %c1_73 = arith.constant 1 : index
    %c2_74 = arith.constant 2 : index
    %c0_75 = arith.constant 0 : index
    %72 = vector.load %arg12[%c1_73, %c2_74, %c0_75] : memref<10x10x16xbf16, #tpu.memory_space<vmem>>, vector<8x8x16xbf16>
    %73 = vector.shape_cast %72 : vector<8x8x16xbf16> to vector<64x16xbf16>
    %c5 = arith.constant 5 : index
    %c0_76 = arith.constant 0 : index
    %c0_77 = arith.constant 0 : index
    %74 = vector.load %arg4[%c5, %c0_76, %c0_77] : memref<9x16x16xbf16, #tpu.memory_space<vmem>>, vector<1x16x16xbf16>
    %75 = vector.shape_cast %74 : vector<1x16x16xbf16> to vector<16x16xbf16>
    %cst_78 = arith.constant dense<0.000000e+00> : vector<64x16xf32>
    %76 = tpu.matmul %73, %75, %cst_78 {dimension_numbers = #tpu.dot_dimension_numbers<[1], [0], [0], [1], [0, 0, 1, 1], [], []>} : vector<64x16xbf16>, vector<16x16xbf16>, vector<64x16xf32> -> vector<64x16xf32>
    %77 = arith.addf %71, %76 : vector<64x16xf32>
    %c2_79 = arith.constant 2 : index
    %c0_80 = arith.constant 0 : index
    %c0_81 = arith.constant 0 : index
    %78 = vector.load %arg12[%c2_79, %c0_80, %c0_81] : memref<10x10x16xbf16, #tpu.memory_space<vmem>>, vector<8x8x16xbf16>
    %79 = vector.shape_cast %78 : vector<8x8x16xbf16> to vector<64x16xbf16>
    %c6 = arith.constant 6 : index
    %c0_82 = arith.constant 0 : index
    %c0_83 = arith.constant 0 : index
    %80 = vector.load %arg4[%c6, %c0_82, %c0_83] : memref<9x16x16xbf16, #tpu.memory_space<vmem>>, vector<1x16x16xbf16>
    %81 = vector.shape_cast %80 : vector<1x16x16xbf16> to vector<16x16xbf16>
    %cst_84 = arith.constant dense<0.000000e+00> : vector<64x16xf32>
    %82 = tpu.matmul %79, %81, %cst_84 {dimension_numbers = #tpu.dot_dimension_numbers<[1], [0], [0], [1], [0, 0, 1, 1], [], []>} : vector<64x16xbf16>, vector<16x16xbf16>, vector<64x16xf32> -> vector<64x16xf32>
    %83 = arith.addf %77, %82 : vector<64x16xf32>
    %c2_85 = arith.constant 2 : index
    %c1_86 = arith.constant 1 : index
    %c0_87 = arith.constant 0 : index
    %84 = vector.load %arg12[%c2_85, %c1_86, %c0_87] : memref<10x10x16xbf16, #tpu.memory_space<vmem>>, vector<8x8x16xbf16>
    %85 = vector.shape_cast %84 : vector<8x8x16xbf16> to vector<64x16xbf16>
    %c7 = arith.constant 7 : index
    %c0_88 = arith.constant 0 : index
    %c0_89 = arith.constant 0 : index
    %86 = vector.load %arg4[%c7, %c0_88, %c0_89] : memref<9x16x16xbf16, #tpu.memory_space<vmem>>, vector<1x16x16xbf16>
    %87 = vector.shape_cast %86 : vector<1x16x16xbf16> to vector<16x16xbf16>
    %cst_90 = arith.constant dense<0.000000e+00> : vector<64x16xf32>
    %88 = tpu.matmul %85, %87, %cst_90 {dimension_numbers = #tpu.dot_dimension_numbers<[1], [0], [0], [1], [0, 0, 1, 1], [], []>} : vector<64x16xbf16>, vector<16x16xbf16>, vector<64x16xf32> -> vector<64x16xf32>
    %89 = arith.addf %83, %88 : vector<64x16xf32>
    %c2_91 = arith.constant 2 : index
    %c2_92 = arith.constant 2 : index
    %c0_93 = arith.constant 0 : index
    %90 = vector.load %arg12[%c2_91, %c2_92, %c0_93] : memref<10x10x16xbf16, #tpu.memory_space<vmem>>, vector<8x8x16xbf16>
    %91 = vector.shape_cast %90 : vector<8x8x16xbf16> to vector<64x16xbf16>
    %c8 = arith.constant 8 : index
    %c0_94 = arith.constant 0 : index
    %c0_95 = arith.constant 0 : index
    %92 = vector.load %arg4[%c8, %c0_94, %c0_95] : memref<9x16x16xbf16, #tpu.memory_space<vmem>>, vector<1x16x16xbf16>
    %93 = vector.shape_cast %92 : vector<1x16x16xbf16> to vector<16x16xbf16>
    %cst_96 = arith.constant dense<0.000000e+00> : vector<64x16xf32>
    %94 = tpu.matmul %91, %93, %cst_96 {dimension_numbers = #tpu.dot_dimension_numbers<[1], [0], [0], [1], [0, 0, 1, 1], [], []>} : vector<64x16xbf16>, vector<16x16xbf16>, vector<64x16xf32> -> vector<64x16xf32>
    %95 = arith.addf %89, %94 : vector<64x16xf32>
    %c0_97 = arith.constant 0 : index
    %c0_98 = arith.constant 0 : index
    %96 = vector.load %arg5[%c0_97, %c0_98] : memref<1x16xf32, #tpu.memory_space<vmem>>, vector<1x16xf32>
    %97 = vector.broadcast %96 : vector<1x16xf32> to vector<64x16xf32>
    %98 = arith.addf %95, %97 : vector<64x16xf32>
    %cst_99 = arith.constant 0.000000e+00 : f32
    %99 = vector.broadcast %cst_99 : f32 to vector<64x16xf32>
    %100 = arith.maximumf %98, %99 : vector<64x16xf32>
    %101 = arith.addf %35, %100 : vector<64x16xf32>
    %102 = vector.shape_cast %101 : vector<64x16xf32> to vector<1x8x8x16xf32>
    %c0_100 = arith.constant 0 : index
    %c0_101 = arith.constant 0 : index
    %c0_102 = arith.constant 0 : index
    %c0_103 = arith.constant 0 : index
    %103 = vector.load %arg11[%c0_100, %c0_101, %c0_102, %c0_103] : memref<1x8x8x16xf32, #tpu.memory_space<vmem>>, vector<1x8x8x16xf32>
    tpu.vector_store %arg11[%c0_100, %c0_101, %c0_102, %c0_103], %102 {strides = array<i32>} : memref<1x8x8x16xf32, #tpu.memory_space<vmem>>, vector<1x8x8x16xf32>,
    %cst_104 = arith.constant dense<0.000000e+00> : vector<16xf32>
    %104 = vector.multi_reduction <add>, %101, %cst_104 [0] : vector<64x16xf32> to vector<16xf32>
    %105 = vector.shape_cast %104 : vector<16xf32> to vector<1x16xf32>
    %cst_105 = arith.constant 1.562500e-02 : f32
    %106 = vector.broadcast %cst_105 : f32 to vector<1x16xf32>
    %107 = arith.mulf %105, %106 : vector<1x16xf32>
    %c0_106 = arith.constant 0 : index
    %c0_107 = arith.constant 0 : index
    %108 = vector.load %arg6[%c0_106, %c0_107] : memref<16x128xf32, #tpu.memory_space<vmem>>, vector<16x128xf32>
    %cst_108 = arith.constant dense<0.000000e+00> : vector<1x128xf32>
    %109 = tpu.matmul %107, %108, %cst_108 {dimension_numbers = #tpu.dot_dimension_numbers<[1], [0], [0], [1], [0, 0, 1, 1], [], []>} : vector<1x16xf32>, vector<16x128xf32>, vector<1x128xf32> -> vector<1x128xf32>
    %c0_109 = arith.constant 0 : index
    %c0_110 = arith.constant 0 : index
    %110 = vector.load %arg7[%c0_109, %c0_110] : memref<1x128xf32, #tpu.memory_space<vmem>>, vector<1x128xf32>
    %111 = arith.addf %109, %110 : vector<1x128xf32>
    %cst_111 = arith.constant 0.000000e+00 : f32
    %112 = vector.broadcast %cst_111 : f32 to vector<1x128xf32>
    %113 = arith.maximumf %111, %112 : vector<1x128xf32>
    %c0_112 = arith.constant 0 : index
    %c0_113 = arith.constant 0 : index
    %114 = vector.load %arg8[%c0_112, %c0_113] : memref<128x16xf32, #tpu.memory_space<vmem>>, vector<128x16xf32>
    %cst_114 = arith.constant dense<0.000000e+00> : vector<1x16xf32>
    %115 = tpu.matmul %113, %114, %cst_114 {dimension_numbers = #tpu.dot_dimension_numbers<[1], [0], [0], [1], [0, 0, 1, 1], [], []>} : vector<1x128xf32>, vector<128x16xf32>, vector<1x16xf32> -> vector<1x16xf32>
    %c0_115 = arith.constant 0 : index
    %c0_116 = arith.constant 0 : index
    %116 = vector.load %arg9[%c0_115, %c0_116] : memref<1x16xf32, #tpu.memory_space<vmem>>, vector<1x16xf32>
    %117 = arith.addf %115, %116 : vector<1x16xf32>
    %118 = arith.negf %117 : vector<1x16xf32>
    %119 = math.exp %118 : vector<1x16xf32>
    %cst_117 = arith.constant 1.000000e+00 : f32
    %120 = vector.broadcast %cst_117 : f32 to vector<1x16xf32>
    %121 = arith.addf %120, %119 : vector<1x16xf32>
    %122 = arith.divf %120, %121 : vector<1x16xf32>
    %123 = vector.broadcast %122 : vector<1x16xf32> to vector<64x16xf32>
    %124 = arith.mulf %101, %123 : vector<64x16xf32>
    %125 = vector.shape_cast %124 : vector<64x16xf32> to vector<1x8x8x16xf32>
    %c0_118 = arith.constant 0 : index
    %c0_119 = arith.constant 0 : index
    %c0_120 = arith.constant 0 : index
    %c0_121 = arith.constant 0 : index
    %126 = vector.load %arg10[%c0_118, %c0_119, %c0_120, %c0_121] : memref<1x8x8x16xf32, #tpu.memory_space<vmem>>, vector<1x8x8x16xf32>
    tpu.vector_store %arg10[%c0_118, %c0_119, %c0_120, %c0_121], %125 {strides = array<i32>} : memref<1x8x8x16xf32, #tpu.memory_space<vmem>>, vector<1x8x8x16xf32>,
    return
  }
  func.func @transform_0(%arg0: i32) -> (i32, i32, i32, i32) {
    %c0_i32 = arith.constant 0 : i32
    %c0_i32_0 = arith.constant 0 : i32
    %c0_i32_1 = arith.constant 0 : i32
    %c0_i32_2 = arith.constant 0 : i32
    return %arg0, %c0_i32, %c0_i32_0, %c0_i32_1 : i32, i32, i32, i32
  }
  func.func @transform_1(%arg0: i32) -> (i32, i32, i32) {
    %c0_i32 = arith.constant 0 : i32
    %c0_i32_0 = arith.constant 0 : i32
    %c0_i32_1 = arith.constant 0 : i32
    %c0_i32_2 = arith.constant 0 : i32
    return %c0_i32, %c0_i32_0, %c0_i32_1 : i32, i32, i32
  }
  func.func @transform_2(%arg0: i32) -> (i32, i32) {
    %c0_i32 = arith.constant 0 : i32
    %c0_i32_0 = arith.constant 0 : i32
    %c0_i32_1 = arith.constant 0 : i32
    return %c0_i32, %c0_i32_0 : i32, i32
  }
  func.func @transform_3(%arg0: i32) -> (i32, i32, i32) {
    %c0_i32 = arith.constant 0 : i32
    %c0_i32_0 = arith.constant 0 : i32
    %c0_i32_1 = arith.constant 0 : i32
    %c0_i32_2 = arith.constant 0 : i32
    return %c0_i32, %c0_i32_0, %c0_i32_1 : i32, i32, i32
  }
  func.func @transform_4(%arg0: i32) -> (i32, i32) {
    %c0_i32 = arith.constant 0 : i32
    %c0_i32_0 = arith.constant 0 : i32
    %c0_i32_1 = arith.constant 0 : i32
    return %c0_i32, %c0_i32_0 : i32, i32
  }
  func.func @transform_5(%arg0: i32) -> (i32, i32) {
    %c0_i32 = arith.constant 0 : i32
    %c0_i32_0 = arith.constant 0 : i32
    %c0_i32_1 = arith.constant 0 : i32
    return %c0_i32, %c0_i32_0 : i32, i32
  }
  func.func @transform_6(%arg0: i32) -> (i32, i32) {
    %c0_i32 = arith.constant 0 : i32
    %c0_i32_0 = arith.constant 0 : i32
    %c0_i32_1 = arith.constant 0 : i32
    return %c0_i32, %c0_i32_0 : i32, i32
  }
  func.func @transform_7(%arg0: i32) -> (i32, i32) {
    %c0_i32 = arith.constant 0 : i32
    %c0_i32_0 = arith.constant 0 : i32
    %c0_i32_1 = arith.constant 0 : i32
    return %c0_i32, %c0_i32_0 : i32, i32
  }
  func.func @transform_8(%arg0: i32) -> (i32, i32) {
    %c0_i32 = arith.constant 0 : i32
    %c0_i32_0 = arith.constant 0 : i32
    %c0_i32_1 = arith.constant 0 : i32
    return %c0_i32, %c0_i32_0 : i32, i32
  }
  func.func @transform_9(%arg0: i32) -> (i32, i32, i32, i32) {
    %c0_i32 = arith.constant 0 : i32
    %c0_i32_0 = arith.constant 0 : i32
    %c0_i32_1 = arith.constant 0 : i32
    %c0_i32_2 = arith.constant 0 : i32
    return %arg0, %c0_i32, %c0_i32_0, %c0_i32_1 : i32, i32, i32, i32
  }
  func.func @transform_10(%arg0: i32) -> (i32, i32, i32, i32) {
    %c0_i32 = arith.constant 0 : i32
    %c0_i32_0 = arith.constant 0 : i32
    %c0_i32_1 = arith.constant 0 : i32
    %c0_i32_2 = arith.constant 0 : i32
    return %arg0, %c0_i32, %c0_i32_0, %c0_i32_1 : i32, i32, i32, i32
  }
}

</mosaic_0001>

<llo_original>
// kernel: encoding_block_forward.1
$region0: #{encoding_block_forward.1}
  #allocation0 [shape = 'u32[]', space=smem, size = 0x4, offset = 0x4, fixed_abs, tag = 'smem constant byte address 0x4 - core index']
  #allocation1 [shape = 'u32[144,128]{1,0:T(1,128)}', space=vmem, size = 0x12000, scoped, tag = 'internal scratch']
  #allocation2 [shape = 'bf16[10,10,16]{2,1,0:T(8,128)(2,1)}', space=vmem, size = 0xa000, scoped, tag = 'scratch operand']
  %s0 = inlined_call_operand.vmem [shape: bf16[2,9,9,16], index: 0, kind: input, shape index: {}]
  %s1 = inlined_call_operand.vmem [shape: bf16[4,16,32], index: 1, kind: input, shape index: {}]
  %s2 = inlined_call_operand.vmem [shape: f32[1,32], index: 2, kind: input, shape index: {}]
  %s3 = inlined_call_operand.vmem [shape: bf16[9,16,16], index: 3, kind: input, shape index: {}]
  %s4 = inlined_call_operand.vmem [shape: f32[1,16], index: 4, kind: input, shape index: {}]
  %s5 = inlined_call_operand.vmem [shape: f32[16,128], index: 5, kind: input, shape index: {}]
  %s6 = inlined_call_operand.vmem [shape: f32[1,128], index: 6, kind: input, shape index: {}]
  %s7 = inlined_call_operand.vmem [shape: f32[128,16], index: 7, kind: input, shape index: {}]
  %s8 = inlined_call_operand.vmem [shape: f32[1,16], index: 8, kind: input, shape index: {}]
  %s9 = inlined_call_operand.hbm [shape: f32[2,8,8,16], index: 9, kind: output, shape index: {0}]
  %s10 = inlined_call_operand.hbm [shape: f32[2,8,8,16], index: 10, kind: output, shape index: {1}]
  %11 = xla_tuple %s9, %s10
  %s12 = sld [smem:[#allocation0]]
  $region77: #{encoding_block_forward.1} parent=0
    _
  %s14 = ssub.s32 1, %s12
  %s15 = scalar_select 0, %s14, %s12
  $region1: #{encoding_block_forward.1} parent=0
    #allocation3 [shape = 'u8[65536]{0}', space=vmem, size = 0x10000, scoped, tag = 'output window, operand 0']
    #allocation4 [shape = 's32[2]{0}', space=sflag, size = 0x8, scoped, tag = 'scoped memory for encoding_block_forward.1']
    #allocation5 [shape = 'u8[65536]{0}', space=vmem, size = 0x10000, scoped, tag = 'output window, operand 1']
    #allocation6 [shape = 's32[2]{0}', space=sflag, size = 0x8, scoped, tag = 'scoped memory for encoding_block_forward.1']
    %16 = vsyncpa [#allocation4], 0
    %s17 = scalar_lea.sflag [#allocation4], 1
    %18 = vsyncpa %s17, 0
    %19 = vsyncpa [#allocation6], 0
    %s20 = scalar_lea.sflag [#allocation6], 1
    %21 = vsyncpa %s20, 0
    loop: start=0, step=1, limit=4
    $region2: #{encoding_block_forward.1} parent=1 // loop_pre_header
      _
    $region3: #{encoding_block_forward.1} parent=1 // loop_header
      %s23 = sphi 0, %s27
      %p24 = scmp.ge.s32.totalorder %s23, 4
      %s33 = sphi 0, %s35
      %s36 = sphi 0, %s33
      %s37 = sphi 0, %s36
      %s53 = sphi 0, %s37
      %s57 = sphi 0, %s57
      %s59 = sphi 0, %s57
      %s60 = sphi 0, %s59
      %s74 = sphi 0, %s60
      %s78 = sphi 0, %s78
      %s80 = sphi 0, %s78
      %s81 = sphi 0, %s80
      %s95 = sphi 0, %s81
      %s99 = sphi 0, %s99
      %s101 = sphi 0, %s99
      %s102 = sphi 0, %s101
      %s116 = sphi 0, %s102
      %s120 = sphi 0, %s120
      %s122 = sphi 0, %s120
      %s123 = sphi 0, %s122
      %s137 = sphi 0, %s123
      %s141 = sphi 0, %s141
      %s143 = sphi 0, %s141
      %s144 = sphi 0, %s143
      %s158 = sphi 0, %s144
      %s162 = sphi 0, %s162
      %s164 = sphi 0, %s162
      %s165 = sphi 0, %s164
      %s179 = sphi 0, %s165
      %s183 = sphi 0, %s183
      %s185 = sphi 0, %s183
      %s186 = sphi 0, %s185
      %s200 = sphi 0, %s186
      %s204 = sphi 0, %s204
      %s206 = sphi 0, %s204
      %s207 = sphi 0, %s206
      %s221 = sphi 0, %s207
      %s227 = sphi 0, %s229
      %s230 = sphi 0, %s227
      %s231 = sphi 0, %s230
      %s247 = sphi 0, %s231
      %s253 = sphi 0, %s255
      %s256 = sphi 0, %s253
      %s257 = sphi 0, %s256
      %s273 = sphi 0, %s257
    $region4: #{encoding_block_forward.1} parent=1 // loop_header_branch
      %26 = sbr.rel (%p24) target = $region8
    $region5: #{encoding_block_forward.1} parent=1 // loop_body
      %s28 = ssub.s32 %s23, 1
      %s29 = ssub.s32 %s23, 2
      %s30 = sadd.s32 %s23, 1
      %s31 = ssub.s32 %s23, %s30
      %p32 = scmp.eq.s32.totalorder %s31, 0
      %s34 = sadd.s32 %s33, 1
      %s35 = scalar_select %p32, %s33, %s34
      %p38 = pneg %p32
      %p39 = scmp.eq.s32.totalorder %s23, 1
      %p40 = por %p38, %p39
      %p41 = scmp.ne.s32.totalorder %s33, %s36
      %p42 = scmp.eq.s32.totalorder %s23, 0
      %p43 = por %p41, %p42
      %p44 = scmp.ne.s32.totalorder %s33, %s36
      %p45 = scmp.eq.s32.totalorder %s28, 1
      %p46 = por %p44, %p45
      %p47 = scmp.ne.s32.totalorder %s36, %s37
      %p48 = scmp.eq.s32.totalorder %s28, 0
      %p49 = por %p47, %p48
      %p50 = scmp.ne.s32.totalorder %s36, %s37
      %p51 = scmp.eq.s32.totalorder %s29, 1
      %p52 = por %p50, %p51
      %p54 = scmp.ne.s32.totalorder %s37, %s53
      %p55 = scmp.eq.s32.totalorder %s29, 0
      %p56 = por %p54, %p55
      %s58 = sadd.s32 %s57, 1
      %p61 = scmp.eq.s32.totalorder %s23, 1
      %p62 = scmp.ne.s32.totalorder %s57, %s59
      %p63 = scmp.eq.s32.totalorder %s23, 0
      %p64 = por %p62, %p63
      %p65 = scmp.ne.s32.totalorder %s57, %s59
      %p66 = scmp.eq.s32.totalorder %s28, 1
      %p67 = por %p65, %p66
      %p68 = scmp.ne.s32.totalorder %s59, %s60
      %p69 = scmp.eq.s32.totalorder %s28, 0
      %p70 = por %p68, %p69
      %p71 = scmp.ne.s32.totalorder %s59, %s60
      %p72 = scmp.eq.s32.totalorder %s29, 1
      %p73 = por %p71, %p72
      %p75 = scmp.ne.s32.totalorder %s60, %s74
      %p76 = scmp.eq.s32.totalorder %s29, 0
      %p77 = por %p75, %p76
      %s79 = sadd.s32 %s78, 1
      %p82 = scmp.eq.s32.totalorder %s23, 1
      %p83 = scmp.ne.s32.totalorder %s78, %s80
      %p84 = scmp.eq.s32.totalorder %s23, 0
      %p85 = por %p83, %p84
      %p86 = scmp.ne.s32.totalorder %s78, %s80
      %p87 = scmp.eq.s32.totalorder %s28, 1
      %p88 = por %p86, %p87
      %p89 = scmp.ne.s32.totalorder %s80, %s81
      %p90 = scmp.eq.s32.totalorder %s28, 0
      %p91 = por %p89, %p90
      %p92 = scmp.ne.s32.totalorder %s80, %s81
      %p93 = scmp.eq.s32.totalorder %s29, 1
      %p94 = por %p92, %p93
      %p96 = scmp.ne.s32.totalorder %s81, %s95
      %p97 = scmp.eq.s32.totalorder %s29, 0
      %p98 = por %p96, %p97
      %s100 = sadd.s32 %s99, 1
      %p103 = scmp.eq.s32.totalorder %s23, 1
      %p104 = scmp.ne.s32.totalorder %s99, %s101
      %p105 = scmp.eq.s32.totalorder %s23, 0
      %p106 = por %p104, %p105
      %p107 = scmp.ne.s32.totalorder %s99, %s101
      %p108 = scmp.eq.s32.totalorder %s28, 1
      %p109 = por %p107, %p108
      %p110 = scmp.ne.s32.totalorder %s101, %s102
      %p111 = scmp.eq.s32.totalorder %s28, 0
      %p112 = por %p110, %p111
      %p113 = scmp.ne.s32.totalorder %s101, %s102
      %p114 = scmp.eq.s32.totalorder %s29, 1
      %p115 = por %p113, %p114
      %p117 = scmp.ne.s32.totalorder %s102, %s116
      %p118 = scmp.eq.s32.totalorder %s29, 0
      %p119 = por %p117, %p118
      %s121 = sadd.s32 %s120, 1
      %p124 = scmp.eq.s32.totalorder %s23, 1
      %p125 = scmp.ne.s32.totalorder %s120, %s122
      %p126 = scmp.eq.s32.totalorder %s23, 0
      %p127 = por %p125, %p126
      %p128 = scmp.ne.s32.totalorder %s120, %s122
      %p129 = scmp.eq.s32.totalorder %s28, 1
      %p130 = por %p128, %p129
      %p131 = scmp.ne.s32.totalorder %s122, %s123
      %p132 = scmp.eq.s32.totalorder %s28, 0
      %p133 = por %p131, %p132
      %p134 = scmp.ne.s32.totalorder %s122, %s123
      %p135 = scmp.eq.s32.totalorder %s29, 1
      %p136 = por %p134, %p135
      %p138 = scmp.ne.s32.totalorder %s123, %s137
      %p139 = scmp.eq.s32.totalorder %s29, 0
      %p140 = por %p138, %p139
      %s142 = sadd.s32 %s141, 1
      %p145 = scmp.eq.s32.totalorder %s23, 1
      %p146 = scmp.ne.s32.totalorder %s141, %s143
      %p147 = scmp.eq.s32.totalorder %s23, 0
      %p148 = por %p146, %p147
      %p149 = scmp.ne.s32.totalorder %s141, %s143
      %p150 = scmp.eq.s32.totalorder %s28, 1
      %p151 = por %p149, %p150
      %p152 = scmp.ne.s32.totalorder %s143, %s144
      %p153 = scmp.eq.s32.totalorder %s28, 0
      %p154 = por %p152, %p153
      %p155 = scmp.ne.s32.totalorder %s143, %s144
      %p156 = scmp.eq.s32.totalorder %s29, 1
      %p157 = por %p155, %p156
      %p159 = scmp.ne.s32.totalorder %s144, %s158
      %p160 = scmp.eq.s32.totalorder %s29, 0
      %p161 = por %p159, %p160
      %s163 = sadd.s32 %s162, 1
      %p166 = scmp.eq.s32.totalorder %s23, 1
      %p167 = scmp.ne.s32.totalorder %s162, %s164
      %p168 = scmp.eq.s32.totalorder %s23, 0
      %p169 = por %p167, %p168
      %p170 = scmp.ne.s32.totalorder %s162, %s164
      %p171 = scmp.eq.s32.totalorder %s28, 1
      %p172 = por %p170, %p171
      %p173 = scmp.ne.s32.totalorder %s164, %s165
      %p174 = scmp.eq.s32.totalorder %s28, 0
      %p175 = por %p173, %p174
      %p176 = scmp.ne.s32.totalorder %s164, %s165
      %p177 = scmp.eq.s32.totalorder %s29, 1
      %p178 = por %p176, %p177
      %p180 = scmp.ne.s32.totalorder %s165, %s179
      %p181 = scmp.eq.s32.totalorder %s29, 0
      %p182 = por %p180, %p181
      %s184 = sadd.s32 %s183, 1
      %p187 = scmp.eq.s32.totalorder %s23, 1
      %p188 = scmp.ne.s32.totalorder %s183, %s185
      %p189 = scmp.eq.s32.totalorder %s23, 0
      %p190 = por %p188, %p189
      %p191 = scmp.ne.s32.totalorder %s183, %s185
      %p192 = scmp.eq.s32.totalorder %s28, 1
      %p193 = por %p191, %p192
      %p194 = scmp.ne.s32.totalorder %s185, %s186
      %p195 = scmp.eq.s32.totalorder %s28, 0
      %p196 = por %p194, %p195
      %p197 = scmp.ne.s32.totalorder %s185, %s186
      %p198 = scmp.eq.s32.totalorder %s29, 1
      %p199 = por %p197, %p198
      %p201 = scmp.ne.s32.totalorder %s186, %s200
      %p202 = scmp.eq.s32.totalorder %s29, 0
      %p203 = por %p201, %p202
      %s205 = sadd.s32 %s204, 1
      %p208 = scmp.eq.s32.totalorder %s23, 1
      %p209 = scmp.ne.s32.totalorder %s204, %s206
      %p210 = scmp.eq.s32.totalorder %s23, 0
      %p211 = por %p209, %p210
      %p212 = scmp.ne.s32.totalorder %s204, %s206
      %p213 = scmp.eq.s32.totalorder %s28, 1
      %p214 = por %p212, %p213
      %p215 = scmp.ne.s32.totalorder %s206, %s207
      %p216 = scmp.eq.s32.totalorder %s28, 0
      %p217 = por %p215, %p216
      %p218 = scmp.ne.s32.totalorder %s206, %s207
      %p219 = scmp.eq.s32.totalorder %s29, 1
      %p220 = por %p218, %p219
      %p222 = scmp.ne.s32.totalorder %s207, %s221
      %p223 = scmp.eq.s32.totalorder %s29, 0
      %p224 = por %p222, %p223
      %s225 = ssub.s32 %s23, %s30
      %p226 = scmp.eq.s32.totalorder %s225, 0
      %s228 = sadd.s32 %s227, 1
      %s229 = scalar_select %p226, %s227, %s228
      %p232 = pneg %p226
      %p233 = scmp.eq.s32.totalorder %s23, 1
      %p234 = por %p232, %p233
      %p235 = scmp.ne.s32.totalorder %s227, %s230
      %p236 = scmp.eq.s32.totalorder %s23, 0
      %p237 = por %p235, %p236
      %p238 = scmp.ne.s32.totalorder %s227, %s230
      %p239 = scmp.eq.s32.totalorder %s28, 1
      %p240 = por %p238, %p239
      %p241 = scmp.ne.s32.totalorder %s230, %s231
      %p242 = scmp.eq.s32.totalorder %s28, 0
      %p243 = por %p241, %p242
      %p244 = scmp.ne.s32.totalorder %s230, %s231
      %p245 = scmp.eq.s32.totalorder %s29, 1
      %p246 = por %p244, %p245
      %p248 = scmp.ne.s32.totalorder %s231, %s247
      %p249 = scmp.eq.s32.totalorder %s29, 0
      %p250 = por %p248, %p249
      %s251 = ssub.s32 %s23, %s30
      %p252 = scmp.eq.s32.totalorder %s251, 0
      %s254 = sadd.s32 %s253, 1
      %s255 = scalar_select %p252, %s253, %s254
      %p258 = pneg %p252
      %p259 = scmp.eq.s32.totalorder %s23, 1
      %p260 = por %p258, %p259
      %p261 = scmp.ne.s32.totalorder %s253, %s256
      %p262 = scmp.eq.s32.totalorder %s23, 0
      %p263 = por %p261, %p262
      %p264 = scmp.ne.s32.totalorder %s253, %s256
      %p265 = scmp.eq.s32.totalorder %s28, 1
      %p266 = por %p264, %p265
      %p267 = scmp.ne.s32.totalorder %s256, %s257
      %p268 = scmp.eq.s32.totalorder %s28, 0
      %p269 = por %p267, %p268
      %p270 = scmp.ne.s32.totalorder %s256, %s257
      %p271 = scmp.eq.s32.totalorder %s29, 1
      %p272 = por %p270, %p271
      %p274 = scmp.ne.s32.totalorder %s257, %s273
      %p275 = scmp.eq.s32.totalorder %s29, 0
      %p276 = por %p274, %p275
      %p277 = scmp.le.s32.totalorder 1, %s23
      %p278 = scmp.lt.s32.totalorder %s23, 3
      %p279 = pnand %p277, %p278
      %p280 = pneg %p279
      // Predicated region
      $region9: #{encoding_block_forward.1} parent=5 // pred_check
        _
      $region10: #{encoding_block_forward.1} parent=5 // pred_check_branch
        %282 = sbr.rel (%p279) target = $region12
      $region11: #{encoding_block_forward.1} parent=5 // pred_region
        %s283 = ssub.s32 %s23, 1
        // Predicated region
        $region13: #{encoding_block_forward.1} parent=11 // pred_check
          %p284 = pneg %p70
        $region14: #{encoding_block_forward.1} parent=11 // pred_check_branch
          %286 = sbr.rel (%p284) target = $region16
        $region15: #{encoding_block_forward.1} parent=11 // pred_region
          _
        $region16: #{encoding_block_forward.1} parent=11 // pred_fallthru
          _
        // Predicated region
        $region17: #{encoding_block_forward.1} parent=11 // pred_check
          %p287 = pneg %p91
        $region18: #{encoding_block_forward.1} parent=11 // pred_check_branch
          %289 = sbr.rel (%p287) target = $region20
        $region19: #{encoding_block_forward.1} parent=11 // pred_region
          _
        $region20: #{encoding_block_forward.1} parent=11 // pred_fallthru
          _
        // Predicated region
        $region21: #{encoding_block_forward.1} parent=11 // pred_check
          %p290 = pneg %p112
        $region22: #{encoding_block_forward.1} parent=11 // pred_check_branch
          %292 = sbr.rel (%p290) target = $region24
        $region23: #{encoding_block_forward.1} parent=11 // pred_region
          _
        $region24: #{encoding_block_forward.1} parent=11 // pred_fallthru
          _
        // Predicated region
        $region25: #{encoding_block_forward.1} parent=11 // pred_check
          %p293 = pneg %p133
        $region26: #{encoding_block_forward.1} parent=11 // pred_check_branch
          %295 = sbr.rel (%p293) target = $region28
        $region27: #{encoding_block_forward.1} parent=11 // pred_region
          _
        $region28: #{encoding_block_forward.1} parent=11 // pred_fallthru
          _
        // Predicated region
        $region29: #{encoding_block_forward.1} parent=11 // pred_check
          %p296 = pneg %p154
        $region30: #{encoding_block_forward.1} parent=11 // pred_check_branch
          %298 = sbr.rel (%p296) target = $region32
        $region31: #{encoding_block_forward.1} parent=11 // pred_region
          _
        $region32: #{encoding_block_forward.1} parent=11 // pred_fallthru
          _
        // Predicated region
        $region33: #{encoding_block_forward.1} parent=11 // pred_check
          %p299 = pneg %p175
        $region34: #{encoding_block_forward.1} parent=11 // pred_check_branch
          %301 = sbr.rel (%p299) target = $region36
        $region35: #{encoding_block_forward.1} parent=11 // pred_region
          _
        $region36: #{encoding_block_forward.1} parent=11 // pred_fallthru
          _
        // Predicated region
        $region37: #{encoding_block_forward.1} parent=11 // pred_check
          %p302 = pneg %p196
        $region38: #{encoding_block_forward.1} parent=11 // pred_check_branch
          %304 = sbr.rel (%p302) target = $region40
        $region39: #{encoding_block_forward.1} parent=11 // pred_region
          _
        $region40: #{encoding_block_forward.1} parent=11 // pred_fallthru
          _
        // Predicated region
        $region41: #{encoding_block_forward.1} parent=11 // pred_check
          %p305 = pneg %p217
        $region42: #{encoding_block_forward.1} parent=11 // pred_check_branch
          %307 = sbr.rel (%p305) target = $region44
        $region43: #{encoding_block_forward.1} parent=11 // pred_region
          _
        $region44: #{encoding_block_forward.1} parent=11 // pred_fallthru
          _
      $region12: #{encoding_block_forward.1} parent=5 // pred_fallthru
        _
      %p308 = scmp.lt.s32.totalorder %s23, 2
      // Predicated region
      $region45: #{encoding_block_forward.1} parent=5 // pred_check
        %p309 = pneg %p308
      $region46: #{encoding_block_forward.1} parent=5 // pred_check_branch
        %311 = sbr.rel (%p309) target = $region48
      $region47: #{encoding_block_forward.1} parent=5 // pred_region
        // Predicated region
        $region49: #{encoding_block_forward.1} parent=47 // pred_check
          %p312 = pneg %p43
        $region50: #{encoding_block_forward.1} parent=47 // pred_check_branch
          %314 = sbr.rel (%p312) target = $region52
        $region51: #{encoding_block_forward.1} parent=47 // pred_region
          %p315 = scmp.lt.s32.totalorder %s23, 1
          %s316 = scalar_select %p315, %s23, 1
          %s317 = smul.addr %s316, 18
          %s318 = smul.addr %s317, 4
          %s319 = scalar_lea.vmem %s0, %s318
        $region52: #{encoding_block_forward.1} parent=47 // pred_fallthru
          _
      $region48: #{encoding_block_forward.1} parent=5 // pred_fallthru
        _
      %p320 = scmp.le.s32.totalorder 1, %s23
      %p321 = scmp.lt.s32.totalorder %s23, 3
      %p322 = pnand %p320, %p321
      %p323 = pneg %p322
      // Predicated region
      $region53: #{encoding_block_forward.1} parent=5 // pred_check
        _
      $region54: #{encoding_block_forward.1} parent=5 // pred_check_branch
        %325 = sbr.rel (%p322) target = $region56
      $region55: #{encoding_block_forward.1} parent=5 // pred_region
        %s326 = ssub.s32 %s23, 1
        %p327 = scmp.lt.s32.totalorder %s28, 1
        %s328 = scalar_select %p327, %s28, 1
        %s329 = smul.addr %s328, 18
        %s330 = smul.addr %s329, 4
        %s331 = scalar_lea.vmem %s0, %s330
        %p332 = pneg %p49
        %p333 = pneg %p46
        %p334 = pneg %p70
        %p335 = pneg %p67
        %p336 = pneg %p91
        %p337 = pneg %p88
        %p338 = pneg %p112
        %p339 = pneg %p109
        %p340 = pneg %p133
        %p341 = pneg %p130
        %p342 = pneg %p154
        %p343 = pneg %p151
        %p344 = pneg %p175
        %p345 = pneg %p172
        %p346 = pneg %p196
        %p347 = pneg %p193
        %p348 = pneg %p217
        %p349 = pneg %p214
        %p350 = pneg %p243
        %p351 = pneg %p240
        %s352 = sand.u32 %s230, 1
        %s353 = scalar_lea.sflag [#allocation4], %s352
        %s354 = sand.u32 %s230, 1
        %s355 = smul.addr %s354, 64
        %s356 = scalar_lea.vmem [#allocation3], %s355
        %p357 = pneg %p269
        %p358 = pneg %p266
        %s359 = sand.u32 %s256, 1
        %s360 = scalar_lea.sflag [#allocation6], %s359
        %s361 = sand.u32 %s256, 1
        %s362 = smul.addr %s361, 64
        %s363 = scalar_lea.vmem [#allocation5], %s362
        %p364 = scmp.lt.s32.totalorder %s28, 1
        %s365 = scalar_select %p364, %s28, 1
        %s366 = smul.addr %s365, 18
        %s367 = smul.addr %s366, 4
        %s368 = scalar_lea.vmem %s0, %s367
        %v370 = vld [vmem:[%s368] sm:$0xf]
        %v371 = vld [vmem:[%s368 + $0x8] sm:$0xf]
        %v372 = vld [vmem:[%s368 + $0x10] sm:$0xf]
        %v373 = vld [vmem:[%s368 + $0x18] sm:$0xf]
        %v374 = vld [vmem:[%s368 + $0x20] sm:$0xf]
        %v375 = vld [vmem:[%s368 + $0x28] sm:$0xf]
        %v376 = vld [vmem:[%s368 + $0x30] sm:$0xf]
        %v377 = vld [vmem:[%s368 + $0x38] sm:$0xf]
        %v378 = vld [vmem:[%s1] sm:$0xf]
        %v379 = vld [vmem:[%s1 + $0x4] sm:$0xf]
        %v380 = vld [vmem:[%s368 + $0x4] sm:$0x1]
        %v381 = vld [vmem:[%s368 + $0xc] sm:$0x1]
        %v382 = vld [vmem:[%s368 + $0x14] sm:$0x1]
        %v383 = vld [vmem:[%s368 + $0x1c] sm:$0x1]
        %v384 = vld [vmem:[%s368 + $0x24] sm:$0x1]
        %v385 = vld [vmem:[%s368 + $0x2c] sm:$0x1]
        %v386 = vld [vmem:[%s368 + $0x34] sm:$0x1]
        %v387 = vld [vmem:[%s368 + $0x3c] sm:$0x1]
        %vm388 = vsmask.f32 3328
        %vm389 = vsmask.f32 7440
        %vm390 = vmor %vm388, %vm389
        %v392 = vshrl.u32 %v370, 16
        %v394 = vrot.slane %v392, 4
        %v395 = vshll.u32 %v370, 16
        %v397 = vrot.slane %v395, 5
        %v398 = vor.u32 %v394, %v397
        %v399 = vrot.slane %v398, 4
        %v401 = vshll.u32 %v380, 16
        %v403 = vrot.slane %v401, 5
        %v404 = vsel %vm390, %v399, %v403
        %v406 = vshrl.u32 %v371, 16
        %v408 = vrot.slane %v406, 4
        %v409 = vshll.u32 %v371, 16
        %v411 = vrot.slane %v409, 5
        %v412 = vor.u32 %v408, %v411
        %v413 = vrot.slane %v412, 4
        %v415 = vshll.u32 %v381, 16
        %v417 = vrot.slane %v415, 5
        %v418 = vsel %vm390, %v413, %v417
        %v420 = vshrl.u32 %v372, 16
        %v422 = vrot.slane %v420, 4
        %v423 = vshll.u32 %v372, 16
        %v425 = vrot.slane %v423, 5
        %v426 = vor.u32 %v422, %v425
        %v427 = vrot.slane %v426, 4
        %v429 = vshll.u32 %v382, 16
        %v431 = vrot.slane %v429, 5
        %v432 = vsel %vm390, %v427, %v431
        %v434 = vshrl.u32 %v373, 16
        %v436 = vrot.slane %v434, 4
        %v437 = vshll.u32 %v373, 16
        %v439 = vrot.slane %v437, 5
        %v440 = vor.u32 %v436, %v439
        %v441 = vrot.slane %v440, 4
        %v443 = vshll.u32 %v383, 16
        %v445 = vrot.slane %v443, 5
        %v446 = vsel %vm390, %v441, %v445
        %v448 = vshrl.u32 %v374, 16
        %v450 = vrot.slane %v448, 4
        %v451 = vshll.u32 %v374, 16
        %v453 = vrot.slane %v451, 5
        %v454 = vor.u32 %v450, %v453
        %v455 = vrot.slane %v454, 4
        %v457 = vshll.u32 %v384, 16
        %v459 = vrot.slane %v457, 5
        %v460 = vsel %vm390, %v455, %v459
        %v462 = vshrl.u32 %v375, 16
        %v464 = vrot.slane %v462, 4
        %v465 = vshll.u32 %v375, 16
        %v467 = vrot.slane %v465, 5
        %v468 = vor.u32 %v464, %v467
        %v469 = vrot.slane %v468, 4
        %v471 = vshll.u32 %v385, 16
        %v473 = vrot.slane %v471, 5
        %v474 = vsel %vm390, %v469, %v473
        %v476 = vshrl.u32 %v376, 16
        %v478 = vrot.slane %v476, 4
        %v479 = vshll.u32 %v376, 16
        %v481 = vrot.slane %v479, 5
        %v482 = vor.u32 %v478, %v481
        %v483 = vrot.slane %v482, 4
        %v485 = vshll.u32 %v386, 16
        %v487 = vrot.slane %v485, 5
        %v488 = vsel %vm390, %v483, %v487
        %v490 = vshrl.u32 %v377, 16
        %v492 = vrot.slane %v490, 4
        %v493 = vshll.u32 %v377, 16
        %v495 = vrot.slane %v493, 5
        %v496 = vor.u32 %v492, %v495
        %v497 = vrot.slane %v496, 4
        %v499 = vshll.u32 %v387, 16
        %v501 = vrot.slane %v499, 5
        %v502 = vsel %vm390, %v497, %v501
        %s503 = scalar_lea.vmem %s1, 8
        %v504 = vld [vmem:[%s503] sm:$0xf]
        %v505 = vld [vmem:[%s503 + $0x4] sm:$0xf]
        %v506 = vunpack.c.l.b16 %v404
        %v507 = vunpack.c.l.b16 %v418
        %v508 = vunpack.c.l.b16 %v432
        %v509 = vunpack.c.l.b16 %v446
        %v510 = vunpack.c.l.b16 %v460
        %v511 = vunpack.c.l.b16 %v474
        %v512 = vunpack.c.l.b16 %v488
        %v513 = vunpack.c.l.b16 %v502
        %v514 = vpack.c.b16 %v507, %v506
        %v515 = vpack.c.b16 %v509, %v508
        %v516 = vpack.c.b16 %v511, %v510
        %v517 = vpack.c.b16 %v513, %v512
        %v520 = vunpack.c.l.b16 %v504
        %v521 = vunpack.c.l.b16 %v505
        %v522 = vpack.c.b16 %v521, %v520
        %vm524 = vcmask 130048
        %v526 = vsel %vm524, %v514, 0
        %v529 = vsel %vm524, %v515, 0
        %v532 = vsel %vm524, %v516, 0
        %v535 = vsel %vm524, %v517, 0
        %537 = vmatprep.subr.bf16.mxu0 0
        %538 = vmatpush1.bf16.msra.mxu0 0
        %539 = vmatprep.subr.bf16.mxu0 0
        %540 = vmatpush1.bf16.msra.mxu0 0
        %541 = vmatprep.subr.bf16.mxu0 0
        %542 = vmatpush1.bf16.msra.mxu0 0
        %543 = vmatprep.subr.bf16.mxu0 0
        %544 = vmatpush1.bf16.msra.mxu0 0
        %545 = vmatprep.subr.bf16.mxu0 0
        %546 = vmatpush1.bf16.msra.mxu0 0
        %547 = vmatprep.subr.bf16.mxu0 0
        %548 = vmatpush1.bf16.msra.mxu0 0
        %549 = vmatprep.subr.bf16.mxu0 0
        %550 = vmatpush1.bf16.msra.mxu0 0
        %551 = vmatprep.subr.bf16.mxu0 0
        %552 = vmatpush1.bf16.msra.mxu0 %v522
        %553 = vmatprep.subr.bf16.mxu0 0
        %554 = vmatpush2.bf16.msra.mxu0 0
        %555 = vmatprep.subr.bf16.mxu0 0
        %556 = vmatpush2.bf16.msra.mxu0 0
        %557 = vmatprep.subr.bf16.mxu0 0
        %558 = vmatpush2.bf16.msra.mxu0 0
        %559 = vmatprep.subr.bf16.mxu0 0
        %560 = vmatpush2.bf16.msra.mxu0 0
        %561 = vmatprep.subr.bf16.mxu0 0
        %562 = vmatpush2.bf16.msra.mxu0 0
        %563 = vmatprep.subr.bf16.mxu0 0
        %564 = vmatpush2.bf16.msra.mxu0 0
        %565 = vmatprep.subr.bf16.mxu0 0
        %566 = vmatpush2.bf16.msra.mxu0 0
        %567 = vmatprep.subr.bf16.mxu0 0
        %568 = vmatpush2.bf16.msra.mxu0 0
        %569 = vmatprep.mubr.bf16.mxu0 0
        %570 = vmatmul.mubr.bf16.gmra.mxu0 %v526
        %v571 = vpop.f32.mrf.mxu0
        %v572 = vadd.f32 0.0, %v571
        %v573 = vpop.f32.mrf.mxu0
        %v574 = vpop.f32.mrf.mxu0
        %v575 = vadd.f32 0.0, %v574
        %v576 = vpop.f32.mrf.mxu0
        %577 = vmatprep.mubr.bf16.mxu0 0
        %578 = vmatmul.mubr.bf16.gmra.mxu0 %v529
        %v579 = vpop.f32.mrf.mxu0
        %v580 = vadd.f32 0.0, %v579
        %v581 = vpop.f32.mrf.mxu0
        %v582 = vpop.f32.mrf.mxu0
        %v583 = vadd.f32 0.0, %v582
        %v584 = vpop.f32.mrf.mxu0
        %585 = vmatprep.mubr.bf16.mxu0 0
        %586 = vmatmul.mubr.bf16.gmra.mxu0 %v532
        %v587 = vpop.f32.mrf.mxu0
        %v588 = vadd.f32 0.0, %v587
        %v589 = vpop.f32.mrf.mxu0
        %v590 = vpop.f32.mrf.mxu0
        %v591 = vadd.f32 0.0, %v590
        %v592 = vpop.f32.mrf.mxu0
        %593 = vmatprep.mubr.bf16.mxu0 0
        %594 = vmatmul.mubr.bf16.gmra.mxu0 %v535
        %v595 = vpop.f32.mrf.mxu0
        %v596 = vadd.f32 0.0, %v595
        %v597 = vpop.f32.mrf.mxu0
        %v598 = vpop.f32.mrf.mxu0
        %v599 = vadd.f32 0.0, %v598
        %v600 = vpop.f32.mrf.mxu0
        %601 = vdwg.mxu0
        %v610 = vunpack.c.l.b16 %v370
        %v611 = vunpack.c.l.b16 %v371
        %v612 = vunpack.c.l.b16 %v372
        %v613 = vunpack.c.l.b16 %v373
        %v614 = vunpack.c.l.b16 %v374
        %v615 = vunpack.c.l.b16 %v375
        %v616 = vunpack.c.l.b16 %v376
        %v617 = vunpack.c.l.b16 %v377
        %v618 = vpack.c.b16 %v611, %v610
        %v619 = vpack.c.b16 %v613, %v612
        %v620 = vpack.c.b16 %v615, %v614
        %v621 = vpack.c.b16 %v617, %v616
        %v624 = vunpack.c.l.b16 %v378
        %v625 = vunpack.c.l.b16 %v379
        %v626 = vpack.c.b16 %v625, %v624
        %v629 = vsel %vm524, %v618, 0
        %v632 = vsel %vm524, %v619, 0
        %v635 = vsel %vm524, %v620, 0
        %v638 = vsel %vm524, %v621, 0
        %640 = vmatprep.subr.bf16.mxu0 0
        %641 = vmatpush1.bf16.msra.mxu0 0
        %642 = vmatprep.subr.bf16.mxu0 0
        %643 = vmatpush1.bf16.msra.mxu0 0
        %644 = vmatprep.subr.bf16.mxu0 0
        %645 = vmatpush1.bf16.msra.mxu0 0
        %646 = vmatprep.subr.bf16.mxu0 0
        %647 = vmatpush1.bf16.msra.mxu0 0
        %648 = vmatprep.subr.bf16.mxu0 0
        %649 = vmatpush1.bf16.msra.mxu0 0
        %650 = vmatprep.subr.bf16.mxu0 0
        %651 = vmatpush1.bf16.msra.mxu0 0
        %652 = vmatprep.subr.bf16.mxu0 0
        %653 = vmatpush1.bf16.msra.mxu0 0
        %654 = vmatprep.subr.bf16.mxu0 0
        %655 = vmatpush1.bf16.msra.mxu0 %v626
        %656 = vmatprep.subr.bf16.mxu0 0
        %657 = vmatpush2.bf16.msra.mxu0 0
        %658 = vmatprep.subr.bf16.mxu0 0
        %659 = vmatpush2.bf16.msra.mxu0 0
        %660 = vmatprep.subr.bf16.mxu0 0
        %661 = vmatpush2.bf16.msra.mxu0 0
        %662 = vmatprep.subr.bf16.mxu0 0
        %663 = vmatpush2.bf16.msra.mxu0 0
        %664 = vmatprep.subr.bf16.mxu0 0
        %665 = vmatpush2.bf16.msra.mxu0 0
        %666 = vmatprep.subr.bf16.mxu0 0
        %667 = vmatpush2.bf16.msra.mxu0 0
        %668 = vmatprep.subr.bf16.mxu0 0
        %669 = vmatpush2.bf16.msra.mxu0 0
        %670 = vmatprep.subr.bf16.mxu0 0
        %671 = vmatpush2.bf16.msra.mxu0 0
        %672 = vmatprep.mubr.bf16.mxu0 0
        %673 = vmatmul.mubr.bf16.gmra.mxu0 %v629
        %v674 = vpop.f32.mrf.mxu0
        %v675 = vadd.f32 %v572, %v674
        %v676 = vpop.f32.mrf.mxu0
        %v677 = vpop.f32.mrf.mxu0
        %v678 = vadd.f32 %v575, %v677
        %v679 = vpop.f32.mrf.mxu0
        %680 = vmatprep.mubr.bf16.mxu0 0
        %681 = vmatmul.mubr.bf16.gmra.mxu0 %v632
        %v682 = vpop.f32.mrf.mxu0
        %v683 = vadd.f32 %v580, %v682
        %v684 = vpop.f32.mrf.mxu0
        %v685 = vpop.f32.mrf.mxu0
        %v686 = vadd.f32 %v583, %v685
        %v687 = vpop.f32.mrf.mxu0
        %688 = vmatprep.mubr.bf16.mxu0 0
        %689 = vmatmul.mubr.bf16.gmra.mxu0 %v635
        %v690 = vpop.f32.mrf.mxu0
        %v691 = vadd.f32 %v588, %v690
        %v692 = vpop.f32.mrf.mxu0
        %v693 = vpop.f32.mrf.mxu0
        %v694 = vadd.f32 %v591, %v693
        %v695 = vpop.f32.mrf.mxu0
        %696 = vmatprep.mubr.bf16.mxu0 0
        %697 = vmatmul.mubr.bf16.gmra.mxu0 %v638
        %v698 = vpop.f32.mrf.mxu0
        %v699 = vadd.f32 %v596, %v698
        %v700 = vpop.f32.mrf.mxu0
        %v701 = vpop.f32.mrf.mxu0
        %v702 = vadd.f32 %v599, %v701
        %v703 = vpop.f32.mrf.mxu0
        %704 = vdwg.mxu0
        %s705 = scalar_lea.vmem %s368, 8
        %v706 = vld [vmem:[%s705] sm:$0xf]
        %v707 = vld [vmem:[%s705 + $0x8] sm:$0xf]
        %v708 = vld [vmem:[%s705 + $0x10] sm:$0xf]
        %v709 = vld [vmem:[%s705 + $0x18] sm:$0xf]
        %v710 = vld [vmem:[%s705 + $0x20] sm:$0xf]
        %v711 = vld [vmem:[%s705 + $0x28] sm:$0xf]
        %v712 = vld [vmem:[%s705 + $0x30] sm:$0xf]
        %v713 = vld [vmem:[%s705 + $0x38] sm:$0xf]
        %s714 = scalar_lea.vmem %s1, 16
        %v715 = vld [vmem:[%s714] sm:$0xf]
        %v716 = vld [vmem:[%s714 + $0x4] sm:$0xf]
        %v725 = vunpack.c.l.b16 %v706
        %v726 = vunpack.c.l.b16 %v707
        %v727 = vunpack.c.l.b16 %v708
        %v728 = vunpack.c.l.b16 %v709
        %v729 = vunpack.c.l.b16 %v710
        %v730 = vunpack.c.l.b16 %v711
        %v731 = vunpack.c.l.b16 %v712
        %v732 = vunpack.c.l.b16 %v713
        %v733 = vpack.c.b16 %v726, %v725
        %v734 = vpack.c.b16 %v728, %v727
        %v735 = vpack.c.b16 %v730, %v729
        %v736 = vpack.c.b16 %v732, %v731
        %v739 = vunpack.c.l.b16 %v715
        %v740 = vunpack.c.l.b16 %v716
        %v741 = vpack.c.b16 %v740, %v739
        %v744 = vsel %vm524, %v733, 0
        %v747 = vsel %vm524, %v734, 0
        %v750 = vsel %vm524, %v735, 0
        %v753 = vsel %vm524, %v736, 0
        %755 = vmatprep.subr.bf16.mxu0 0
        %756 = vmatpush1.bf16.msra.mxu0 0
        %757 = vmatprep.subr.bf16.mxu0 0
        %758 = vmatpush1.bf16.msra.mxu0 0
        %759 = vmatprep.subr.bf16.mxu0 0
        %760 = vmatpush1.bf16.msra.mxu0 0
        %761 = vmatprep.subr.bf16.mxu0 0
        %762 = vmatpush1.bf16.msra.mxu0 0
        %763 = vmatprep.subr.bf16.mxu0 0
        %764 = vmatpush1.bf16.msra.mxu0 0
        %765 = vmatprep.subr.bf16.mxu0 0
        %766 = vmatpush1.bf16.msra.mxu0 0
        %767 = vmatprep.subr.bf16.mxu0 0
        %768 = vmatpush1.bf16.msra.mxu0 0
        %769 = vmatprep.subr.bf16.mxu0 0
        %770 = vmatpush1.bf16.msra.mxu0 %v741
        %771 = vmatprep.subr.bf16.mxu0 0
        %772 = vmatpush2.bf16.msra.mxu0 0
        %773 = vmatprep.subr.bf16.mxu0 0
        %774 = vmatpush2.bf16.msra.mxu0 0
        %775 = vmatprep.subr.bf16.mxu0 0
        %776 = vmatpush2.bf16.msra.mxu0 0
        %777 = vmatprep.subr.bf16.mxu0 0
        %778 = vmatpush2.bf16.msra.mxu0 0
        %779 = vmatprep.subr.bf16.mxu0 0
        %780 = vmatpush2.bf16.msra.mxu0 0
        %781 = vmatprep.subr.bf16.mxu0 0
        %782 = vmatpush2.bf16.msra.mxu0 0
        %783 = vmatprep.subr.bf16.mxu0 0
        %784 = vmatpush2.bf16.msra.mxu0 0
        %785 = vmatprep.subr.bf16.mxu0 0
        %786 = vmatpush2.bf16.msra.mxu0 0
        %787 = vmatprep.mubr.bf16.mxu0 0
        %788 = vmatmul.mubr.bf16.gmra.mxu0 %v744
        %v789 = vpop.f32.mrf.mxu0
        %v790 = vadd.f32 0.0, %v789
        %v791 = vpop.f32.mrf.mxu0
        %v792 = vpop.f32.mrf.mxu0
        %v793 = vadd.f32 0.0, %v792
        %v794 = vpop.f32.mrf.mxu0
        %795 = vmatprep.mubr.bf16.mxu0 0
        %796 = vmatmul.mubr.bf16.gmra.mxu0 %v747
        %v797 = vpop.f32.mrf.mxu0
        %v798 = vadd.f32 0.0, %v797
        %v799 = vpop.f32.mrf.mxu0
        %v800 = vpop.f32.mrf.mxu0
        %v801 = vadd.f32 0.0, %v800
        %v802 = vpop.f32.mrf.mxu0
        %803 = vmatprep.mubr.bf16.mxu0 0
        %804 = vmatmul.mubr.bf16.gmra.mxu0 %v750
        %v805 = vpop.f32.mrf.mxu0
        %v806 = vadd.f32 0.0, %v805
        %v807 = vpop.f32.mrf.mxu0
        %v808 = vpop.f32.mrf.mxu0
        %v809 = vadd.f32 0.0, %v808
        %v810 = vpop.f32.mrf.mxu0
        %811 = vmatprep.mubr.bf16.mxu0 0
        %812 = vmatmul.mubr.bf16.gmra.mxu0 %v753
        %v813 = vpop.f32.mrf.mxu0
        %v814 = vadd.f32 0.0, %v813
        %v815 = vpop.f32.mrf.mxu0
        %v816 = vpop.f32.mrf.mxu0
        %v817 = vadd.f32 0.0, %v816
        %v818 = vpop.f32.mrf.mxu0
        %819 = vdwg.mxu0
        %v820 = vadd.f32 %v675, %v790
        %v821 = vadd.f32 %v678, %v793
        %v822 = vadd.f32 %v683, %v798
        %v823 = vadd.f32 %v686, %v801
        %v824 = vadd.f32 %v691, %v806
        %v825 = vadd.f32 %v694, %v809
        %v826 = vadd.f32 %v699, %v814
        %v827 = vadd.f32 %v702, %v817
        %v828 = vld [vmem:[%s705] sm:$0xf]
        %v829 = vld [vmem:[%s705 + $0x4] sm:$0x1]
        %v830 = vld [vmem:[%s705 + $0x8] sm:$0xf]
        %v831 = vld [vmem:[%s705 + $0xc] sm:$0x1]
        %v832 = vld [vmem:[%s705 + $0x10] sm:$0xf]
        %v833 = vld [vmem:[%s705 + $0x14] sm:$0x1]
        %v834 = vld [vmem:[%s705 + $0x18] sm:$0xf]
        %v835 = vld [vmem:[%s705 + $0x1c] sm:$0x1]
        %v836 = vld [vmem:[%s705 + $0x20] sm:$0xf]
        %v837 = vld [vmem:[%s705 + $0x24] sm:$0x1]
        %v838 = vld [vmem:[%s705 + $0x28] sm:$0xf]
        %v839 = vld [vmem:[%s705 + $0x2c] sm:$0x1]
        %v840 = vld [vmem:[%s705 + $0x30] sm:$0xf]
        %v841 = vld [vmem:[%s705 + $0x34] sm:$0x1]
        %v842 = vld [vmem:[%s705 + $0x38] sm:$0xf]
        %v843 = vld [vmem:[%s705 + $0x3c] sm:$0x1]
        %v845 = vshrl.u32 %v828, 16
        %v847 = vrot.slane %v845, 4
        %v848 = vshll.u32 %v828, 16
        %v850 = vrot.slane %v848, 5
        %v851 = vor.u32 %v847, %v850
        %v852 = vrot.slane %v851, 4
        %v854 = vshll.u32 %v829, 16
        %v856 = vrot.slane %v854, 5
        %v857 = vsel %vm390, %v852, %v856
        %v859 = vshrl.u32 %v830, 16
        %v861 = vrot.slane %v859, 4
        %v862 = vshll.u32 %v830, 16
        %v864 = vrot.slane %v862, 5
        %v865 = vor.u32 %v861, %v864
        %v866 = vrot.slane %v865, 4
        %v868 = vshll.u32 %v831, 16
        %v870 = vrot.slane %v868, 5
        %v871 = vsel %vm390, %v866, %v870
        %v873 = vshrl.u32 %v832, 16
        %v875 = vrot.slane %v873, 4
        %v876 = vshll.u32 %v832, 16
        %v878 = vrot.slane %v876, 5
        %v879 = vor.u32 %v875, %v878
        %v880 = vrot.slane %v879, 4
        %v882 = vshll.u32 %v833, 16
        %v884 = vrot.slane %v882, 5
        %v885 = vsel %vm390, %v880, %v884
        %v887 = vshrl.u32 %v834, 16
        %v889 = vrot.slane %v887, 4
        %v890 = vshll.u32 %v834, 16
        %v892 = vrot.slane %v890, 5
        %v893 = vor.u32 %v889, %v892
        %v894 = vrot.slane %v893, 4
        %v896 = vshll.u32 %v835, 16
        %v898 = vrot.slane %v896, 5
        %v899 = vsel %vm390, %v894, %v898
        %v901 = vshrl.u32 %v836, 16
        %v903 = vrot.slane %v901, 4
        %v904 = vshll.u32 %v836, 16
        %v906 = vrot.slane %v904, 5
        %v907 = vor.u32 %v903, %v906
        %v908 = vrot.slane %v907, 4
        %v910 = vshll.u32 %v837, 16
        %v912 = vrot.slane %v910, 5
        %v913 = vsel %vm390, %v908, %v912
        %v915 = vshrl.u32 %v838, 16
        %v917 = vrot.slane %v915, 4
        %v918 = vshll.u32 %v838, 16
        %v920 = vrot.slane %v918, 5
        %v921 = vor.u32 %v917, %v920
        %v922 = vrot.slane %v921, 4
        %v924 = vshll.u32 %v839, 16
        %v926 = vrot.slane %v924, 5
        %v927 = vsel %vm390, %v922, %v926
        %v929 = vshrl.u32 %v840, 16
        %v931 = vrot.slane %v929, 4
        %v932 = vshll.u32 %v840, 16
        %v934 = vrot.slane %v932, 5
        %v935 = vor.u32 %v931, %v934
        %v936 = vrot.slane %v935, 4
        %v938 = vshll.u32 %v841, 16
        %v940 = vrot.slane %v938, 5
        %v941 = vsel %vm390, %v936, %v940
        %v943 = vshrl.u32 %v842, 16
        %v945 = vrot.slane %v943, 4
        %v946 = vshll.u32 %v842, 16
        %v948 = vrot.slane %v946, 5
        %v949 = vor.u32 %v945, %v948
        %v950 = vrot.slane %v949, 4
        %v952 = vshll.u32 %v843, 16
        %v954 = vrot.slane %v952, 5
        %v955 = vsel %vm390, %v950, %v954
        %s956 = scalar_lea.vmem %s1, 24
        %v957 = vld [vmem:[%s956] sm:$0xf]
        %v958 = vld [vmem:[%s956 + $0x4] sm:$0xf]
        %v959 = vunpack.c.l.b16 %v857
        %v960 = vunpack.c.l.b16 %v871
        %v961 = vunpack.c.l.b16 %v885
        %v962 = vunpack.c.l.b16 %v899
        %v963 = vunpack.c.l.b16 %v913
        %v964 = vunpack.c.l.b16 %v927
        %v965 = vunpack.c.l.b16 %v941
        %v966 = vunpack.c.l.b16 %v955
        %v967 = vpack.c.b16 %v960, %v959
        %v968 = vpack.c.b16 %v962, %v961
        %v969 = vpack.c.b16 %v964, %v963
        %v970 = vpack.c.b16 %v966, %v965
        %v973 = vunpack.c.l.b16 %v957
        %v974 = vunpack.c.l.b16 %v958
        %v975 = vpack.c.b16 %v974, %v973
        %v978 = vsel %vm524, %v967, 0
        %v981 = vsel %vm524, %v968, 0
        %v984 = vsel %vm524, %v969, 0
        %v987 = vsel %vm524, %v970, 0
        %989 = vmatprep.subr.bf16.mxu0 0
        %990 = vmatpush1.bf16.msra.mxu0 0
        %991 = vmatprep.subr.bf16.mxu0 0
        %992 = vmatpush1.bf16.msra.mxu0 0
        %993 = vmatprep.subr.bf16.mxu0 0
        %994 = vmatpush1.bf16.msra.mxu0 0
        %995 = vmatprep.subr.bf16.mxu0 0
        %996 = vmatpush1.bf16.msra.mxu0 0
        %997 = vmatprep.subr.bf16.mxu0 0
        %998 = vmatpush1.bf16.msra.mxu0 0
        %999 = vmatprep.subr.bf16.mxu0 0
        %1000 = vmatpush1.bf16.msra.mxu0 0
        %1001 = vmatprep.subr.bf16.mxu0 0
        %1002 = vmatpush1.bf16.msra.mxu0 0
        %1003 = vmatprep.subr.bf16.mxu0 0
        %1004 = vmatpush1.bf16.msra.mxu0 %v975
        %1005 = vmatprep.subr.bf16.mxu0 0
        %1006 = vmatpush2.bf16.msra.mxu0 0
        %1007 = vmatprep.subr.bf16.mxu0 0
        %1008 = vmatpush2.bf16.msra.mxu0 0
        %1009 = vmatprep.subr.bf16.mxu0 0
        %1010 = vmatpush2.bf16.msra.mxu0 0
        %1011 = vmatprep.subr.bf16.mxu0 0
        %1012 = vmatpush2.bf16.msra.mxu0 0
        %1013 = vmatprep.subr.bf16.mxu0 0
        %1014 = vmatpush2.bf16.msra.mxu0 0
        %1015 = vmatprep.subr.bf16.mxu0 0
        %1016 = vmatpush2.bf16.msra.mxu0 0
        %1017 = vmatprep.subr.bf16.mxu0 0
        %1018 = vmatpush2.bf16.msra.mxu0 0
        %1019 = vmatprep.subr.bf16.mxu0 0
        %1020 = vmatpush2.bf16.msra.mxu0 0
        %1021 = vmatprep.mubr.bf16.mxu0 0
        %1022 = vmatmul.mubr.bf16.gmra.mxu0 %v978
        %v1023 = vpop.f32.mrf.mxu0
        %v1024 = vadd.f32 0.0, %v1023
        %v1025 = vpop.f32.mrf.mxu0
        %v1026 = vpop.f32.mrf.mxu0
        %v1027 = vadd.f32 0.0, %v1026
        %v1028 = vpop.f32.mrf.mxu0
        %1029 = vmatprep.mubr.bf16.mxu0 0
        %1030 = vmatmul.mubr.bf16.gmra.mxu0 %v981
        %v1031 = vpop.f32.mrf.mxu0
        %v1032 = vadd.f32 0.0, %v1031
        %v1033 = vpop.f32.mrf.mxu0
        %v1034 = vpop.f32.mrf.mxu0
        %v1035 = vadd.f32 0.0, %v1034
        %v1036 = vpop.f32.mrf.mxu0
        %1037 = vmatprep.mubr.bf16.mxu0 0
        %1038 = vmatmul.mubr.bf16.gmra.mxu0 %v984
        %v1039 = vpop.f32.mrf.mxu0
        %v1040 = vadd.f32 0.0, %v1039
        %v1041 = vpop.f32.mrf.mxu0
        %v1042 = vpop.f32.mrf.mxu0
        %v1043 = vadd.f32 0.0, %v1042
        %v1044 = vpop.f32.mrf.mxu0
        %1045 = vmatprep.mubr.bf16.mxu0 0
        %1046 = vmatmul.mubr.bf16.gmra.mxu0 %v987
        %v1047 = vpop.f32.mrf.mxu0
        %v1048 = vadd.f32 0.0, %v1047
        %v1049 = vpop.f32.mrf.mxu0
        %v1050 = vpop.f32.mrf.mxu0
        %v1051 = vadd.f32 0.0, %v1050
        %v1052 = vpop.f32.mrf.mxu0
        %1053 = vdwg.mxu0
        %v1054 = vadd.f32 %v820, %v1024
        %v1055 = vadd.f32 %v821, %v1027
        %v1056 = vadd.f32 %v822, %v1032
        %v1057 = vadd.f32 %v823, %v1035
        %v1058 = vadd.f32 %v824, %v1040
        %v1059 = vadd.f32 %v825, %v1043
        %v1060 = vadd.f32 %v826, %v1048
        %v1061 = vadd.f32 %v827, %v1051
        %v1062 = vld [vmem:[%s2] sm:$0x1]
        %v1064 = vlaneseq
        %v1065 = vshrl.u32 %v1064, 7
        %v1066 = vsub.s32 0, %v1065
        %v1067 = vrot.slane %v1062, %v1066
        %v1069 = vadd.f32 %v1054, %v1067
        %v1070 = vadd.f32 %v1055, %v1067
        %v1071 = vadd.f32 %v1056, %v1067
        %v1072 = vadd.f32 %v1057, %v1067
        %v1073 = vadd.f32 %v1058, %v1067
        %v1074 = vadd.f32 %v1059, %v1067
        %v1075 = vadd.f32 %v1060, %v1067
        %v1076 = vadd.f32 %v1061, %v1067
        %v1077 = vmax.f32 %v1069, 0.0
        %v1078 = vmax.f32 %v1070, 0.0
        %v1079 = vmax.f32 %v1071, 0.0
        %v1080 = vmax.f32 %v1072, 0.0
        %v1081 = vmax.f32 %v1073, 0.0
        %v1082 = vmax.f32 %v1074, 0.0
        %v1083 = vmax.f32 %v1075, 0.0
        %v1084 = vmax.f32 %v1076, 0.0
        %vm1085 = vcmask 125952
        %1086 = vst.msk [vmem:[#allocation2] sm:$0xf] %vm1085, 0
        %vm1087 = vcmask 122880
        %1088 = vst.msk [vmem:[#allocation2 + $0x4] sm:$0x1] %vm1087, 0
        %1089 = vst.msk [vmem:[#allocation2 + $0x8] sm:$0xf] %vm1085, 0
        %1090 = vst.msk [vmem:[#allocation2 + $0xc] sm:$0x1] %vm1087, 0
        %1091 = vst.msk [vmem:[#allocation2 + $0x10] sm:$0xf] %vm1085, 0
        %1092 = vst.msk [vmem:[#allocation2 + $0x14] sm:$0x1] %vm1087, 0
        %1093 = vst.msk [vmem:[#allocation2 + $0x18] sm:$0xf] %vm1085, 0
        %1094 = vst.msk [vmem:[#allocation2 + $0x1c] sm:$0x1] %vm1087, 0
        %1095 = vst.msk [vmem:[#allocation2 + $0x20] sm:$0xf] %vm1085, 0
        %1096 = vst.msk [vmem:[#allocation2 + $0x24] sm:$0x1] %vm1087, 0
        %1097 = vst.msk [vmem:[#allocation2 + $0x28] sm:$0xf] %vm1085, 0
        %1098 = vst.msk [vmem:[#allocation2 + $0x2c] sm:$0x1] %vm1087, 0
        %1099 = vst.msk [vmem:[#allocation2 + $0x30] sm:$0xf] %vm1085, 0
        %1100 = vst.msk [vmem:[#allocation2 + $0x34] sm:$0x1] %vm1087, 0
        %1101 = vst.msk [vmem:[#allocation2 + $0x38] sm:$0xf] %vm1085, 0
        %1102 = vst.msk [vmem:[#allocation2 + $0x3c] sm:$0x1] %vm1087, 0
        %1103 = vst.msk [vmem:[#allocation2 + $0x40] sm:$0xf] %vm1085, 0
        %1104 = vst.msk [vmem:[#allocation2 + $0x44] sm:$0x1] %vm1087, 0
        %1105 = vst.msk [vmem:[#allocation2 + $0x48] sm:$0xf] %vm1085, 0
        %1106 = vst.msk [vmem:[#allocation2 + $0x4c] sm:$0x1] %vm1087, 0
        %v1107 = vpack.c.bf16 %v1077, %v1077
        %v1108 = vpack.c.bf16 %v1078, %v1078
        %v1109 = vpack.c.bf16 %v1079, %v1079
        %v1110 = vpack.c.bf16 %v1080, %v1080
        %v1111 = vpack.c.bf16 %v1081, %v1081
        %v1112 = vpack.c.bf16 %v1082, %v1082
        %v1113 = vpack.c.bf16 %v1083, %v1083
        %v1114 = vpack.c.bf16 %v1084, %v1084
        %v1123 = vunpack.c.l.b16 %v1107
        %v1124 = vunpack.c.l.b16 %v1108
        %v1125 = vunpack.c.l.b16 %v1109
        %v1126 = vunpack.c.l.b16 %v1110
        %v1127 = vunpack.c.l.b16 %v1111
        %v1128 = vunpack.c.l.b16 %v1112
        %v1129 = vunpack.c.l.b16 %v1113
        %v1130 = vunpack.c.l.b16 %v1114
        %v1131 = vpack.c.b16 %v1123, %v1123
        %v1132 = vpack.c.b16 %v1124, %v1124
        %v1133 = vpack.c.b16 %v1125, %v1125
        %v1134 = vpack.c.b16 %v1126, %v1126
        %v1135 = vpack.c.b16 %v1127, %v1127
        %v1136 = vpack.c.b16 %v1128, %v1128
        %v1137 = vpack.c.b16 %v1129, %v1129
        %v1138 = vpack.c.b16 %v1130, %v1130
        %v1140 = vshrl.u32 %v1131, 16
        %v1142 = vrot.slane %v1140, 7
        %v1143 = vshll.u32 %v1131, 16
        %v1145 = vor.u32 %v1142, %v1143
        %v1146 = vrot.slane %v1142, 4
        %v1148 = vshrl.u32 %v1132, 16
        %v1150 = vrot.slane %v1148, 7
        %v1151 = vshll.u32 %v1132, 16
        %v1153 = vor.u32 %v1150, %v1151
        %v1154 = vrot.slane %v1150, 4
        %v1156 = vshrl.u32 %v1133, 16
        %v1158 = vrot.slane %v1156, 7
        %v1159 = vshll.u32 %v1133, 16
        %v1161 = vor.u32 %v1158, %v1159
        %v1162 = vrot.slane %v1158, 4
        %v1164 = vshrl.u32 %v1134, 16
        %v1166 = vrot.slane %v1164, 7
        %v1167 = vshll.u32 %v1134, 16
        %v1169 = vor.u32 %v1166, %v1167
        %v1170 = vrot.slane %v1166, 4
        %v1172 = vshrl.u32 %v1135, 16
        %v1174 = vrot.slane %v1172, 7
        %v1175 = vshll.u32 %v1135, 16
        %v1177 = vor.u32 %v1174, %v1175
        %v1178 = vrot.slane %v1174, 4
        %v1180 = vshrl.u32 %v1136, 16
        %v1182 = vrot.slane %v1180, 7
        %v1183 = vshll.u32 %v1136, 16
        %v1185 = vor.u32 %v1182, %v1183
        %v1186 = vrot.slane %v1182, 4
        %v1188 = vshrl.u32 %v1137, 16
        %v1190 = vrot.slane %v1188, 7
        %v1191 = vshll.u32 %v1137, 16
        %v1193 = vor.u32 %v1190, %v1191
        %v1194 = vrot.slane %v1190, 4
        %v1196 = vshrl.u32 %v1138, 16
        %v1198 = vrot.slane %v1196, 7
        %v1199 = vshll.u32 %v1138, 16
        %v1201 = vor.u32 %v1198, %v1199
        %v1202 = vrot.slane %v1198, 4
        %s1219 = scalar_lea.vmem [#allocation2], 8
        %vm1220 = vcmask 125952
        %vm1221 = vsmask.f32 7938
        %vm1222 = vmand %vm1220, %vm1221
        %v1223 = vld [vmem:[%s1219] sm:$0xf]
        %v1224 = vsel %vm1222, %v1145, %v1223
        %1225 = vst [vmem:[%s1219] sm:$0xf] %v1224
        %vm1226 = vcmask 122880
        %vm1227 = vsmask.f32 256
        %vm1228 = vmand %vm1226, %vm1227
        %v1229 = vld [vmem:[%s1219 + $0x4] sm:$0x1]
        %v1230 = vsel %vm1228, %v1146, %v1229
        %1231 = vst [vmem:[%s1219 + $0x4] sm:$0x1] %v1230
        %v1232 = vld [vmem:[%s1219 + $0x8] sm:$0xf]
        %v1233 = vsel %vm1222, %v1153, %v1232
        %1234 = vst [vmem:[%s1219 + $0x8] sm:$0xf] %v1233
        %v1235 = vld [vmem:[%s1219 + $0xc] sm:$0x1]
        %v1236 = vsel %vm1228, %v1154, %v1235
        %1237 = vst [vmem:[%s1219 + $0xc] sm:$0x1] %v1236
        %v1238 = vld [vmem:[%s1219 + $0x10] sm:$0xf]
        %v1239 = vsel %vm1222, %v1161, %v1238
        %1240 = vst [vmem:[%s1219 + $0x10] sm:$0xf] %v1239
        %v1241 = vld [vmem:[%s1219 + $0x14] sm:$0x1]
        %v1242 = vsel %vm1228, %v1162, %v1241
        %1243 = vst [vmem:[%s1219 + $0x14] sm:$0x1] %v1242
        %v1244 = vld [vmem:[%s1219 + $0x18] sm:$0xf]
        %v1245 = vsel %vm1222, %v1169, %v1244
        %1246 = vst [vmem:[%s1219 + $0x18] sm:$0xf] %v1245
        %v1247 = vld [vmem:[%s1219 + $0x1c] sm:$0x1]
        %v1248 = vsel %vm1228, %v1170, %v1247
        %1249 = vst [vmem:[%s1219 + $0x1c] sm:$0x1] %v1248
        %v1250 = vld [vmem:[%s1219 + $0x20] sm:$0xf]
        %v1251 = vsel %vm1222, %v1177, %v1250
        %1252 = vst [vmem:[%s1219 + $0x20] sm:$0xf] %v1251
        %v1253 = vld [vmem:[%s1219 + $0x24] sm:$0x1]
        %v1254 = vsel %vm1228, %v1178, %v1253
        %1255 = vst [vmem:[%s1219 + $0x24] sm:$0x1] %v1254
        %v1256 = vld [vmem:[%s1219 + $0x28] sm:$0xf]
        %v1257 = vsel %vm1222, %v1185, %v1256
        %1258 = vst [vmem:[%s1219 + $0x28] sm:$0xf] %v1257
        %v1259 = vld [vmem:[%s1219 + $0x2c] sm:$0x1]
        %v1260 = vsel %vm1228, %v1186, %v1259
        %1261 = vst [vmem:[%s1219 + $0x2c] sm:$0x1] %v1260
        %v1262 = vld [vmem:[%s1219 + $0x30] sm:$0xf]
        %v1263 = vsel %vm1222, %v1193, %v1262
        %1264 = vst [vmem:[%s1219 + $0x30] sm:$0xf] %v1263
        %v1265 = vld [vmem:[%s1219 + $0x34] sm:$0x1]
        %v1266 = vsel %vm1228, %v1194, %v1265
        %1267 = vst [vmem:[%s1219 + $0x34] sm:$0x1] %v1266
        %v1268 = vld [vmem:[%s1219 + $0x38] sm:$0xf]
        %v1269 = vsel %vm1222, %v1201, %v1268
        %1270 = vst [vmem:[%s1219 + $0x38] sm:$0xf] %v1269
        %v1271 = vld [vmem:[%s1219 + $0x3c] sm:$0x1]
        %v1272 = vsel %vm1228, %v1202, %v1271
        %1273 = vst [vmem:[%s1219 + $0x3c] sm:$0x1] %v1272
        %v1274 = vld [vmem:[#allocation2] sm:$0xf]
        %v1275 = vld [vmem:[#allocation2 + $0x8] sm:$0xf]
        %v1276 = vld [vmem:[#allocation2 + $0x10] sm:$0xf]
        %v1277 = vld [vmem:[#allocation2 + $0x18] sm:$0xf]
        %v1278 = vld [vmem:[#allocation2 + $0x20] sm:$0xf]
        %v1279 = vld [vmem:[#allocation2 + $0x28] sm:$0xf]
        %v1280 = vld [vmem:[#allocation2 + $0x30] sm:$0xf]
        %v1281 = vld [vmem:[#allocation2 + $0x38] sm:$0xf]
        %v1282 = vld [vmem:[%s3] sm:$0xf]
        %v1283 = vld [vmem:[%s3 + $0x4] sm:$0xf]
        %v1284 = vld [vmem:[#allocation2 + $0x4] sm:$0x1]
        %v1285 = vld [vmem:[#allocation2 + $0xc] sm:$0x1]
        %v1286 = vld [vmem:[#allocation2 + $0x14] sm:$0x1]
        %v1287 = vld [vmem:[#allocation2 + $0x1c] sm:$0x1]
        %v1288 = vld [vmem:[#allocation2 + $0x24] sm:$0x1]
        %v1289 = vld [vmem:[#allocation2 + $0x2c] sm:$0x1]
        %v1290 = vld [vmem:[#allocation2 + $0x34] sm:$0x1]
        %v1291 = vld [vmem:[#allocation2 + $0x3c] sm:$0x1]
        %v1293 = vshrl.u32 %v1274, 16
        %v1295 = vrot.slane %v1293, 4
        %v1296 = vshll.u32 %v1274, 16
        %v1298 = vrot.slane %v1296, 5
        %v1299 = vor.u32 %v1295, %v1298
        %v1300 = vrot.slane %v1299, 4
        %v1302 = vshll.u32 %v1284, 16
        %v1304 = vrot.slane %v1302, 5
        %v1305 = vsel %vm390, %v1300, %v1304
        %v1307 = vshrl.u32 %v1275, 16
        %v1309 = vrot.slane %v1307, 4
        %v1310 = vshll.u32 %v1275, 16
        %v1312 = vrot.slane %v1310, 5
        %v1313 = vor.u32 %v1309, %v1312
        %v1314 = vrot.slane %v1313, 4
        %v1316 = vshll.u32 %v1285, 16
        %v1318 = vrot.slane %v1316, 5
        %v1319 = vsel %vm390, %v1314, %v1318
        %v1321 = vshrl.u32 %v1276, 16
        %v1323 = vrot.slane %v1321, 4
        %v1324 = vshll.u32 %v1276, 16
        %v1326 = vrot.slane %v1324, 5
        %v1327 = vor.u32 %v1323, %v1326
        %v1328 = vrot.slane %v1327, 4
        %v1330 = vshll.u32 %v1286, 16
        %v1332 = vrot.slane %v1330, 5
        %v1333 = vsel %vm390, %v1328, %v1332
        %v1335 = vshrl.u32 %v1277, 16
        %v1337 = vrot.slane %v1335, 4
        %v1338 = vshll.u32 %v1277, 16
        %v1340 = vrot.slane %v1338, 5
        %v1341 = vor.u32 %v1337, %v1340
        %v1342 = vrot.slane %v1341, 4
        %v1344 = vshll.u32 %v1287, 16
        %v1346 = vrot.slane %v1344, 5
        %v1347 = vsel %vm390, %v1342, %v1346
        %v1349 = vshrl.u32 %v1278, 16
        %v1351 = vrot.slane %v1349, 4
        %v1352 = vshll.u32 %v1278, 16
        %v1354 = vrot.slane %v1352, 5
        %v1355 = vor.u32 %v1351, %v1354
        %v1356 = vrot.slane %v1355, 4
        %v1358 = vshll.u32 %v1288, 16
        %v1360 = vrot.slane %v1358, 5
        %v1361 = vsel %vm390, %v1356, %v1360
        %v1363 = vshrl.u32 %v1279, 16
        %v1365 = vrot.slane %v1363, 4
        %v1366 = vshll.u32 %v1279, 16
        %v1368 = vrot.slane %v1366, 5
        %v1369 = vor.u32 %v1365, %v1368
        %v1370 = vrot.slane %v1369, 4
        %v1372 = vshll.u32 %v1289, 16
        %v1374 = vrot.slane %v1372, 5
        %v1375 = vsel %vm390, %v1370, %v1374
        %v1377 = vshrl.u32 %v1280, 16
        %v1379 = vrot.slane %v1377, 4
        %v1380 = vshll.u32 %v1280, 16
        %v1382 = vrot.slane %v1380, 5
        %v1383 = vor.u32 %v1379, %v1382
        %v1384 = vrot.slane %v1383, 4
        %v1386 = vshll.u32 %v1290, 16
        %v1388 = vrot.slane %v1386, 5
        %v1389 = vsel %vm390, %v1384, %v1388
        %v1391 = vshrl.u32 %v1281, 16
        %v1393 = vrot.slane %v1391, 4
        %v1394 = vshll.u32 %v1281, 16
        %v1396 = vrot.slane %v1394, 5
        %v1397 = vor.u32 %v1393, %v1396
        %v1398 = vrot.slane %v1397, 4
        %v1400 = vshll.u32 %v1291, 16
        %v1402 = vrot.slane %v1400, 5
        %v1403 = vsel %vm390, %v1398, %v1402
        %s1404 = scalar_lea.vmem %s3, 8
        %v1405 = vld [vmem:[%s1404] sm:$0xf]
        %v1406 = vld [vmem:[%s1404 + $0x4] sm:$0xf]
        %v1407 = vunpack.c.l.b16 %v1305
        %v1408 = vunpack.c.l.b16 %v1319
        %v1409 = vunpack.c.l.b16 %v1333
        %v1410 = vunpack.c.l.b16 %v1347
        %v1411 = vunpack.c.l.b16 %v1361
        %v1412 = vunpack.c.l.b16 %v1375
        %v1413 = vunpack.c.l.b16 %v1389
        %v1414 = vunpack.c.l.b16 %v1403
        %v1415 = vpack.c.b16 %v1408, %v1407
        %v1416 = vpack.c.b16 %v1410, %v1409
        %v1417 = vpack.c.b16 %v1412, %v1411
        %v1418 = vpack.c.b16 %v1414, %v1413
        %v1421 = vunpack.c.l.b16 %v1405
        %v1422 = vunpack.c.l.b16 %v1406
        %v1423 = vpack.c.b16 %v1422, %v1421
        %v1426 = vsel %vm524, %v1415, 0
        %v1429 = vsel %vm524, %v1416, 0
        %v1432 = vsel %vm524, %v1417, 0
        %v1435 = vsel %vm524, %v1418, 0
        %1437 = vmatprep.subr.bf16.mxu0 0
        %1438 = vmatpush1.bf16.msra.mxu0 0
        %1439 = vmatprep.subr.bf16.mxu0 0
        %1440 = vmatpush1.bf16.msra.mxu0 0
        %1441 = vmatprep.subr.bf16.mxu0 0
        %1442 = vmatpush1.bf16.msra.mxu0 0
        %1443 = vmatprep.subr.bf16.mxu0 0
        %1444 = vmatpush1.bf16.msra.mxu0 0
        %1445 = vmatprep.subr.bf16.mxu0 0
        %1446 = vmatpush1.bf16.msra.mxu0 0
        %1447 = vmatprep.subr.bf16.mxu0 0
        %1448 = vmatpush1.bf16.msra.mxu0 0
        %1449 = vmatprep.subr.bf16.mxu0 0
        %1450 = vmatpush1.bf16.msra.mxu0 0
        %1451 = vmatprep.subr.bf16.mxu0 0
        %1452 = vmatpush1.bf16.msra.mxu0 %v1423
        %1453 = vmatprep.subr.bf16.mxu0 0
        %1454 = vmatpush2.bf16.msra.mxu0 0
        %1455 = vmatprep.subr.bf16.mxu0 0
        %1456 = vmatpush2.bf16.msra.mxu0 0
        %1457 = vmatprep.subr.bf16.mxu0 0
        %1458 = vmatpush2.bf16.msra.mxu0 0
        %1459 = vmatprep.subr.bf16.mxu0 0
        %1460 = vmatpush2.bf16.msra.mxu0 0
        %1461 = vmatprep.subr.bf16.mxu0 0
        %1462 = vmatpush2.bf16.msra.mxu0 0
        %1463 = vmatprep.subr.bf16.mxu0 0
        %1464 = vmatpush2.bf16.msra.mxu0 0
        %1465 = vmatprep.subr.bf16.mxu0 0
        %1466 = vmatpush2.bf16.msra.mxu0 0
        %1467 = vmatprep.subr.bf16.mxu0 0
        %1468 = vmatpush2.bf16.msra.mxu0 0
        %1469 = vmatprep.mubr.bf16.mxu0 0
        %1470 = vmatmul.mubr.bf16.gmra.mxu0 %v1426
        %v1471 = vpop.f32.mrf.mxu0
        %v1472 = vadd.f32 0.0, %v1471
        %v1473 = vpop.f32.mrf.mxu0
        %v1474 = vpop.f32.mrf.mxu0
        %v1475 = vadd.f32 0.0, %v1474
        %v1476 = vpop.f32.mrf.mxu0
        %1477 = vmatprep.mubr.bf16.mxu0 0
        %1478 = vmatmul.mubr.bf16.gmra.mxu0 %v1429
        %v1479 = vpop.f32.mrf.mxu0
        %v1480 = vadd.f32 0.0, %v1479
        %v1481 = vpop.f32.mrf.mxu0
        %v1482 = vpop.f32.mrf.mxu0
        %v1483 = vadd.f32 0.0, %v1482
        %v1484 = vpop.f32.mrf.mxu0
        %1485 = vmatprep.mubr.bf16.mxu0 0
        %1486 = vmatmul.mubr.bf16.gmra.mxu0 %v1432
        %v1487 = vpop.f32.mrf.mxu0
        %v1488 = vadd.f32 0.0, %v1487
        %v1489 = vpop.f32.mrf.mxu0
        %v1490 = vpop.f32.mrf.mxu0
        %v1491 = vadd.f32 0.0, %v1490
        %v1492 = vpop.f32.mrf.mxu0
        %1493 = vmatprep.mubr.bf16.mxu0 0
        %1494 = vmatmul.mubr.bf16.gmra.mxu0 %v1435
        %v1495 = vpop.f32.mrf.mxu0
        %v1496 = vadd.f32 0.0, %v1495
        %v1497 = vpop.f32.mrf.mxu0
        %v1498 = vpop.f32.mrf.mxu0
        %v1499 = vadd.f32 0.0, %v1498
        %v1500 = vpop.f32.mrf.mxu0
        %1501 = vdwg.mxu0
        %v1510 = vunpack.c.l.b16 %v1274
        %v1511 = vunpack.c.l.b16 %v1275
        %v1512 = vunpack.c.l.b16 %v1276
        %v1513 = vunpack.c.l.b16 %v1277
        %v1514 = vunpack.c.l.b16 %v1278
        %v1515 = vunpack.c.l.b16 %v1279
        %v1516 = vunpack.c.l.b16 %v1280
        %v1517 = vunpack.c.l.b16 %v1281
        %v1518 = vpack.c.b16 %v1511, %v1510
        %v1519 = vpack.c.b16 %v1513, %v1512
        %v1520 = vpack.c.b16 %v1515, %v1514
        %v1521 = vpack.c.b16 %v1517, %v1516
        %v1524 = vunpack.c.l.b16 %v1282
        %v1525 = vunpack.c.l.b16 %v1283
        %v1526 = vpack.c.b16 %v1525, %v1524
        %v1529 = vsel %vm524, %v1518, 0
        %v1532 = vsel %vm524, %v1519, 0
        %v1535 = vsel %vm524, %v1520, 0
        %v1538 = vsel %vm524, %v1521, 0
        %1540 = vmatprep.subr.bf16.mxu0 0
        %1541 = vmatpush1.bf16.msra.mxu0 0
        %1542 = vmatprep.subr.bf16.mxu0 0
        %1543 = vmatpush1.bf16.msra.mxu0 0
        %1544 = vmatprep.subr.bf16.mxu0 0
        %1545 = vmatpush1.bf16.msra.mxu0 0
        %1546 = vmatprep.subr.bf16.mxu0 0
        %1547 = vmatpush1.bf16.msra.mxu0 0
        %1548 = vmatprep.subr.bf16.mxu0 0
        %1549 = vmatpush1.bf16.msra.mxu0 0
        %1550 = vmatprep.subr.bf16.mxu0 0
        %1551 = vmatpush1.bf16.msra.mxu0 0
        %1552 = vmatprep.subr.bf16.mxu0 0
        %1553 = vmatpush1.bf16.msra.mxu0 0
        %1554 = vmatprep.subr.bf16.mxu0 0
        %1555 = vmatpush1.bf16.msra.mxu0 %v1526
        %1556 = vmatprep.subr.bf16.mxu0 0
        %1557 = vmatpush2.bf16.msra.mxu0 0
        %1558 = vmatprep.subr.bf16.mxu0 0
        %1559 = vmatpush2.bf16.msra.mxu0 0
        %1560 = vmatprep.subr.bf16.mxu0 0
        %1561 = vmatpush2.bf16.msra.mxu0 0
        %1562 = vmatprep.subr.bf16.mxu0 0
        %1563 = vmatpush2.bf16.msra.mxu0 0
        %1564 = vmatprep.subr.bf16.mxu0 0
        %1565 = vmatpush2.bf16.msra.mxu0 0
        %1566 = vmatprep.subr.bf16.mxu0 0
        %1567 = vmatpush2.bf16.msra.mxu0 0
        %1568 = vmatprep.subr.bf16.mxu0 0
        %1569 = vmatpush2.bf16.msra.mxu0 0
        %1570 = vmatprep.subr.bf16.mxu0 0
        %1571 = vmatpush2.bf16.msra.mxu0 0
        %1572 = vmatprep.mubr.bf16.mxu0 0
        %1573 = vmatmul.mubr.bf16.gmra.mxu0 %v1529
        %v1574 = vpop.f32.mrf.mxu0
        %v1575 = vadd.f32 %v1472, %v1574
        %v1576 = vpop.f32.mrf.mxu0
        %v1577 = vpop.f32.mrf.mxu0
        %v1578 = vadd.f32 %v1475, %v1577
        %v1579 = vpop.f32.mrf.mxu0
        %1580 = vmatprep.mubr.bf16.mxu0 0
        %1581 = vmatmul.mubr.bf16.gmra.mxu0 %v1532
        %v1582 = vpop.f32.mrf.mxu0
        %v1583 = vadd.f32 %v1480, %v1582
        %v1584 = vpop.f32.mrf.mxu0
        %v1585 = vpop.f32.mrf.mxu0
        %v1586 = vadd.f32 %v1483, %v1585
        %v1587 = vpop.f32.mrf.mxu0
        %1588 = vmatprep.mubr.bf16.mxu0 0
        %1589 = vmatmul.mubr.bf16.gmra.mxu0 %v1535
        %v1590 = vpop.f32.mrf.mxu0
        %v1591 = vadd.f32 %v1488, %v1590
        %v1592 = vpop.f32.mrf.mxu0
        %v1593 = vpop.f32.mrf.mxu0
        %v1594 = vadd.f32 %v1491, %v1593
        %v1595 = vpop.f32.mrf.mxu0
        %1596 = vmatprep.mubr.bf16.mxu0 0
        %1597 = vmatmul.mubr.bf16.gmra.mxu0 %v1538
        %v1598 = vpop.f32.mrf.mxu0
        %v1599 = vadd.f32 %v1496, %v1598
        %v1600 = vpop.f32.mrf.mxu0
        %v1601 = vpop.f32.mrf.mxu0
        %v1602 = vadd.f32 %v1499, %v1601
        %v1603 = vpop.f32.mrf.mxu0
        %1604 = vdwg.mxu0
        %v1605 = vld [vmem:[#allocation2] sm:$0xe]
        %v1606 = vld [vmem:[#allocation2 + $0x8] sm:$0xe]
        %v1607 = vld [vmem:[#allocation2 + $0x10] sm:$0xe]
        %v1608 = vld [vmem:[#allocation2 + $0x18] sm:$0xe]
        %v1609 = vld [vmem:[#allocation2 + $0x20] sm:$0xe]
        %v1610 = vld [vmem:[#allocation2 + $0x28] sm:$0xe]
        %v1611 = vld [vmem:[#allocation2 + $0x30] sm:$0xe]
        %v1612 = vld [vmem:[#allocation2 + $0x38] sm:$0xe]
        %vm1629 = vcmask 1042432
        %vm1630 = vcmask 1046532
        %vm1631 = vmor %vm1629, %vm1630
        %v1632 = vrot.slane %v1605, 5
        %v1633 = vrot.slane %v1632, 4
        %v1634 = vrot.slane %v1284, 5
        %v1635 = vsel %vm1631, %v1633, %v1634
        %v1636 = vrot.slane %v1606, 5
        %v1637 = vrot.slane %v1636, 4
        %v1638 = vrot.slane %v1285, 5
        %v1639 = vsel %vm1631, %v1637, %v1638
        %v1640 = vrot.slane %v1607, 5
        %v1641 = vrot.slane %v1640, 4
        %v1642 = vrot.slane %v1286, 5
        %v1643 = vsel %vm1631, %v1641, %v1642
        %v1644 = vrot.slane %v1608, 5
        %v1645 = vrot.slane %v1644, 4
        %v1646 = vrot.slane %v1287, 5
        %v1647 = vsel %vm1631, %v1645, %v1646
        %v1648 = vrot.slane %v1609, 5
        %v1649 = vrot.slane %v1648, 4
        %v1650 = vrot.slane %v1288, 5
        %v1651 = vsel %vm1631, %v1649, %v1650
        %v1652 = vrot.slane %v1610, 5
        %v1653 = vrot.slane %v1652, 4
        %v1654 = vrot.slane %v1289, 5
        %v1655 = vsel %vm1631, %v1653, %v1654
        %v1656 = vrot.slane %v1611, 5
        %v1657 = vrot.slane %v1656, 4
        %v1658 = vrot.slane %v1290, 5
        %v1659 = vsel %vm1631, %v1657, %v1658
        %v1660 = vrot.slane %v1612, 5
        %v1661 = vrot.slane %v1660, 4
        %v1662 = vrot.slane %v1291, 5
        %v1663 = vsel %vm1631, %v1661, %v1662
        %s1664 = scalar_lea.vmem %s3, 16
        %v1665 = vld [vmem:[%s1664] sm:$0xf]
        %v1666 = vld [vmem:[%s1664 + $0x4] sm:$0xf]
        %v1667 = vunpack.c.l.b16 %v1635
        %v1668 = vunpack.c.l.b16 %v1639
        %v1669 = vunpack.c.l.b16 %v1643
        %v1670 = vunpack.c.l.b16 %v1647
        %v1671 = vunpack.c.l.b16 %v1651
        %v1672 = vunpack.c.l.b16 %v1655
        %v1673 = vunpack.c.l.b16 %v1659
        %v1674 = vunpack.c.l.b16 %v1663
        %v1675 = vpack.c.b16 %v1668, %v1667
        %v1676 = vpack.c.b16 %v1670, %v1669
        %v1677 = vpack.c.b16 %v1672, %v1671
        %v1678 = vpack.c.b16 %v1674, %v1673
        %v1681 = vunpack.c.l.b16 %v1665
        %v1682 = vunpack.c.l.b16 %v1666
        %v1683 = vpack.c.b16 %v1682, %v1681
        %v1686 = vsel %vm524, %v1675, 0
        %v1689 = vsel %vm524, %v1676, 0
        %v1692 = vsel %vm524, %v1677, 0
        %v1695 = vsel %vm524, %v1678, 0
        %1697 = vmatprep.subr.bf16.mxu0 0
        %1698 = vmatpush1.bf16.msra.mxu0 0
        %1699 = vmatprep.subr.bf16.mxu0 0
        %1700 = vmatpush1.bf16.msra.mxu0 0
        %1701 = vmatprep.subr.bf16.mxu0 0
        %1702 = vmatpush1.bf16.msra.mxu0 0
        %1703 = vmatprep.subr.bf16.mxu0 0
        %1704 = vmatpush1.bf16.msra.mxu0 0
        %1705 = vmatprep.subr.bf16.mxu0 0
        %1706 = vmatpush1.bf16.msra.mxu0 0
        %1707 = vmatprep.subr.bf16.mxu0 0
        %1708 = vmatpush1.bf16.msra.mxu0 0
        %1709 = vmatprep.subr.bf16.mxu0 0
        %1710 = vmatpush1.bf16.msra.mxu0 0
        %1711 = vmatprep.subr.bf16.mxu0 0
        %1712 = vmatpush1.bf16.msra.mxu0 %v1683
        %1713 = vmatprep.subr.bf16.mxu0 0
        %1714 = vmatpush2.bf16.msra.mxu0 0
        %1715 = vmatprep.subr.bf16.mxu0 0
        %1716 = vmatpush2.bf16.msra.mxu0 0
        %1717 = vmatprep.subr.bf16.mxu0 0
        %1718 = vmatpush2.bf16.msra.mxu0 0
        %1719 = vmatprep.subr.bf16.mxu0 0
        %1720 = vmatpush2.bf16.msra.mxu0 0
        %1721 = vmatprep.subr.bf16.mxu0 0
        %1722 = vmatpush2.bf16.msra.mxu0 0
        %1723 = vmatprep.subr.bf16.mxu0 0
        %1724 = vmatpush2.bf16.msra.mxu0 0
        %1725 = vmatprep.subr.bf16.mxu0 0
        %1726 = vmatpush2.bf16.msra.mxu0 0
        %1727 = vmatprep.subr.bf16.mxu0 0
        %1728 = vmatpush2.bf16.msra.mxu0 0
        %1729 = vmatprep.mubr.bf16.mxu0 0
        %1730 = vmatmul.mubr.bf16.gmra.mxu0 %v1686
        %v1731 = vpop.f32.mrf.mxu0
        %v1732 = vadd.f32 0.0, %v1731
        %v1733 = vpop.f32.mrf.mxu0
        %v1734 = vpop.f32.mrf.mxu0
        %v1735 = vadd.f32 0.0, %v1734
        %v1736 = vpop.f32.mrf.mxu0
        %1737 = vmatprep.mubr.bf16.mxu0 0
        %1738 = vmatmul.mubr.bf16.gmra.mxu0 %v1689
        %v1739 = vpop.f32.mrf.mxu0
        %v1740 = vadd.f32 0.0, %v1739
        %v1741 = vpop.f32.mrf.mxu0
        %v1742 = vpop.f32.mrf.mxu0
        %v1743 = vadd.f32 0.0, %v1742
        %v1744 = vpop.f32.mrf.mxu0
        %1745 = vmatprep.mubr.bf16.mxu0 0
        %1746 = vmatmul.mubr.bf16.gmra.mxu0 %v1692
        %v1747 = vpop.f32.mrf.mxu0
        %v1748 = vadd.f32 0.0, %v1747
        %v1749 = vpop.f32.mrf.mxu0
        %v1750 = vpop.f32.mrf.mxu0
        %v1751 = vadd.f32 0.0, %v1750
        %v1752 = vpop.f32.mrf.mxu0
        %1753 = vmatprep.mubr.bf16.mxu0 0
        %1754 = vmatmul.mubr.bf16.gmra.mxu0 %v1695
        %v1755 = vpop.f32.mrf.mxu0
        %v1756 = vadd.f32 0.0, %v1755
        %v1757 = vpop.f32.mrf.mxu0
        %v1758 = vpop.f32.mrf.mxu0
        %v1759 = vadd.f32 0.0, %v1758
        %v1760 = vpop.f32.mrf.mxu0
        %1761 = vdwg.mxu0
        %v1762 = vadd.f32 %v1575, %v1732
        %v1763 = vadd.f32 %v1578, %v1735
        %v1764 = vadd.f32 %v1583, %v1740
        %v1765 = vadd.f32 %v1586, %v1743
        %v1766 = vadd.f32 %v1591, %v1748
        %v1767 = vadd.f32 %v1594, %v1751
        %v1768 = vadd.f32 %v1599, %v1756
        %v1769 = vadd.f32 %v1602, %v1759
        %v1770 = vld [vmem:[%s1219] sm:$0xf]
        %v1771 = vld [vmem:[%s1219 + $0x8] sm:$0xf]
        %v1772 = vld [vmem:[%s1219 + $0x10] sm:$0xf]
        %v1773 = vld [vmem:[%s1219 + $0x18] sm:$0xf]
        %v1774 = vld [vmem:[%s1219 + $0x20] sm:$0xf]
        %v1775 = vld [vmem:[%s1219 + $0x28] sm:$0xf]
        %v1776 = vld [vmem:[%s1219 + $0x30] sm:$0xf]
        %v1777 = vld [vmem:[%s1219 + $0x38] sm:$0xf]
        %s1778 = scalar_lea.vmem %s3, 24
        %v1779 = vld [vmem:[%s1778] sm:$0xf]
        %v1780 = vld [vmem:[%s1778 + $0x4] sm:$0xf]
        %v1789 = vunpack.c.l.b16 %v1770
        %v1790 = vunpack.c.l.b16 %v1771
        %v1791 = vunpack.c.l.b16 %v1772
        %v1792 = vunpack.c.l.b16 %v1773
        %v1793 = vunpack.c.l.b16 %v1774
        %v1794 = vunpack.c.l.b16 %v1775
        %v1795 = vunpack.c.l.b16 %v1776
        %v1796 = vunpack.c.l.b16 %v1777
        %v1797 = vpack.c.b16 %v1790, %v1789
        %v1798 = vpack.c.b16 %v1792, %v1791
        %v1799 = vpack.c.b16 %v1794, %v1793
        %v1800 = vpack.c.b16 %v1796, %v1795
        %v1803 = vunpack.c.l.b16 %v1779
        %v1804 = vunpack.c.l.b16 %v1780
        %v1805 = vpack.c.b16 %v1804, %v1803
        %v1808 = vsel %vm524, %v1797, 0
        %v1811 = vsel %vm524, %v1798, 0
        %v1814 = vsel %vm524, %v1799, 0
        %v1817 = vsel %vm524, %v1800, 0
        %1819 = vmatprep.subr.bf16.mxu0 0
        %1820 = vmatpush1.bf16.msra.mxu0 0
        %1821 = vmatprep.subr.bf16.mxu0 0
        %1822 = vmatpush1.bf16.msra.mxu0 0
        %1823 = vmatprep.subr.bf16.mxu0 0
        %1824 = vmatpush1.bf16.msra.mxu0 0
        %1825 = vmatprep.subr.bf16.mxu0 0
        %1826 = vmatpush1.bf16.msra.mxu0 0
        %1827 = vmatprep.subr.bf16.mxu0 0
        %1828 = vmatpush1.bf16.msra.mxu0 0
        %1829 = vmatprep.subr.bf16.mxu0 0
        %1830 = vmatpush1.bf16.msra.mxu0 0
        %1831 = vmatprep.subr.bf16.mxu0 0
        %1832 = vmatpush1.bf16.msra.mxu0 0
        %1833 = vmatprep.subr.bf16.mxu0 0
        %1834 = vmatpush1.bf16.msra.mxu0 %v1805
        %1835 = vmatprep.subr.bf16.mxu0 0
        %1836 = vmatpush2.bf16.msra.mxu0 0
        %1837 = vmatprep.subr.bf16.mxu0 0
        %1838 = vmatpush2.bf16.msra.mxu0 0
        %1839 = vmatprep.subr.bf16.mxu0 0
        %1840 = vmatpush2.bf16.msra.mxu0 0
        %1841 = vmatprep.subr.bf16.mxu0 0
        %1842 = vmatpush2.bf16.msra.mxu0 0
        %1843 = vmatprep.subr.bf16.mxu0 0
        %1844 = vmatpush2.bf16.msra.mxu0 0
        %1845 = vmatprep.subr.bf16.mxu0 0
        %1846 = vmatpush2.bf16.msra.mxu0 0
        %1847 = vmatprep.subr.bf16.mxu0 0
        %1848 = vmatpush2.bf16.msra.mxu0 0
        %1849 = vmatprep.subr.bf16.mxu0 0
        %1850 = vmatpush2.bf16.msra.mxu0 0
        %1851 = vmatprep.mubr.bf16.mxu0 0
        %1852 = vmatmul.mubr.bf16.gmra.mxu0 %v1808
        %v1853 = vpop.f32.mrf.mxu0
        %v1854 = vadd.f32 0.0, %v1853
        %v1855 = vpop.f32.mrf.mxu0
        %v1856 = vpop.f32.mrf.mxu0
        %v1857 = vadd.f32 0.0, %v1856
        %v1858 = vpop.f32.mrf.mxu0
        %1859 = vmatprep.mubr.bf16.mxu0 0
        %1860 = vmatmul.mubr.bf16.gmra.mxu0 %v1811
        %v1861 = vpop.f32.mrf.mxu0
        %v1862 = vadd.f32 0.0, %v1861
        %v1863 = vpop.f32.mrf.mxu0
        %v1864 = vpop.f32.mrf.mxu0
        %v1865 = vadd.f32 0.0, %v1864
        %v1866 = vpop.f32.mrf.mxu0
        %1867 = vmatprep.mubr.bf16.mxu0 0
        %1868 = vmatmul.mubr.bf16.gmra.mxu0 %v1814
        %v1869 = vpop.f32.mrf.mxu0
        %v1870 = vadd.f32 0.0, %v1869
        %v1871 = vpop.f32.mrf.mxu0
        %v1872 = vpop.f32.mrf.mxu0
        %v1873 = vadd.f32 0.0, %v1872
        %v1874 = vpop.f32.mrf.mxu0
        %1875 = vmatprep.mubr.bf16.mxu0 0
        %1876 = vmatmul.mubr.bf16.gmra.mxu0 %v1817
        %v1877 = vpop.f32.mrf.mxu0
        %v1878 = vadd.f32 0.0, %v1877
        %v1879 = vpop.f32.mrf.mxu0
        %v1880 = vpop.f32.mrf.mxu0
        %v1881 = vadd.f32 0.0, %v1880
        %v1882 = vpop.f32.mrf.mxu0
        %1883 = vdwg.mxu0
        %v1884 = vadd.f32 %v1762, %v1854
        %v1885 = vadd.f32 %v1763, %v1857
        %v1886 = vadd.f32 %v1764, %v1862
        %v1887 = vadd.f32 %v1765, %v1865
        %v1888 = vadd.f32 %v1766, %v1870
        %v1889 = vadd.f32 %v1767, %v1873
        %v1890 = vadd.f32 %v1768, %v1878
        %v1891 = vadd.f32 %v1769, %v1881
        %v1892 = vld [vmem:[%s1219] sm:$0xf]
        %v1893 = vld [vmem:[%s1219 + $0x4] sm:$0x1]
        %v1894 = vld [vmem:[%s1219 + $0x8] sm:$0xf]
        %v1895 = vld [vmem:[%s1219 + $0xc] sm:$0x1]
        %v1896 = vld [vmem:[%s1219 + $0x10] sm:$0xf]
        %v1897 = vld [vmem:[%s1219 + $0x14] sm:$0x1]
        %v1898 = vld [vmem:[%s1219 + $0x18] sm:$0xf]
        %v1899 = vld [vmem:[%s1219 + $0x1c] sm:$0x1]
        %v1900 = vld [vmem:[%s1219 + $0x20] sm:$0xf]
        %v1901 = vld [vmem:[%s1219 + $0x24] sm:$0x1]
        %v1902 = vld [vmem:[%s1219 + $0x28] sm:$0xf]
        %v1903 = vld [vmem:[%s1219 + $0x2c] sm:$0x1]
        %v1904 = vld [vmem:[%s1219 + $0x30] sm:$0xf]
        %v1905 = vld [vmem:[%s1219 + $0x34] sm:$0x1]
        %v1906 = vld [vmem:[%s1219 + $0x38] sm:$0xf]
        %v1907 = vld [vmem:[%s1219 + $0x3c] sm:$0x1]
        %v1909 = vshrl.u32 %v1892, 16
        %v1911 = vrot.slane %v1909, 4
        %v1912 = vshll.u32 %v1892, 16
        %v1914 = vrot.slane %v1912, 5
        %v1915 = vor.u32 %v1911, %v1914
        %v1916 = vrot.slane %v1915, 4
        %v1918 = vshll.u32 %v1893, 16
        %v1920 = vrot.slane %v1918, 5
        %v1921 = vsel %vm390, %v1916, %v1920
        %v1923 = vshrl.u32 %v1894, 16
        %v1925 = vrot.slane %v1923, 4
        %v1926 = vshll.u32 %v1894, 16
        %v1928 = vrot.slane %v1926, 5
        %v1929 = vor.u32 %v1925, %v1928
        %v1930 = vrot.slane %v1929, 4
        %v1932 = vshll.u32 %v1895, 16
        %v1934 = vrot.slane %v1932, 5
        %v1935 = vsel %vm390, %v1930, %v1934
        %v1937 = vshrl.u32 %v1896, 16
        %v1939 = vrot.slane %v1937, 4
        %v1940 = vshll.u32 %v1896, 16
        %v1942 = vrot.slane %v1940, 5
        %v1943 = vor.u32 %v1939, %v1942
        %v1944 = vrot.slane %v1943, 4
        %v1946 = vshll.u32 %v1897, 16
        %v1948 = vrot.slane %v1946, 5
        %v1949 = vsel %vm390, %v1944, %v1948
        %v1951 = vshrl.u32 %v1898, 16
        %v1953 = vrot.slane %v1951, 4
        %v1954 = vshll.u32 %v1898, 16
        %v1956 = vrot.slane %v1954, 5
        %v1957 = vor.u32 %v1953, %v1956
        %v1958 = vrot.slane %v1957, 4
        %v1960 = vshll.u32 %v1899, 16
        %v1962 = vrot.slane %v1960, 5
        %v1963 = vsel %vm390, %v1958, %v1962
        %v1965 = vshrl.u32 %v1900, 16
        %v1967 = vrot.slane %v1965, 4
        %v1968 = vshll.u32 %v1900, 16
        %v1970 = vrot.slane %v1968, 5
        %v1971 = vor.u32 %v1967, %v1970
        %v1972 = vrot.slane %v1971, 4
        %v1974 = vshll.u32 %v1901, 16
        %v1976 = vrot.slane %v1974, 5
        %v1977 = vsel %vm390, %v1972, %v1976
        %v1979 = vshrl.u32 %v1902, 16
        %v1981 = vrot.slane %v1979, 4
        %v1982 = vshll.u32 %v1902, 16
        %v1984 = vrot.slane %v1982, 5
        %v1985 = vor.u32 %v1981, %v1984
        %v1986 = vrot.slane %v1985, 4
        %v1988 = vshll.u32 %v1903, 16
        %v1990 = vrot.slane %v1988, 5
        %v1991 = vsel %vm390, %v1986, %v1990
        %v1993 = vshrl.u32 %v1904, 16
        %v1995 = vrot.slane %v1993, 4
        %v1996 = vshll.u32 %v1904, 16
        %v1998 = vrot.slane %v1996, 5
        %v1999 = vor.u32 %v1995, %v1998
        %v2000 = vrot.slane %v1999, 4
        %v2002 = vshll.u32 %v1905, 16
        %v2004 = vrot.slane %v2002, 5
        %v2005 = vsel %vm390, %v2000, %v2004
        %v2007 = vshrl.u32 %v1906, 16
        %v2009 = vrot.slane %v2007, 4
        %v2010 = vshll.u32 %v1906, 16
        %v2012 = vrot.slane %v2010, 5
        %v2013 = vor.u32 %v2009, %v2012
        %v2014 = vrot.slane %v2013, 4
        %v2016 = vshll.u32 %v1907, 16
        %v2018 = vrot.slane %v2016, 5
        %v2019 = vsel %vm390, %v2014, %v2018
        %s2020 = scalar_lea.vmem %s3, 32
        %v2021 = vld [vmem:[%s2020] sm:$0xf]
        %v2022 = vld [vmem:[%s2020 + $0x4] sm:$0xf]
        %v2023 = vunpack.c.l.b16 %v1921
        %v2024 = vunpack.c.l.b16 %v1935
        %v2025 = vunpack.c.l.b16 %v1949
        %v2026 = vunpack.c.l.b16 %v1963
        %v2027 = vunpack.c.l.b16 %v1977
        %v2028 = vunpack.c.l.b16 %v1991
        %v2029 = vunpack.c.l.b16 %v2005
        %v2030 = vunpack.c.l.b16 %v2019
        %v2031 = vpack.c.b16 %v2024, %v2023
        %v2032 = vpack.c.b16 %v2026, %v2025
        %v2033 = vpack.c.b16 %v2028, %v2027
        %v2034 = vpack.c.b16 %v2030, %v2029
        %v2037 = vunpack.c.l.b16 %v2021
        %v2038 = vunpack.c.l.b16 %v2022
        %v2039 = vpack.c.b16 %v2038, %v2037
        %v2042 = vsel %vm524, %v2031, 0
        %v2045 = vsel %vm524, %v2032, 0
        %v2048 = vsel %vm524, %v2033, 0
        %v2051 = vsel %vm524, %v2034, 0
        %2053 = vmatprep.subr.bf16.mxu0 0
        %2054 = vmatpush1.bf16.msra.mxu0 0
        %2055 = vmatprep.subr.bf16.mxu0 0
        %2056 = vmatpush1.bf16.msra.mxu0 0
        %2057 = vmatprep.subr.bf16.mxu0 0
        %2058 = vmatpush1.bf16.msra.mxu0 0
        %2059 = vmatprep.subr.bf16.mxu0 0
        %2060 = vmatpush1.bf16.msra.mxu0 0
        %2061 = vmatprep.subr.bf16.mxu0 0
        %2062 = vmatpush1.bf16.msra.mxu0 0
        %2063 = vmatprep.subr.bf16.mxu0 0
        %2064 = vmatpush1.bf16.msra.mxu0 0
        %2065 = vmatprep.subr.bf16.mxu0 0
        %2066 = vmatpush1.bf16.msra.mxu0 0
        %2067 = vmatprep.subr.bf16.mxu0 0
        %2068 = vmatpush1.bf16.msra.mxu0 %v2039
        %2069 = vmatprep.subr.bf16.mxu0 0
        %2070 = vmatpush2.bf16.msra.mxu0 0
        %2071 = vmatprep.subr.bf16.mxu0 0
        %2072 = vmatpush2.bf16.msra.mxu0 0
        %2073 = vmatprep.subr.bf16.mxu0 0
        %2074 = vmatpush2.bf16.msra.mxu0 0
        %2075 = vmatprep.subr.bf16.mxu0 0
        %2076 = vmatpush2.bf16.msra.mxu0 0
        %2077 = vmatprep.subr.bf16.mxu0 0
        %2078 = vmatpush2.bf16.msra.mxu0 0
        %2079 = vmatprep.subr.bf16.mxu0 0
        %2080 = vmatpush2.bf16.msra.mxu0 0
        %2081 = vmatprep.subr.bf16.mxu0 0
        %2082 = vmatpush2.bf16.msra.mxu0 0
        %2083 = vmatprep.subr.bf16.mxu0 0
        %2084 = vmatpush2.bf16.msra.mxu0 0
        %2085 = vmatprep.mubr.bf16.mxu0 0
        %2086 = vmatmul.mubr.bf16.gmra.mxu0 %v2042
        %v2087 = vpop.f32.mrf.mxu0
        %v2088 = vadd.f32 0.0, %v2087
        %v2089 = vpop.f32.mrf.mxu0
        %v2090 = vpop.f32.mrf.mxu0
        %v2091 = vadd.f32 0.0, %v2090
        %v2092 = vpop.f32.mrf.mxu0
        %2093 = vmatprep.mubr.bf16.mxu0 0
        %2094 = vmatmul.mubr.bf16.gmra.mxu0 %v2045
        %v2095 = vpop.f32.mrf.mxu0
        %v2096 = vadd.f32 0.0, %v2095
        %v2097 = vpop.f32.mrf.mxu0
        %v2098 = vpop.f32.mrf.mxu0
        %v2099 = vadd.f32 0.0, %v2098
        %v2100 = vpop.f32.mrf.mxu0
        %2101 = vmatprep.mubr.bf16.mxu0 0
        %2102 = vmatmul.mubr.bf16.gmra.mxu0 %v2048
        %v2103 = vpop.f32.mrf.mxu0
        %v2104 = vadd.f32 0.0, %v2103
        %v2105 = vpop.f32.mrf.mxu0
        %v2106 = vpop.f32.mrf.mxu0
        %v2107 = vadd.f32 0.0, %v2106
        %v2108 = vpop.f32.mrf.mxu0
        %2109 = vmatprep.mubr.bf16.mxu0 0
        %2110 = vmatmul.mubr.bf16.gmra.mxu0 %v2051
        %v2111 = vpop.f32.mrf.mxu0
        %v2112 = vadd.f32 0.0, %v2111
        %v2113 = vpop.f32.mrf.mxu0
        %v2114 = vpop.f32.mrf.mxu0
        %v2115 = vadd.f32 0.0, %v2114
        %v2116 = vpop.f32.mrf.mxu0
        %2117 = vdwg.mxu0
        %v2118 = vadd.f32 %v1884, %v2088
        %v2119 = vadd.f32 %v1885, %v2091
        %v2120 = vadd.f32 %v1886, %v2096
        %v2121 = vadd.f32 %v1887, %v2099
        %v2122 = vadd.f32 %v1888, %v2104
        %v2123 = vadd.f32 %v1889, %v2107
        %v2124 = vadd.f32 %v1890, %v2112
        %v2125 = vadd.f32 %v1891, %v2115
        %v2126 = vld [vmem:[%s1219] sm:$0xe]
        %v2127 = vld [vmem:[%s1219 + $0x8] sm:$0xe]
        %v2128 = vld [vmem:[%s1219 + $0x10] sm:$0xe]
        %v2129 = vld [vmem:[%s1219 + $0x18] sm:$0xe]
        %v2130 = vld [vmem:[%s1219 + $0x20] sm:$0xe]
        %v2131 = vld [vmem:[%s1219 + $0x28] sm:$0xe]
        %v2132 = vld [vmem:[%s1219 + $0x30] sm:$0xe]
        %v2133 = vld [vmem:[%s1219 + $0x38] sm:$0xe]
        %v2150 = vrot.slane %v2126, 5
        %v2151 = vrot.slane %v2150, 4
        %v2152 = vrot.slane %v1893, 5
        %v2153 = vsel %vm1631, %v2151, %v2152
        %v2154 = vrot.slane %v2127, 5
        %v2155 = vrot.slane %v2154, 4
        %v2156 = vrot.slane %v1895, 5
        %v2157 = vsel %vm1631, %v2155, %v2156
        %v2158 = vrot.slane %v2128, 5
        %v2159 = vrot.slane %v2158, 4
        %v2160 = vrot.slane %v1897, 5
        %v2161 = vsel %vm1631, %v2159, %v2160
        %v2162 = vrot.slane %v2129, 5
        %v2163 = vrot.slane %v2162, 4
        %v2164 = vrot.slane %v1899, 5
        %v2165 = vsel %vm1631, %v2163, %v2164
        %v2166 = vrot.slane %v2130, 5
        %v2167 = vrot.slane %v2166, 4
        %v2168 = vrot.slane %v1901, 5
        %v2169 = vsel %vm1631, %v2167, %v2168
        %v2170 = vrot.slane %v2131, 5
        %v2171 = vrot.slane %v2170, 4
        %v2172 = vrot.slane %v1903, 5
        %v2173 = vsel %vm1631, %v2171, %v2172
        %v2174 = vrot.slane %v2132, 5
        %v2175 = vrot.slane %v2174, 4
        %v2176 = vrot.slane %v1905, 5
        %v2177 = vsel %vm1631, %v2175, %v2176
        %v2178 = vrot.slane %v2133, 5
        %v2179 = vrot.slane %v2178, 4
        %v2180 = vrot.slane %v1907, 5
        %v2181 = vsel %vm1631, %v2179, %v2180
        %s2182 = scalar_lea.vmem %s3, 40
        %v2183 = vld [vmem:[%s2182] sm:$0xf]
        %v2184 = vld [vmem:[%s2182 + $0x4] sm:$0xf]
        %v2185 = vunpack.c.l.b16 %v2153
        %v2186 = vunpack.c.l.b16 %v2157
        %v2187 = vunpack.c.l.b16 %v2161
        %v2188 = vunpack.c.l.b16 %v2165
        %v2189 = vunpack.c.l.b16 %v2169
        %v2190 = vunpack.c.l.b16 %v2173
        %v2191 = vunpack.c.l.b16 %v2177
        %v2192 = vunpack.c.l.b16 %v2181
        %v2193 = vpack.c.b16 %v2186, %v2185
        %v2194 = vpack.c.b16 %v2188, %v2187
        %v2195 = vpack.c.b16 %v2190, %v2189
        %v2196 = vpack.c.b16 %v2192, %v2191
        %v2199 = vunpack.c.l.b16 %v2183
        %v2200 = vunpack.c.l.b16 %v2184
        %v2201 = vpack.c.b16 %v2200, %v2199
        %v2204 = vsel %vm524, %v2193, 0
        %v2207 = vsel %vm524, %v2194, 0
        %v2210 = vsel %vm524, %v2195, 0
        %v2213 = vsel %vm524, %v2196, 0
        %2215 = vmatprep.subr.bf16.mxu0 0
        %2216 = vmatpush1.bf16.msra.mxu0 0
        %2217 = vmatprep.subr.bf16.mxu0 0
        %2218 = vmatpush1.bf16.msra.mxu0 0
        %2219 = vmatprep.subr.bf16.mxu0 0
        %2220 = vmatpush1.bf16.msra.mxu0 0
        %2221 = vmatprep.subr.bf16.mxu0 0
        %2222 = vmatpush1.bf16.msra.mxu0 0
        %2223 = vmatprep.subr.bf16.mxu0 0
        %2224 = vmatpush1.bf16.msra.mxu0 0
        %2225 = vmatprep.subr.bf16.mxu0 0
        %2226 = vmatpush1.bf16.msra.mxu0 0
        %2227 = vmatprep.subr.bf16.mxu0 0
        %2228 = vmatpush1.bf16.msra.mxu0 0
        %2229 = vmatprep.subr.bf16.mxu0 0
        %2230 = vmatpush1.bf16.msra.mxu0 %v2201
        %2231 = vmatprep.subr.bf16.mxu0 0
        %2232 = vmatpush2.bf16.msra.mxu0 0
        %2233 = vmatprep.subr.bf16.mxu0 0
        %2234 = vmatpush2.bf16.msra.mxu0 0
        %2235 = vmatprep.subr.bf16.mxu0 0
        %2236 = vmatpush2.bf16.msra.mxu0 0
        %2237 = vmatprep.subr.bf16.mxu0 0
        %2238 = vmatpush2.bf16.msra.mxu0 0
        %2239 = vmatprep.subr.bf16.mxu0 0
        %2240 = vmatpush2.bf16.msra.mxu0 0
        %2241 = vmatprep.subr.bf16.mxu0 0
        %2242 = vmatpush2.bf16.msra.mxu0 0
        %2243 = vmatprep.subr.bf16.mxu0 0
        %2244 = vmatpush2.bf16.msra.mxu0 0
        %2245 = vmatprep.subr.bf16.mxu0 0
        %2246 = vmatpush2.bf16.msra.mxu0 0
        %2247 = vmatprep.mubr.bf16.mxu0 0
        %2248 = vmatmul.mubr.bf16.gmra.mxu0 %v2204
        %v2249 = vpop.f32.mrf.mxu0
        %v2250 = vadd.f32 0.0, %v2249
        %v2251 = vpop.f32.mrf.mxu0
        %v2252 = vpop.f32.mrf.mxu0
        %v2253 = vadd.f32 0.0, %v2252
        %v2254 = vpop.f32.mrf.mxu0
        %2255 = vmatprep.mubr.bf16.mxu0 0
        %2256 = vmatmul.mubr.bf16.gmra.mxu0 %v2207
        %v2257 = vpop.f32.mrf.mxu0
        %v2258 = vadd.f32 0.0, %v2257
        %v2259 = vpop.f32.mrf.mxu0
        %v2260 = vpop.f32.mrf.mxu0
        %v2261 = vadd.f32 0.0, %v2260
        %v2262 = vpop.f32.mrf.mxu0
        %2263 = vmatprep.mubr.bf16.mxu0 0
        %2264 = vmatmul.mubr.bf16.gmra.mxu0 %v2210
        %v2265 = vpop.f32.mrf.mxu0
        %v2266 = vadd.f32 0.0, %v2265
        %v2267 = vpop.f32.mrf.mxu0
        %v2268 = vpop.f32.mrf.mxu0
        %v2269 = vadd.f32 0.0, %v2268
        %v2270 = vpop.f32.mrf.mxu0
        %2271 = vmatprep.mubr.bf16.mxu0 0
        %2272 = vmatmul.mubr.bf16.gmra.mxu0 %v2213
        %v2273 = vpop.f32.mrf.mxu0
        %v2274 = vadd.f32 0.0, %v2273
        %v2275 = vpop.f32.mrf.mxu0
        %v2276 = vpop.f32.mrf.mxu0
        %v2277 = vadd.f32 0.0, %v2276
        %v2278 = vpop.f32.mrf.mxu0
        %2279 = vdwg.mxu0
        %v2280 = vadd.f32 %v2118, %v2250
        %v2281 = vadd.f32 %v2119, %v2253
        %v2282 = vadd.f32 %v2120, %v2258
        %v2283 = vadd.f32 %v2121, %v2261
        %v2284 = vadd.f32 %v2122, %v2266
        %v2285 = vadd.f32 %v2123, %v2269
        %v2286 = vadd.f32 %v2124, %v2274
        %v2287 = vadd.f32 %v2125, %v2277
        %s2288 = scalar_lea.vmem [#allocation2], 16
        %v2289 = vld [vmem:[%s2288] sm:$0xf]
        %v2290 = vld [vmem:[%s2288 + $0x8] sm:$0xf]
        %v2291 = vld [vmem:[%s2288 + $0x10] sm:$0xf]
        %v2292 = vld [vmem:[%s2288 + $0x18] sm:$0xf]
        %v2293 = vld [vmem:[%s2288 + $0x20] sm:$0xf]
        %v2294 = vld [vmem:[%s2288 + $0x28] sm:$0xf]
        %v2295 = vld [vmem:[%s2288 + $0x30] sm:$0xf]
        %v2296 = vld [vmem:[%s2288 + $0x38] sm:$0xf]
        %s2297 = scalar_lea.vmem %s3, 48
        %v2298 = vld [vmem:[%s2297] sm:$0xf]
        %v2299 = vld [vmem:[%s2297 + $0x4] sm:$0xf]
        %v2308 = vunpack.c.l.b16 %v2289
        %v2309 = vunpack.c.l.b16 %v2290
        %v2310 = vunpack.c.l.b16 %v2291
        %v2311 = vunpack.c.l.b16 %v2292
        %v2312 = vunpack.c.l.b16 %v2293
        %v2313 = vunpack.c.l.b16 %v2294
        %v2314 = vunpack.c.l.b16 %v2295
        %v2315 = vunpack.c.l.b16 %v2296
        %v2316 = vpack.c.b16 %v2309, %v2308
        %v2317 = vpack.c.b16 %v2311, %v2310
        %v2318 = vpack.c.b16 %v2313, %v2312
        %v2319 = vpack.c.b16 %v2315, %v2314
        %v2322 = vunpack.c.l.b16 %v2298
        %v2323 = vunpack.c.l.b16 %v2299
        %v2324 = vpack.c.b16 %v2323, %v2322
        %v2327 = vsel %vm524, %v2316, 0
        %v2330 = vsel %vm524, %v2317, 0
        %v2333 = vsel %vm524, %v2318, 0
        %v2336 = vsel %vm524, %v2319, 0
        %2338 = vmatprep.subr.bf16.mxu0 0
        %2339 = vmatpush1.bf16.msra.mxu0 0
        %2340 = vmatprep.subr.bf16.mxu0 0
        %2341 = vmatpush1.bf16.msra.mxu0 0
        %2342 = vmatprep.subr.bf16.mxu0 0
        %2343 = vmatpush1.bf16.msra.mxu0 0
        %2344 = vmatprep.subr.bf16.mxu0 0
        %2345 = vmatpush1.bf16.msra.mxu0 0
        %2346 = vmatprep.subr.bf16.mxu0 0
        %2347 = vmatpush1.bf16.msra.mxu0 0
        %2348 = vmatprep.subr.bf16.mxu0 0
        %2349 = vmatpush1.bf16.msra.mxu0 0
        %2350 = vmatprep.subr.bf16.mxu0 0
        %2351 = vmatpush1.bf16.msra.mxu0 0
        %2352 = vmatprep.subr.bf16.mxu0 0
        %2353 = vmatpush1.bf16.msra.mxu0 %v2324
        %2354 = vmatprep.subr.bf16.mxu0 0
        %2355 = vmatpush2.bf16.msra.mxu0 0
        %2356 = vmatprep.subr.bf16.mxu0 0
        %2357 = vmatpush2.bf16.msra.mxu0 0
        %2358 = vmatprep.subr.bf16.mxu0 0
        %2359 = vmatpush2.bf16.msra.mxu0 0
        %2360 = vmatprep.subr.bf16.mxu0 0
        %2361 = vmatpush2.bf16.msra.mxu0 0
        %2362 = vmatprep.subr.bf16.mxu0 0
        %2363 = vmatpush2.bf16.msra.mxu0 0
        %2364 = vmatprep.subr.bf16.mxu0 0
        %2365 = vmatpush2.bf16.msra.mxu0 0
        %2366 = vmatprep.subr.bf16.mxu0 0
        %2367 = vmatpush2.bf16.msra.mxu0 0
        %2368 = vmatprep.subr.bf16.mxu0 0
        %2369 = vmatpush2.bf16.msra.mxu0 0
        %2370 = vmatprep.mubr.bf16.mxu0 0
        %2371 = vmatmul.mubr.bf16.gmra.mxu0 %v2327
        %v2372 = vpop.f32.mrf.mxu0
        %v2373 = vadd.f32 0.0, %v2372
        %v2374 = vpop.f32.mrf.mxu0
        %v2375 = vpop.f32.mrf.mxu0
        %v2376 = vadd.f32 0.0, %v2375
        %v2377 = vpop.f32.mrf.mxu0
        %2378 = vmatprep.mubr.bf16.mxu0 0
        %2379 = vmatmul.mubr.bf16.gmra.mxu0 %v2330
        %v2380 = vpop.f32.mrf.mxu0
        %v2381 = vadd.f32 0.0, %v2380
        %v2382 = vpop.f32.mrf.mxu0
        %v2383 = vpop.f32.mrf.mxu0
        %v2384 = vadd.f32 0.0, %v2383
        %v2385 = vpop.f32.mrf.mxu0
        %2386 = vmatprep.mubr.bf16.mxu0 0
        %2387 = vmatmul.mubr.bf16.gmra.mxu0 %v2333
        %v2388 = vpop.f32.mrf.mxu0
        %v2389 = vadd.f32 0.0, %v2388
        %v2390 = vpop.f32.mrf.mxu0
        %v2391 = vpop.f32.mrf.mxu0
        %v2392 = vadd.f32 0.0, %v2391
        %v2393 = vpop.f32.mrf.mxu0
        %2394 = vmatprep.mubr.bf16.mxu0 0
        %2395 = vmatmul.mubr.bf16.gmra.mxu0 %v2336
        %v2396 = vpop.f32.mrf.mxu0
        %v2397 = vadd.f32 0.0, %v2396
        %v2398 = vpop.f32.mrf.mxu0
        %v2399 = vpop.f32.mrf.mxu0
        %v2400 = vadd.f32 0.0, %v2399
        %v2401 = vpop.f32.mrf.mxu0
        %2402 = vdwg.mxu0
        %v2403 = vadd.f32 %v2280, %v2373
        %v2404 = vadd.f32 %v2281, %v2376
        %v2405 = vadd.f32 %v2282, %v2381
        %v2406 = vadd.f32 %v2283, %v2384
        %v2407 = vadd.f32 %v2284, %v2389
        %v2408 = vadd.f32 %v2285, %v2392
        %v2409 = vadd.f32 %v2286, %v2397
        %v2410 = vadd.f32 %v2287, %v2400
        %v2411 = vld [vmem:[%s2288] sm:$0xf]
        %v2412 = vld [vmem:[%s2288 + $0x4] sm:$0x1]
        %v2413 = vld [vmem:[%s2288 + $0x8] sm:$0xf]
        %v2414 = vld [vmem:[%s2288 + $0xc] sm:$0x1]
        %v2415 = vld [vmem:[%s2288 + $0x10] sm:$0xf]
        %v2416 = vld [vmem:[%s2288 + $0x14] sm:$0x1]
        %v2417 = vld [vmem:[%s2288 + $0x18] sm:$0xf]
        %v2418 = vld [vmem:[%s2288 + $0x1c] sm:$0x1]
        %v2419 = vld [vmem:[%s2288 + $0x20] sm:$0xf]
        %v2420 = vld [vmem:[%s2288 + $0x24] sm:$0x1]
        %v2421 = vld [vmem:[%s2288 + $0x28] sm:$0xf]
        %v2422 = vld [vmem:[%s2288 + $0x2c] sm:$0x1]
        %v2423 = vld [vmem:[%s2288 + $0x30] sm:$0xf]
        %v2424 = vld [vmem:[%s2288 + $0x34] sm:$0x1]
        %v2425 = vld [vmem:[%s2288 + $0x38] sm:$0xf]
        %v2426 = vld [vmem:[%s2288 + $0x3c] sm:$0x1]
        %v2428 = vshrl.u32 %v2411, 16
        %v2430 = vrot.slane %v2428, 4
        %v2431 = vshll.u32 %v2411, 16
        %v2433 = vrot.slane %v2431, 5
        %v2434 = vor.u32 %v2430, %v2433
        %v2435 = vrot.slane %v2434, 4
        %v2437 = vshll.u32 %v2412, 16
        %v2439 = vrot.slane %v2437, 5
        %v2440 = vsel %vm390, %v2435, %v2439
        %v2442 = vshrl.u32 %v2413, 16
        %v2444 = vrot.slane %v2442, 4
        %v2445 = vshll.u32 %v2413, 16
        %v2447 = vrot.slane %v2445, 5
        %v2448 = vor.u32 %v2444, %v2447
        %v2449 = vrot.slane %v2448, 4
        %v2451 = vshll.u32 %v2414, 16
        %v2453 = vrot.slane %v2451, 5
        %v2454 = vsel %vm390, %v2449, %v2453
        %v2456 = vshrl.u32 %v2415, 16
        %v2458 = vrot.slane %v2456, 4
        %v2459 = vshll.u32 %v2415, 16
        %v2461 = vrot.slane %v2459, 5
        %v2462 = vor.u32 %v2458, %v2461
        %v2463 = vrot.slane %v2462, 4
        %v2465 = vshll.u32 %v2416, 16
        %v2467 = vrot.slane %v2465, 5
        %v2468 = vsel %vm390, %v2463, %v2467
        %v2470 = vshrl.u32 %v2417, 16
        %v2472 = vrot.slane %v2470, 4
        %v2473 = vshll.u32 %v2417, 16
        %v2475 = vrot.slane %v2473, 5
        %v2476 = vor.u32 %v2472, %v2475
        %v2477 = vrot.slane %v2476, 4
        %v2479 = vshll.u32 %v2418, 16
        %v2481 = vrot.slane %v2479, 5
        %v2482 = vsel %vm390, %v2477, %v2481
        %v2484 = vshrl.u32 %v2419, 16
        %v2486 = vrot.slane %v2484, 4
        %v2487 = vshll.u32 %v2419, 16
        %v2489 = vrot.slane %v2487, 5
        %v2490 = vor.u32 %v2486, %v2489
        %v2491 = vrot.slane %v2490, 4
        %v2493 = vshll.u32 %v2420, 16
        %v2495 = vrot.slane %v2493, 5
        %v2496 = vsel %vm390, %v2491, %v2495
        %v2498 = vshrl.u32 %v2421, 16
        %v2500 = vrot.slane %v2498, 4
        %v2501 = vshll.u32 %v2421, 16
        %v2503 = vrot.slane %v2501, 5
        %v2504 = vor.u32 %v2500, %v2503
        %v2505 = vrot.slane %v2504, 4
        %v2507 = vshll.u32 %v2422, 16
        %v2509 = vrot.slane %v2507, 5
        %v2510 = vsel %vm390, %v2505, %v2509
        %v2512 = vshrl.u32 %v2423, 16
        %v2514 = vrot.slane %v2512, 4
        %v2515 = vshll.u32 %v2423, 16
        %v2517 = vrot.slane %v2515, 5
        %v2518 = vor.u32 %v2514, %v2517
        %v2519 = vrot.slane %v2518, 4
        %v2521 = vshll.u32 %v2424, 16
        %v2523 = vrot.slane %v2521, 5
        %v2524 = vsel %vm390, %v2519, %v2523
        %v2526 = vshrl.u32 %v2425, 16
        %v2528 = vrot.slane %v2526, 4
        %v2529 = vshll.u32 %v2425, 16
        %v2531 = vrot.slane %v2529, 5
        %v2532 = vor.u32 %v2528, %v2531
        %v2533 = vrot.slane %v2532, 4
        %v2535 = vshll.u32 %v2426, 16
        %v2537 = vrot.slane %v2535, 5
        %v2538 = vsel %vm390, %v2533, %v2537
        %s2539 = scalar_lea.vmem %s3, 56
        %v2540 = vld [vmem:[%s2539] sm:$0xf]
        %v2541 = vld [vmem:[%s2539 + $0x4] sm:$0xf]
        %v2542 = vunpack.c.l.b16 %v2440
        %v2543 = vunpack.c.l.b16 %v2454
        %v2544 = vunpack.c.l.b16 %v2468
        %v2545 = vunpack.c.l.b16 %v2482
        %v2546 = vunpack.c.l.b16 %v2496
        %v2547 = vunpack.c.l.b16 %v2510
        %v2548 = vunpack.c.l.b16 %v2524
        %v2549 = vunpack.c.l.b16 %v2538
        %v2550 = vpack.c.b16 %v2543, %v2542
        %v2551 = vpack.c.b16 %v2545, %v2544
        %v2552 = vpack.c.b16 %v2547, %v2546
        %v2553 = vpack.c.b16 %v2549, %v2548
        %v2556 = vunpack.c.l.b16 %v2540
        %v2557 = vunpack.c.l.b16 %v2541
        %v2558 = vpack.c.b16 %v2557, %v2556
        %v2561 = vsel %vm524, %v2550, 0
        %v2564 = vsel %vm524, %v2551, 0
        %v2567 = vsel %vm524, %v2552, 0
        %v2570 = vsel %vm524, %v2553, 0
        %2572 = vmatprep.subr.bf16.mxu0 0
        %2573 = vmatpush1.bf16.msra.mxu0 0
        %2574 = vmatprep.subr.bf16.mxu0 0
        %2575 = vmatpush1.bf16.msra.mxu0 0
        %2576 = vmatprep.subr.bf16.mxu0 0
        %2577 = vmatpush1.bf16.msra.mxu0 0
        %2578 = vmatprep.subr.bf16.mxu0 0
        %2579 = vmatpush1.bf16.msra.mxu0 0
        %2580 = vmatprep.subr.bf16.mxu0 0
        %2581 = vmatpush1.bf16.msra.mxu0 0
        %2582 = vmatprep.subr.bf16.mxu0 0
        %2583 = vmatpush1.bf16.msra.mxu0 0
        %2584 = vmatprep.subr.bf16.mxu0 0
        %2585 = vmatpush1.bf16.msra.mxu0 0
        %2586 = vmatprep.subr.bf16.mxu0 0
        %2587 = vmatpush1.bf16.msra.mxu0 %v2558
        %2588 = vmatprep.subr.bf16.mxu0 0
        %2589 = vmatpush2.bf16.msra.mxu0 0
        %2590 = vmatprep.subr.bf16.mxu0 0
        %2591 = vmatpush2.bf16.msra.mxu0 0
        %2592 = vmatprep.subr.bf16.mxu0 0
        %2593 = vmatpush2.bf16.msra.mxu0 0
        %2594 = vmatprep.subr.bf16.mxu0 0
        %2595 = vmatpush2.bf16.msra.mxu0 0
        %2596 = vmatprep.subr.bf16.mxu0 0
        %2597 = vmatpush2.bf16.msra.mxu0 0
        %2598 = vmatprep.subr.bf16.mxu0 0
        %2599 = vmatpush2.bf16.msra.mxu0 0
        %2600 = vmatprep.subr.bf16.mxu0 0
        %2601 = vmatpush2.bf16.msra.mxu0 0
        %2602 = vmatprep.subr.bf16.mxu0 0
        %2603 = vmatpush2.bf16.msra.mxu0 0
        %2604 = vmatprep.mubr.bf16.mxu0 0
        %2605 = vmatmul.mubr.bf16.gmra.mxu0 %v2561
        %v2606 = vpop.f32.mrf.mxu0
        %v2607 = vadd.f32 0.0, %v2606
        %v2608 = vpop.f32.mrf.mxu0
        %v2609 = vpop.f32.mrf.mxu0
        %v2610 = vadd.f32 0.0, %v2609
        %v2611 = vpop.f32.mrf.mxu0
        %2612 = vmatprep.mubr.bf16.mxu0 0
        %2613 = vmatmul.mubr.bf16.gmra.mxu0 %v2564
        %v2614 = vpop.f32.mrf.mxu0
        %v2615 = vadd.f32 0.0, %v2614
        %v2616 = vpop.f32.mrf.mxu0
        %v2617 = vpop.f32.mrf.mxu0
        %v2618 = vadd.f32 0.0, %v2617
        %v2619 = vpop.f32.mrf.mxu0
        %2620 = vmatprep.mubr.bf16.mxu0 0
        %2621 = vmatmul.mubr.bf16.gmra.mxu0 %v2567
        %v2622 = vpop.f32.mrf.mxu0
        %v2623 = vadd.f32 0.0, %v2622
        %v2624 = vpop.f32.mrf.mxu0
        %v2625 = vpop.f32.mrf.mxu0
        %v2626 = vadd.f32 0.0, %v2625
        %v2627 = vpop.f32.mrf.mxu0
        %2628 = vmatprep.mubr.bf16.mxu0 0
        %2629 = vmatmul.mubr.bf16.gmra.mxu0 %v2570
        %v2630 = vpop.f32.mrf.mxu0
        %v2631 = vadd.f32 0.0, %v2630
        %v2632 = vpop.f32.mrf.mxu0
        %v2633 = vpop.f32.mrf.mxu0
        %v2634 = vadd.f32 0.0, %v2633
        %v2635 = vpop.f32.mrf.mxu0
        %2636 = vdwg.mxu0
        %v2637 = vadd.f32 %v2403, %v2607
        %v2638 = vadd.f32 %v2404, %v2610
        %v2639 = vadd.f32 %v2405, %v2615
        %v2640 = vadd.f32 %v2406, %v2618
        %v2641 = vadd.f32 %v2407, %v2623
        %v2642 = vadd.f32 %v2408, %v2626
        %v2643 = vadd.f32 %v2409, %v2631
        %v2644 = vadd.f32 %v2410, %v2634
        %v2645 = vld [vmem:[%s2288] sm:$0xe]
        %v2646 = vld [vmem:[%s2288 + $0x8] sm:$0xe]
        %v2647 = vld [vmem:[%s2288 + $0x10] sm:$0xe]
        %v2648 = vld [vmem:[%s2288 + $0x18] sm:$0xe]
        %v2649 = vld [vmem:[%s2288 + $0x20] sm:$0xe]
        %v2650 = vld [vmem:[%s2288 + $0x28] sm:$0xe]
        %v2651 = vld [vmem:[%s2288 + $0x30] sm:$0xe]
        %v2652 = vld [vmem:[%s2288 + $0x38] sm:$0xe]
        %v2669 = vrot.slane %v2645, 5
        %v2670 = vrot.slane %v2669, 4
        %v2671 = vrot.slane %v2412, 5
        %v2672 = vsel %vm1631, %v2670, %v2671
        %v2673 = vrot.slane %v2646, 5
        %v2674 = vrot.slane %v2673, 4
        %v2675 = vrot.slane %v2414, 5
        %v2676 = vsel %vm1631, %v2674, %v2675
        %v2677 = vrot.slane %v2647, 5
        %v2678 = vrot.slane %v2677, 4
        %v2679 = vrot.slane %v2416, 5
        %v2680 = vsel %vm1631, %v2678, %v2679
        %v2681 = vrot.slane %v2648, 5
        %v2682 = vrot.slane %v2681, 4
        %v2683 = vrot.slane %v2418, 5
        %v2684 = vsel %vm1631, %v2682, %v2683
        %v2685 = vrot.slane %v2649, 5
        %v2686 = vrot.slane %v2685, 4
        %v2687 = vrot.slane %v2420, 5
        %v2688 = vsel %vm1631, %v2686, %v2687
        %v2689 = vrot.slane %v2650, 5
        %v2690 = vrot.slane %v2689, 4
        %v2691 = vrot.slane %v2422, 5
        %v2692 = vsel %vm1631, %v2690, %v2691
        %v2693 = vrot.slane %v2651, 5
        %v2694 = vrot.slane %v2693, 4
        %v2695 = vrot.slane %v2424, 5
        %v2696 = vsel %vm1631, %v2694, %v2695
        %v2697 = vrot.slane %v2652, 5
        %v2698 = vrot.slane %v2697, 4
        %v2699 = vrot.slane %v2426, 5
        %v2700 = vsel %vm1631, %v2698, %v2699
        %s2701 = scalar_lea.vmem %s3, 64
        %v2702 = vld [vmem:[%s2701] sm:$0xf]
        %v2703 = vld [vmem:[%s2701 + $0x4] sm:$0xf]
        %v2704 = vunpack.c.l.b16 %v2672
        %v2705 = vunpack.c.l.b16 %v2676
        %v2706 = vunpack.c.l.b16 %v2680
        %v2707 = vunpack.c.l.b16 %v2684
        %v2708 = vunpack.c.l.b16 %v2688
        %v2709 = vunpack.c.l.b16 %v2692
        %v2710 = vunpack.c.l.b16 %v2696
        %v2711 = vunpack.c.l.b16 %v2700
        %v2712 = vpack.c.b16 %v2705, %v2704
        %v2713 = vpack.c.b16 %v2707, %v2706
        %v2714 = vpack.c.b16 %v2709, %v2708
        %v2715 = vpack.c.b16 %v2711, %v2710
        %v2718 = vunpack.c.l.b16 %v2702
        %v2719 = vunpack.c.l.b16 %v2703
        %v2720 = vpack.c.b16 %v2719, %v2718
        %v2723 = vsel %vm524, %v2712, 0
        %v2726 = vsel %vm524, %v2713, 0
        %v2729 = vsel %vm524, %v2714, 0
        %v2732 = vsel %vm524, %v2715, 0
        %2734 = vmatprep.subr.bf16.mxu0 0
        %2735 = vmatpush1.bf16.msra.mxu0 0
        %2736 = vmatprep.subr.bf16.mxu0 0
        %2737 = vmatpush1.bf16.msra.mxu0 0
        %2738 = vmatprep.subr.bf16.mxu0 0
        %2739 = vmatpush1.bf16.msra.mxu0 0
        %2740 = vmatprep.subr.bf16.mxu0 0
        %2741 = vmatpush1.bf16.msra.mxu0 0
        %2742 = vmatprep.subr.bf16.mxu0 0
        %2743 = vmatpush1.bf16.msra.mxu0 0
        %2744 = vmatprep.subr.bf16.mxu0 0
        %2745 = vmatpush1.bf16.msra.mxu0 0
        %2746 = vmatprep.subr.bf16.mxu0 0
        %2747 = vmatpush1.bf16.msra.mxu0 0
        %2748 = vmatprep.subr.bf16.mxu0 0
        %2749 = vmatpush1.bf16.msra.mxu0 %v2720
        %2750 = vmatprep.subr.bf16.mxu0 0
        %2751 = vmatpush2.bf16.msra.mxu0 0
        %2752 = vmatprep.subr.bf16.mxu0 0
        %2753 = vmatpush2.bf16.msra.mxu0 0
        %2754 = vmatprep.subr.bf16.mxu0 0
        %2755 = vmatpush2.bf16.msra.mxu0 0
        %2756 = vmatprep.subr.bf16.mxu0 0
        %2757 = vmatpush2.bf16.msra.mxu0 0
        %2758 = vmatprep.subr.bf16.mxu0 0
        %2759 = vmatpush2.bf16.msra.mxu0 0
        %2760 = vmatprep.subr.bf16.mxu0 0
        %2761 = vmatpush2.bf16.msra.mxu0 0
        %2762 = vmatprep.subr.bf16.mxu0 0
        %2763 = vmatpush2.bf16.msra.mxu0 0
        %2764 = vmatprep.subr.bf16.mxu0 0
        %2765 = vmatpush2.bf16.msra.mxu0 0
        %2766 = vmatprep.mubr.bf16.mxu0 0
        %2767 = vmatmul.mubr.bf16.gmra.mxu0 %v2723
        %v2768 = vpop.f32.mrf.mxu0
        %v2769 = vadd.f32 0.0, %v2768
        %v2770 = vpop.f32.mrf.mxu0
        %v2771 = vpop.f32.mrf.mxu0
        %v2772 = vadd.f32 0.0, %v2771
        %v2773 = vpop.f32.mrf.mxu0
        %2774 = vmatprep.mubr.bf16.mxu0 0
        %2775 = vmatmul.mubr.bf16.gmra.mxu0 %v2726
        %v2776 = vpop.f32.mrf.mxu0
        %v2777 = vadd.f32 0.0, %v2776
        %v2778 = vpop.f32.mrf.mxu0
        %v2779 = vpop.f32.mrf.mxu0
        %v2780 = vadd.f32 0.0, %v2779
        %v2781 = vpop.f32.mrf.mxu0
        %2782 = vmatprep.mubr.bf16.mxu0 0
        %2783 = vmatmul.mubr.bf16.gmra.mxu0 %v2729
        %v2784 = vpop.f32.mrf.mxu0
        %v2785 = vadd.f32 0.0, %v2784
        %v2786 = vpop.f32.mrf.mxu0
        %v2787 = vpop.f32.mrf.mxu0
        %v2788 = vadd.f32 0.0, %v2787
        %v2789 = vpop.f32.mrf.mxu0
        %2790 = vmatprep.mubr.bf16.mxu0 0
        %2791 = vmatmul.mubr.bf16.gmra.mxu0 %v2732
        %v2792 = vpop.f32.mrf.mxu0
        %v2793 = vadd.f32 0.0, %v2792
        %v2794 = vpop.f32.mrf.mxu0
        %v2795 = vpop.f32.mrf.mxu0
        %v2796 = vadd.f32 0.0, %v2795
        %v2797 = vpop.f32.mrf.mxu0
        %2798 = vdwg.mxu0
        %v2799 = vadd.f32 %v2637, %v2769
        %v2800 = vadd.f32 %v2638, %v2772
        %v2801 = vadd.f32 %v2639, %v2777
        %v2802 = vadd.f32 %v2640, %v2780
        %v2803 = vadd.f32 %v2641, %v2785
        %v2804 = vadd.f32 %v2642, %v2788
        %v2805 = vadd.f32 %v2643, %v2793
        %v2806 = vadd.f32 %v2644, %v2796
        %v2807 = vld [vmem:[%s4] sm:$0x1]
        %v2809 = vlaneseq
        %v2810 = vshrl.u32 %v2809, 7
        %v2811 = vsub.s32 0, %v2810
        %v2812 = vrot.slane %v2807, %v2811
        %v2814 = vadd.f32 %v2799, %v2812
        %v2815 = vadd.f32 %v2800, %v2812
        %v2816 = vadd.f32 %v2801, %v2812
        %v2817 = vadd.f32 %v2802, %v2812
        %v2818 = vadd.f32 %v2803, %v2812
        %v2819 = vadd.f32 %v2804, %v2812
        %v2820 = vadd.f32 %v2805, %v2812
        %v2821 = vadd.f32 %v2806, %v2812
        %v2822 = vmax.f32 %v2814, 0.0
        %v2823 = vmax.f32 %v2815, 0.0
        %v2824 = vmax.f32 %v2816, 0.0
        %v2825 = vmax.f32 %v2817, 0.0
        %v2826 = vmax.f32 %v2818, 0.0
        %v2827 = vmax.f32 %v2819, 0.0
        %v2828 = vmax.f32 %v2820, 0.0
        %v2829 = vmax.f32 %v2821, 0.0
        %2838 = vrot.lane.b32.xlu0 %v2822, 16
        %v2839 = vpop.permute.xlu0 %2838
        %2840 = vrot.lane.b32.xlu0 %v2823, 16
        %v2841 = vpop.permute.xlu0 %2840
        %2842 = vrot.lane.b32.xlu0 %v2824, 16
        %v2843 = vpop.permute.xlu0 %2842
        %2844 = vrot.lane.b32.xlu0 %v2825, 16
        %v2845 = vpop.permute.xlu0 %2844
        %2846 = vrot.lane.b32.xlu0 %v2826, 16
        %v2847 = vpop.permute.xlu0 %2846
        %2848 = vrot.lane.b32.xlu0 %v2827, 16
        %v2849 = vpop.permute.xlu0 %2848
        %2850 = vrot.lane.b32.xlu0 %v2828, 16
        %v2851 = vpop.permute.xlu0 %2850
        %2852 = vrot.lane.b32.xlu0 %v2829, 16
        %v2853 = vpop.permute.xlu0 %2852
        %v2862 = vadd.f32 %v1077, %v2839
        %v2863 = vadd.f32 %v1078, %v2841
        %v2864 = vadd.f32 %v1079, %v2843
        %v2865 = vadd.f32 %v1080, %v2845
        %v2866 = vadd.f32 %v1081, %v2847
        %v2867 = vadd.f32 %v1082, %v2849
        %v2868 = vadd.f32 %v1083, %v2851
        %v2869 = vadd.f32 %v1084, %v2853
        %2878 = vrot.lane.b32.xlu0 %v2862, 112
        %v2879 = vpop.permute.xlu0 %2878
        %2880 = vrot.lane.b32.xlu0 %v2863, 112
        %v2881 = vpop.permute.xlu0 %2880
        %2882 = vrot.lane.b32.xlu0 %v2864, 112
        %v2883 = vpop.permute.xlu0 %2882
        %2884 = vrot.lane.b32.xlu0 %v2865, 112
        %v2885 = vpop.permute.xlu0 %2884
        %2886 = vrot.lane.b32.xlu0 %v2866, 112
        %v2887 = vpop.permute.xlu0 %2886
        %2888 = vrot.lane.b32.xlu0 %v2867, 112
        %v2889 = vpop.permute.xlu0 %2888
        %2890 = vrot.lane.b32.xlu0 %v2868, 112
        %v2891 = vpop.permute.xlu0 %2890
        %2892 = vrot.lane.b32.xlu0 %v2869, 112
        %v2893 = vpop.permute.xlu0 %2892
        %2902 = vst.msk [vmem:[%s363] sm:$0xff] %vm524, %v2879
        %2903 = vst.msk [vmem:[%s363 + $0x8] sm:$0xff] %vm524, %v2881
        %2904 = vst.msk [vmem:[%s363 + $0x10] sm:$0xff] %vm524, %v2883
        %2905 = vst.msk [vmem:[%s363 + $0x18] sm:$0xff] %vm524, %v2885
        %2906 = vst.msk [vmem:[%s363 + $0x20] sm:$0xff] %vm524, %v2887
        %2907 = vst.msk [vmem:[%s363 + $0x28] sm:$0xff] %vm524, %v2889
        %2908 = vst.msk [vmem:[%s363 + $0x30] sm:$0xff] %vm524, %v2891
        %2909 = vst.msk [vmem:[%s363 + $0x38] sm:$0xff] %vm524, %v2893
        %vm2910 = vcmask 261248
        %v2911 = vsel %vm2910, %v2862, 0.0
        %v2912 = vsel %vm2910, %v2863, 0.0
        %v2913 = vadd.f32 %v2911, %v2912
        %v2914 = vsel %vm2910, %v2864, 0.0
        %v2915 = vadd.f32 %v2913, %v2914
        %v2916 = vsel %vm2910, %v2865, 0.0
        %v2917 = vadd.f32 %v2915, %v2916
        %v2918 = vsel %vm2910, %v2866, 0.0
        %v2919 = vadd.f32 %v2917, %v2918
        %v2920 = vsel %vm2910, %v2867, 0.0
        %v2921 = vadd.f32 %v2919, %v2920
        %v2922 = vsel %vm2910, %v2868, 0.0
        %v2923 = vadd.f32 %v2921, %v2922
        %v2924 = vsel %vm2910, %v2869, 0.0
        %v2925 = vadd.f32 %v2923, %v2924
        %v2926 = vrot.slane %v2925, 4
        %v2927 = vadd.f32 %v2925, %v2926
        %v2928 = vrot.slane %v2927, 2
        %v2929 = vadd.f32 %v2927, %v2928
        %v2930 = vrot.slane %v2929, 1
        %v2931 = vadd.f32 %v2929, %v2930
        %v2932 = vmul.f32 %v2931, 0.015625
        %v2933 = vld [vmem:[%s5] sm:$0xff]
        %v2934 = vld [vmem:[%s5 + $0x8] sm:$0xff]
        %v2935 = vld [vmem:[%s6] sm:$0x1]
        %2937 = vrot.lane.b32.xlu0 %v2932, 112
        %v2938 = vpop.permute.xlu0 %2937
        %v2939 = vsel %vm524, %v2938, 0
        %2941 = vmatprep.subr.mxu0 0.0
        %2942 = vmatpush1.msra.mxu0 0.0
        %2943 = vmatprep.subr.mxu0 0.0
        %2944 = vmatpush1.msra.mxu0 0.0
        %2945 = vmatprep.subr.mxu0 0.0
        %2946 = vmatpush1.msra.mxu0 0.0
        %2947 = vmatprep.subr.mxu0 0.0
        %2948 = vmatpush1.msra.mxu0 0.0
        %2949 = vmatprep.subr.mxu0 0.0
        %2950 = vmatpush1.msra.mxu0 0.0
        %2951 = vmatprep.subr.mxu0 0.0
        %2952 = vmatpush1.msra.mxu0 0.0
        %2953 = vmatprep.subr.mxu0 0.0
        %2954 = vmatpush1.msra.mxu0 0.0
        %2955 = vmatprep.subr.mxu0 0.0
        %2956 = vmatpush1.msra.mxu0 0.0
        %2957 = vmatprep.subr.mxu0 0.0
        %2958 = vmatpush1.msra.mxu0 0.0
        %2959 = vmatprep.subr.mxu0 0.0
        %2960 = vmatpush1.msra.mxu0 0.0
        %2961 = vmatprep.subr.mxu0 0.0
        %2962 = vmatpush1.msra.mxu0 0.0
        %2963 = vmatprep.subr.mxu0 0.0
        %2964 = vmatpush1.msra.mxu0 0.0
        %2965 = vmatprep.subr.mxu0 0.0
        %2966 = vmatpush1.msra.mxu0 0.0
        %2967 = vmatprep.subr.mxu0 0.0
        %2968 = vmatpush1.msra.mxu0 0.0
        %2969 = vmatprep.subr.mxu0 0.0
        %2970 = vmatpush1.msra.mxu0 %v2934
        %2971 = vmatprep.subr.mxu0 0.0
        %2972 = vmatpush1.msra.mxu0 %v2933
        %2973 = vmatprep.subr.mxu0 0.0
        %2974 = vmatpush2.msra.mxu0 0.0
        %2975 = vmatprep.subr.mxu0 0.0
        %2976 = vmatpush2.msra.mxu0 0.0
        %2977 = vmatprep.subr.mxu0 0.0
        %2978 = vmatpush2.msra.mxu0 0.0
        %2979 = vmatprep.subr.mxu0 0.0
        %2980 = vmatpush2.msra.mxu0 0.0
        %2981 = vmatprep.subr.mxu0 0.0
        %2982 = vmatpush2.msra.mxu0 0.0
        %2983 = vmatprep.subr.mxu0 0.0
        %2984 = vmatpush2.msra.mxu0 0.0
        %2985 = vmatprep.subr.mxu0 0.0
        %2986 = vmatpush2.msra.mxu0 0.0
        %2987 = vmatprep.subr.mxu0 0.0
        %2988 = vmatpush2.msra.mxu0 0.0
        %2989 = vmatprep.subr.mxu0 0.0
        %2990 = vmatpush2.msra.mxu0 0.0
        %2991 = vmatprep.subr.mxu0 0.0
        %2992 = vmatpush2.msra.mxu0 0.0
        %2993 = vmatprep.subr.mxu0 0.0
        %2994 = vmatpush2.msra.mxu0 0.0
        %2995 = vmatprep.subr.mxu0 0.0
        %2996 = vmatpush2.msra.mxu0 0.0
        %2997 = vmatprep.subr.mxu0 0.0
        %2998 = vmatpush2.msra.mxu0 0.0
        %2999 = vmatprep.subr.mxu0 0.0
        %3000 = vmatpush2.msra.mxu0 0.0
        %3001 = vmatprep.subr.mxu0 0.0
        %3002 = vmatpush2.msra.mxu0 0.0
        %3003 = vmatprep.subr.mxu0 0.0
        %3004 = vmatpush2.msra.mxu0 0.0
        %3005 = vmatprep.mubr.f32.mxu0 0.0
        %3006 = vmatmul.mubr.f32.gmra.mxu0 %v2939
        %v3007 = vpop.f32.mrf.mxu0
        %v3008 = vadd.f32 %v2935, %v3007
        %v3009 = vpop.f32.mrf.mxu0
        %3010 = vdwg.mxu0
        %v3011 = vmax.f32 %v3008, 0.0
        %v3012 = vld [vmem:[%s7] sm:$0xff]
        %v3013 = vld [vmem:[%s7 + $0x8] sm:$0xff]
        %v3014 = vld [vmem:[%s7 + $0x10] sm:$0xff]
        %v3015 = vld [vmem:[%s7 + $0x18] sm:$0xff]
        %v3016 = vld [vmem:[%s7 + $0x20] sm:$0xff]
        %v3017 = vld [vmem:[%s7 + $0x28] sm:$0xff]
        %v3018 = vld [vmem:[%s7 + $0x30] sm:$0xff]
        %v3019 = vld [vmem:[%s7 + $0x38] sm:$0xff]
        %v3020 = vld [vmem:[%s7 + $0x40] sm:$0xff]
        %v3021 = vld [vmem:[%s7 + $0x48] sm:$0xff]
        %v3022 = vld [vmem:[%s7 + $0x50] sm:$0xff]
        %v3023 = vld [vmem:[%s7 + $0x58] sm:$0xff]
        %v3024 = vld [vmem:[%s7 + $0x60] sm:$0xff]
        %v3025 = vld [vmem:[%s7 + $0x68] sm:$0xff]
        %v3026 = vld [vmem:[%s7 + $0x70] sm:$0xff]
        %v3027 = vld [vmem:[%s7 + $0x78] sm:$0xff]
        %v3028 = vld [vmem:[%s8] sm:$0x1]
        %3029 = vmatprep.subr.mxu0 0.0
        %3030 = vmatpush1.msra.mxu0 %v3027
        %3031 = vmatprep.subr.mxu0 0.0
        %3032 = vmatpush1.msra.mxu0 %v3026
        %3033 = vmatprep.subr.mxu0 0.0
        %3034 = vmatpush1.msra.mxu0 %v3025
        %3035 = vmatprep.subr.mxu0 0.0
        %3036 = vmatpush1.msra.mxu0 %v3024
        %3037 = vmatprep.subr.mxu0 0.0
        %3038 = vmatpush1.msra.mxu0 %v3023
        %3039 = vmatprep.subr.mxu0 0.0
        %3040 = vmatpush1.msra.mxu0 %v3022
        %3041 = vmatprep.subr.mxu0 0.0
        %3042 = vmatpush1.msra.mxu0 %v3021
        %3043 = vmatprep.subr.mxu0 0.0
        %3044 = vmatpush1.msra.mxu0 %v3020
        %3045 = vmatprep.subr.mxu0 0.0
        %3046 = vmatpush1.msra.mxu0 %v3019
        %3047 = vmatprep.subr.mxu0 0.0
        %3048 = vmatpush1.msra.mxu0 %v3018
        %3049 = vmatprep.subr.mxu0 0.0
        %3050 = vmatpush1.msra.mxu0 %v3017
        %3051 = vmatprep.subr.mxu0 0.0
        %3052 = vmatpush1.msra.mxu0 %v3016
        %3053 = vmatprep.subr.mxu0 0.0
        %3054 = vmatpush1.msra.mxu0 %v3015
        %3055 = vmatprep.subr.mxu0 0.0
        %3056 = vmatpush1.msra.mxu0 %v3014
        %3057 = vmatprep.subr.mxu0 0.0
        %3058 = vmatpush1.msra.mxu0 %v3013
        %3059 = vmatprep.subr.mxu0 0.0
        %3060 = vmatpush1.msra.mxu0 %v3012
        %3061 = vmatprep.subr.mxu0 0.0
        %3062 = vmatpush2.msra.mxu0 0.0
        %3063 = vmatprep.subr.mxu0 0.0
        %3064 = vmatpush2.msra.mxu0 0.0
        %3065 = vmatprep.subr.mxu0 0.0
        %3066 = vmatpush2.msra.mxu0 0.0
        %3067 = vmatprep.subr.mxu0 0.0
        %3068 = vmatpush2.msra.mxu0 0.0
        %3069 = vmatprep.subr.mxu0 0.0
        %3070 = vmatpush2.msra.mxu0 0.0
        %3071 = vmatprep.subr.mxu0 0.0
        %3072 = vmatpush2.msra.mxu0 0.0
        %3073 = vmatprep.subr.mxu0 0.0
        %3074 = vmatpush2.msra.mxu0 0.0
        %3075 = vmatprep.subr.mxu0 0.0
        %3076 = vmatpush2.msra.mxu0 0.0
        %3077 = vmatprep.subr.mxu0 0.0
        %3078 = vmatpush2.msra.mxu0 0.0
        %3079 = vmatprep.subr.mxu0 0.0
        %3080 = vmatpush2.msra.mxu0 0.0
        %3081 = vmatprep.subr.mxu0 0.0
        %3082 = vmatpush2.msra.mxu0 0.0
        %3083 = vmatprep.subr.mxu0 0.0
        %3084 = vmatpush2.msra.mxu0 0.0
        %3085 = vmatprep.subr.mxu0 0.0
        %3086 = vmatpush2.msra.mxu0 0.0
        %3087 = vmatprep.subr.mxu0 0.0
        %3088 = vmatpush2.msra.mxu0 0.0
        %3089 = vmatprep.subr.mxu0 0.0
        %3090 = vmatpush2.msra.mxu0 0.0
        %3091 = vmatprep.subr.mxu0 0.0
        %3092 = vmatpush2.msra.mxu0 0.0
        %3093 = vmatprep.mubr.f32.mxu0 0.0
        %3094 = vmatmul.mubr.f32.gmra.mxu0 %v3011
        %v3095 = vpop.f32.mrf.mxu0
        %v3096 = vadd.f32 %v3028, %v3095
        %v3097 = vpop.f32.mrf.mxu0
        %3098 = vdwg.mxu0
        %v3099 = vxor.u32 %v3096, 2147483648
        %v3100 = vmul.f32 %v3099, 1.442695
        %v3101 = vpow.pop %v3100
        %v3102 = vadd.f32 %v3101, 1.0
        %v3103 = vrcp.pop %v3102
        %v3104 = vmul.f32 1.0, %v3103
        %v3105 = vlaneseq
        %v3106 = vshrl.u32 %v3105, 7
        %v3107 = vsub.s32 0, %v3106
        %v3108 = vrot.slane %v3104, %v3107
        %3110 = vrot.lane.b32.xlu0 %v3108, 16
        %v3111 = vpop.permute.xlu0 %3110
        %v3113 = vmul.f32 %v2862, %v3111
        %v3114 = vmul.f32 %v2863, %v3111
        %v3115 = vmul.f32 %v2864, %v3111
        %v3116 = vmul.f32 %v2865, %v3111
        %v3117 = vmul.f32 %v2866, %v3111
        %v3118 = vmul.f32 %v2867, %v3111
        %v3119 = vmul.f32 %v2868, %v3111
        %v3120 = vmul.f32 %v2869, %v3111
        %3129 = vrot.lane.b32.xlu0 %v3113, 112
        %v3130 = vpop.permute.xlu0 %3129
        %3131 = vrot.lane.b32.xlu0 %v3114, 112
        %v3132 = vpop.permute.xlu0 %3131
        %3133 = vrot.lane.b32.xlu0 %v3115, 112
        %v3134 = vpop.permute.xlu0 %3133
        %3135 = vrot.lane.b32.xlu0 %v3116, 112
        %v3136 = vpop.permute.xlu0 %3135
        %3137 = vrot.lane.b32.xlu0 %v3117, 112
        %v3138 = vpop.permute.xlu0 %3137
        %3139 = vrot.lane.b32.xlu0 %v3118, 112
        %v3140 = vpop.permute.xlu0 %3139
        %3141 = vrot.lane.b32.xlu0 %v3119, 112
        %v3142 = vpop.permute.xlu0 %3141
        %3143 = vrot.lane.b32.xlu0 %v3120, 112
        %v3144 = vpop.permute.xlu0 %3143
        %3153 = vst.msk [vmem:[%s356] sm:$0xff] %vm524, %v3130
        %3154 = vst.msk [vmem:[%s356 + $0x8] sm:$0xff] %vm524, %v3132
        %3155 = vst.msk [vmem:[%s356 + $0x10] sm:$0xff] %vm524, %v3134
        %3156 = vst.msk [vmem:[%s356 + $0x18] sm:$0xff] %vm524, %v3136
        %3157 = vst.msk [vmem:[%s356 + $0x20] sm:$0xff] %vm524, %v3138
        %3158 = vst.msk [vmem:[%s356 + $0x28] sm:$0xff] %vm524, %v3140
        %3159 = vst.msk [vmem:[%s356 + $0x30] sm:$0xff] %vm524, %v3142
        %3160 = vst.msk [vmem:[%s356 + $0x38] sm:$0xff] %vm524, %v3144
        %s3161 = sand.u32 %s230, 1
        %s3162 = scalar_lea.sflag [#allocation4], %s3161
        %s3163 = sand.u32 %s230, 1
        %s3164 = smul.addr %s3163, 64
        %s3165 = scalar_lea.vmem [#allocation3], %s3164
        %s3166 = sand.u32 %s256, 1
        %s3167 = scalar_lea.sflag [#allocation6], %s3166
        %s3168 = sand.u32 %s256, 1
        %s3169 = smul.addr %s3168, 64
        %s3170 = scalar_lea.vmem [#allocation5], %s3169
        // Predicated region
        $region57: #{encoding_block_forward.1} parent=55 // pred_check
          %p3171 = pneg %p240
        $region58: #{encoding_block_forward.1} parent=55 // pred_check_branch
          %3173 = sbr.rel (%p3171) target = $region60
        $region59: #{encoding_block_forward.1} parent=55 // pred_region
          %s3175 = ssub.s32 1024, 1024
          %3176 = vsyncadd %s3162, %s3175
          %s3177 = smul.addr %s28, 8
          %s3178 = smul.addr %s3177, 128
          %s3179 = scalar_lea.hbm %s9, %s3178
          %s3180 = sshll.u32 %s3165, 4
          %s3181 = int_to_ptr.vmem [resolvable:$true] %s3180
          %3186 = dma.vmem_to_hbm [thread:$0]  %s3181, 1024, %s3179, %s3162, 128, 128, 8
        $region60: #{encoding_block_forward.1} parent=55 // pred_fallthru
          _
        // Predicated region
        $region61: #{encoding_block_forward.1} parent=55 // pred_check
          %p3187 = pneg %p266
        $region62: #{encoding_block_forward.1} parent=55 // pred_check_branch
          %3189 = sbr.rel (%p3187) target = $region64
        $region63: #{encoding_block_forward.1} parent=55 // pred_region
          %s3191 = ssub.s32 1024, 1024
          %3192 = vsyncadd %s3167, %s3191
          %s3193 = smul.addr %s28, 8
          %s3194 = smul.addr %s3193, 128
          %s3195 = scalar_lea.hbm %s10, %s3194
          %s3196 = sshll.u32 %s3170, 4
          %s3197 = int_to_ptr.vmem [resolvable:$true] %s3196
          %3202 = dma.vmem_to_hbm [thread:$0]  %s3197, 1024, %s3195, %s3167, 128, 128, 8
        $region64: #{encoding_block_forward.1} parent=55 // pred_fallthru
          _
      $region56: #{encoding_block_forward.1} parent=5 // pred_fallthru
        _
      %p3203 = scmp.le.s32.totalorder 2, %s23
      // Predicated region
      $region65: #{encoding_block_forward.1} parent=5 // pred_check
        %p3204 = pneg %p3203
      $region66: #{encoding_block_forward.1} parent=5 // pred_check_branch
        %3206 = sbr.rel (%p3204) target = $region68
      $region67: #{encoding_block_forward.1} parent=5 // pred_region
        %s3207 = ssub.s32 %s23, 2
        // Predicated region
        $region69: #{encoding_block_forward.1} parent=67 // pred_check
          %p3208 = pneg %p246
        $region70: #{encoding_block_forward.1} parent=67 // pred_check_branch
          %3210 = sbr.rel (%p3208) target = $region72
        $region71: #{encoding_block_forward.1} parent=67 // pred_region
          %s3211 = sand.u32 %s231, 1
          %s3212 = scalar_lea.sflag [#allocation4], %s3211
          %s3213 = sand.u32 %s231, 1
          %s3214 = smul.addr %s3213, 64
          %s3215 = scalar_lea.vmem [#allocation3], %s3214
          %3216 = dma.done %s3212, 1024
        $region72: #{encoding_block_forward.1} parent=67 // pred_fallthru
          _
        // Predicated region
        $region73: #{encoding_block_forward.1} parent=67 // pred_check
          %p3217 = pneg %p272
        $region74: #{encoding_block_forward.1} parent=67 // pred_check_branch
          %3219 = sbr.rel (%p3217) target = $region76
        $region75: #{encoding_block_forward.1} parent=67 // pred_region
          %s3220 = sand.u32 %s257, 1
          %s3221 = scalar_lea.sflag [#allocation6], %s3220
          %s3222 = sand.u32 %s257, 1
          %s3223 = smul.addr %s3222, 64
          %s3224 = scalar_lea.vmem [#allocation5], %s3223
          %3225 = dma.done %s3221, 1024
        $region76: #{encoding_block_forward.1} parent=67 // pred_fallthru
          _
      $region68: #{encoding_block_forward.1} parent=5 // pred_fallthru
        _
    $region6: #{encoding_block_forward.1} parent=1 // loop_footer
      %s27 = sadd.s32 1, %s23
    $region7: #{encoding_block_forward.1} parent=1 // loop_footer_branch
      %22 = sbr.rel target = $region3
    $region8: #{encoding_block_forward.1} parent=1 // loop_exit
      _
    %3226 = vsyncpa [#allocation4], 1
    %s3227 = scalar_lea.sflag [#allocation4], 1
    %3228 = vsyncpa %s3227, 1
    %3229 = vsyncpa [#allocation6], 1
    %s3230 = scalar_lea.sflag [#allocation6], 1
    %3231 = vsyncpa %s3230, 1

</llo_original>
